<compile_context>
chip_gen: v7x
topology: tpu7x:2x2x1
jax: 0.10.0
libtpu: 0.0.40
codegen_flags: <defaults>
</compile_context>

<pallas_src>
import math
import functools

import jax
import jax.numpy as jnp
from jax.experimental import pallas as pl
from jax.experimental.pallas import tpu as pltpu


# ----------------------------------------------------------------------------
# Helpers
# ----------------------------------------------------------------------------
def _round_up(v, m):
    return -(-v // m) * m


def _vmem_limit(estimate_bytes):
    # Explicit scoped-VMEM limit sized from the resident blocks (default is
    # only 16-32 MiB depending on generation); clamp to v7x's 64 MiB physical.
    return int(min(64 * 1024 * 1024, max(32 * 1024 * 1024, 2 * estimate_bytes)))


def _pick_row_tile(rows, k_total, cout_total):
    """Largest row tile whose bf16 LHS (tm, K) + f32 accumulator (tm, Cout)
    stay well inside the 64 x 4 KiB vreg file.  Never shrink just to
    manufacture extra grid steps (per-step overhead ~0.35 us; the batch grid
    axis already provides the multi-core split on v7x)."""
    per_row = k_total * 2 + cout_total * 4            # bytes per LHS+acc row
    cap = (128 * 1024) // per_row                     # ~half the vreg file
    cap = max(16, min(512, (cap // 16) * 16))
    rows16 = _round_up(rows, 16)
    if rows16 <= max(cap, 64):
        return rows16                                 # one tile covers it all
    n_t = -(-rows16 // cap)
    return _round_up(-(-rows16 // n_t), 16)           # balanced tiles


# ----------------------------------------------------------------------------
# Generic fused-conv Pallas kernel on flattened padded images
# ----------------------------------------------------------------------------
def _make_conv_kernel(slab_plan, tm):
    n_inputs = len(slab_plan)

    def kernel(*refs):
        x_refs = refs[:n_inputs]
        w_ref = refs[n_inputs]
        o_ref = refs[n_inputs + 1]
        row0 = pl.multiple_of(pl.program_id(1) * tm, tm)
        parts = []
        for i, (slab_len, offs) in enumerate(slab_plan):
            # One aligned slab load per input per tile; the taps are static
            # sub-slices of the slab (no overlapping unaligned re-loads).
            slab = x_refs[i][0, pl.ds(row0, slab_len), :]
            for off in offs:
                if off == 0 and slab_len == tm:
                    parts.append(slab)
                else:
                    parts.append(slab[off:off + tm, :])
        lhs = parts[0] if len(parts) == 1 else jnp.concatenate(parts, axis=-1)
        # Single MXU dot (K = sum_i T_i*Cin_i), f32 accumulation, and one
        # lane-dense full-width store.
        o_ref[0] = jnp.dot(lhs, w_ref[...], preferred_element_type=jnp.float32)

    return kernel


def conv_flat_pallas(inputs, groups, ho, wo, wp_out, cout_total):
    """Tap-group convolution on flattened padded images.

    inputs : list of (N, FLAT_i, Cin_i) arrays (padded image with H and W
             flattened; flat row `y*wp_out + x` corresponds to output (y, x)).
    groups : list of (input_idx, offsets, w, col); `offsets` are static flat
             row offsets, `w` is (T, Cin_i, Cout_g), `col` is the group's
             output-channel offset.  All groups are merged into ONE
             (K_total, cout_total) weight (zero rows/cols where a group does
             not use a tap / column) so the whole conv is a single MXU dot
             per row tile with a lane-dense full-width store.  Groups sharing
             (input, tap, column range) accumulate.
    Returns (N, rows_pad, cout_total) f32 with rows_pad >= ho*wp_out; row
    `y*wp_out + x` (x < wo) holds output pixel (y, x).
    """
    n = inputs[0].shape[0]
    n_in = len(inputs)
    cins = [int(x.shape[-1]) for x in inputs]

    # Union of tap offsets per input -> K layout of the merged weight.
    offs_per_input = []
    for i in range(n_in):
        offs_per_input.append(sorted(
            {int(o) for gi, offs, _, _ in groups if gi == i for o in offs}))
    base, k_total = [], 0
    for i in range(n_in):
        base.append(k_total)
        k_total += len(offs_per_input[i]) * cins[i]

    rows = ho * wp_out                       # a few junk x>=wo rows; cheap
    tm = _pick_row_tile(rows, k_total, cout_total)
    n_tiles = -(-rows // tm)
    rows_pad = n_tiles * tm

    # Merged weight: group (idx, offs, w, col) scatters w[t] into rows
    # [base_idx + pos(off)*Cin : +Cin] and cols [col : col+cw].
    w_big = jnp.zeros((k_total, cout_total), jnp.float32)
    for gi, offs, w, col in groups:
        cw = int(w.shape[-1])
        assert col + cw <= cout_total
        for t, o in enumerate(offs):
            pos = offs_per_input[gi].index(int(o))
            r0 = base[gi] + pos * cins[gi]
            w_big = w_big.at[r0:r0 + cins[gi], col:col + cw].add(
                w[t].astype(jnp.float32))
    w_big = w_big.astype(jnp.bfloat16)

    # bf16 activations; pad each flat input so every slab read of every
    # (junk-included) row tile stays in bounds (valid rows never read junk).
    xs, slab_plan = [], []
    for i, x in enumerate(inputs):
        offs = offs_per_input[i]
        dmax = max(offs) if offs else 0
        extra = _round_up(dmax, 8) if dmax else 0
        need = rows_pad + extra
        x = x.astype(jnp.bfloat16)
        if x.shape[1] < need:
            x = jnp.pad(x, ((0, 0), (0, need - x.shape[1]), (0, 0)))
        xs.append(x)
        slab_plan.append((tm + extra, tuple(offs)))

    kernel = _make_conv_kernel(slab_plan, tm)

    in_specs = [pl.BlockSpec((1, x.shape[1], x.shape[2]),
                             lambda i, t: (i, 0, 0)) for x in xs]
    in_specs.append(pl.BlockSpec((k_total, cout_total), lambda i, t: (0, 0)))

    vmem_est = (sum(2 * x.shape[1] * x.shape[2] * 2 for x in xs)  # bf16 inputs
                + 2 * k_total * cout_total * 2                    # bf16 weight
                + 2 * tm * cout_total * 4                         # f32 output
                + 2 * tm * k_total * 2)                           # LHS slack

    return pl.pallas_call(
        kernel,
        out_shape=jax.ShapeDtypeStruct((n, rows_pad, cout_total), jnp.float32),
        grid=(n, n_tiles),
        in_specs=in_specs,
        out_specs=pl.BlockSpec((1, tm, cout_total), lambda i, t: (i, t, 0)),
        compiler_params=pltpu.CompilerParams(
            dimension_semantics=("parallel", "parallel"),
            vmem_limit_bytes=_vmem_limit(vmem_est)),
    )(*xs, w_big)


def _flat_to_nhwc(flat, ho, wo, wp):
    n, _, c = flat.shape
    return flat[:, :ho * wp, :].reshape(n, ho, wp, c)[:, :, :wo, :]


# ----------------------------------------------------------------------------
# Conv flavors used by Conv2x
# ----------------------------------------------------------------------------
def conv2d_s1(xs, ws, padding=1):
    """Stride-1 conv; multiple (x, w) pairs accumulate into the same output
    columns (i.e. a fused torch.cat along input channels: both weight halves
    live in one merged (18*Cin, Cout) weight -> one dot, no HBM concat)."""
    kh, kw, _, cout = ws[0].shape
    n, h, w_sp, _ = xs[0].shape
    p = padding
    ho, wo = h + 2 * p - kh + 1, w_sp + 2 * p - kw + 1
    wp = w_sp + 2 * p
    inputs, groups = [], []
    for x, wgt in zip(xs, ws):
        xp = jnp.pad(x.astype(jnp.bfloat16), ((0, 0), (p, p), (p, p), (0, 0)))
        inputs.append(xp.reshape(n, (h + 2 * p) * wp, x.shape[-1]))
        offs = tuple(i * wp + j for i in range(kh) for j in range(kw))
        groups.append((len(inputs) - 1, offs,
                       wgt.reshape(kh * kw, wgt.shape[2], cout), 0))
    flat = conv_flat_pallas(inputs, groups, ho, wo, wp, cout)
    return _flat_to_nhwc(flat, ho, wo, wp)


def conv2d_s2(x, w, padding=1):
    """3x3 / stride-2 / pad-1 conv via input-phase (space-to-batch)
    decomposition: four stride-1 tap groups, no dilated/strided waste; all
    four phases feed one merged-K dot."""
    kh, kw, cin, cout = w.shape
    assert kh == 3 and kw == 3 and padding == 1
    n, h, w_sp, _ = x.shape
    assert h % 2 == 0 and w_sp % 2 == 0
    xp = jnp.pad(x.astype(jnp.bfloat16), ((0, 0), (1, 1), (1, 1), (0, 0)))
    ho, wo = h // 2, w_sp // 2
    wpp = w_sp // 2 + 1
    inputs, groups = [], []
    for di in (0, 1):
        for dj in (0, 1):
            ph = xp[:, di::2, dj::2, :]                 # (n, ho+1, wpp, cin)
            inputs.append(ph.reshape(n, ph.shape[1] * ph.shape[2], cin))
            a_l = [a for a in range(2) if 2 * a + di < kh]
            b_l = [b for b in range(2) if 2 * b + dj < kw]
            offs = tuple(a * wpp + b for a in a_l for b in b_l)
            wsub = jnp.stack([w[2 * a + di, 2 * b + dj]
                              for a in a_l for b in b_l], axis=0)
            groups.append((len(inputs) - 1, offs, wsub, 0))
    flat = conv_flat_pallas(inputs, groups, ho, wo, wpp, cout)
    return _flat_to_nhwc(flat, ho, wo, wpp)


def conv_transpose2d_s2(x, w, padding=1):
    """ConvTranspose2d(k=4, s=2, p=1) via output-phase decomposition: the 4
    output phases are 2x2-tap groups over the un-dilated input, merged into a
    single (9*Cin, 4*Cout) zero-padded weight -> one dot with a lane-dense
    phase-stacked 4*Cout output that is pixel-shuffled afterwards.
    w is (4, 4, Cin, Cout) == torch weight.permute(2, 3, 0, 1)."""
    kh, kw, cin, cout = w.shape
    assert kh == 4 and kw == 4 and padding == 1
    n, h, w_sp, _ = x.shape
    xp = jnp.pad(x.astype(jnp.bfloat16), ((0, 0), (1, 1), (1, 1), (0, 0)))
    wp = w_sp + 2
    inputs = [xp.reshape(n, (h + 2) * wp, cin)]
    groups = []
    for dy in (0, 1):
        for dx in (0, 1):
            offs = tuple((dy + a) * wp + (dx + b)
                         for a in (0, 1) for b in (0, 1))
            wsub = jnp.stack([w[3 - 2 * a - dy, 3 - 2 * b - dx]
                              for a in (0, 1) for b in (0, 1)], axis=0)
            groups.append((0, offs, wsub, (dy * 2 + dx) * cout))
    flat = conv_flat_pallas(inputs, groups, h, w_sp, wp, 4 * cout)
    ph = _flat_to_nhwc(flat, h, w_sp, wp)                # (n, h, w, 4*cout)
    # TODO(synk): the pixel-shuffle transpose is left to XLA; it could be
    #             folded into the following DomainNorm apply kernel.
    ph = ph.reshape(n, h, w_sp, 2, 2, cout)
    return ph.transpose(0, 1, 3, 2, 4, 5).reshape(n, 2 * h, 2 * w_sp, cout)


# ----------------------------------------------------------------------------
# DomainNorm (+ ReLU) fused kernel: per-pixel L2 over C, InstanceNorm2d affine
# with one-pass sum / sum-of-squares statistics.
# ----------------------------------------------------------------------------
def domain_norm_relu(x, gamma, beta, *, l2=True, relu=True,
                     out_dtype=jnp.float32):
    n, h, w, c = x.shape
    hw = h * w
    xr = x.reshape(n, hw, c)
    g = gamma.reshape(1, c).astype(jnp.float32)
    b = beta.reshape(1, c).astype(jnp.float32)
    inv_hw = 1.0 / float(hw)

    def kernel(x_ref, g_ref, b_ref, o_ref):
        xv = x_ref[0].astype(jnp.float32)                     # (hw, c)
        if l2:
            ssq = jnp.sum(xv * xv, axis=-1, keepdims=True)
            xv = xv * jax.lax.rsqrt(jnp.maximum(ssq, 1e-24))  # F.normalize eps
        s = jnp.sum(xv, axis=0, keepdims=True) * inv_hw       # E[x]
        sq = jnp.sum(xv * xv, axis=0, keepdims=True) * inv_hw  # E[x^2]
        var = jnp.maximum(sq - s * s, 0.0)
        y = (xv - s) * jax.lax.rsqrt(var + 1e-5)               # InstanceNorm eps
        y = y * g_ref[...] + b_ref[...]
        if relu:
            y = jnp.maximum(y, 0.0)
        o_ref[0] = y.astype(o_ref.dtype)

    # TODO(synk): switch to a tiled two-pass (stats then apply) form for
    #             production resolutions so the (hw, c) block is not resident.
    vmem_est = 2 * hw * c * (x.dtype.itemsize
                             + jnp.dtype(out_dtype).itemsize) + (1 << 16)
    out = pl.pallas_call(
        kernel,
        out_shape=jax.ShapeDtypeStruct((n, hw, c), out_dtype),
        grid=(n,),
        in_specs=[pl.BlockSpec((1, hw, c), lambda i: (i, 0, 0)),
                  pl.BlockSpec((1, c), lambda i: (0, 0)),
                  pl.BlockSpec((1, c), lambda i: (0, 0))],
        out_specs=pl.BlockSpec((1, hw, c), lambda i: (i, 0, 0)),
        compiler_params=pltpu.CompilerParams(
            dimension_semantics=("parallel",),
            vmem_limit_bytes=_vmem_limit(vmem_est)),
    )(xr, g, b)
    return out.reshape(n, h, w, c)


# ----------------------------------------------------------------------------
# Conv2x forward (NHWC)
# ----------------------------------------------------------------------------
def conv2x_forward(params, x, rem, *, deconv=False, concat=True):
    p1, p2 = params['conv1'], params['conv2']
    if deconv:
        y = conv_transpose2d_s2(x, p1['w'], padding=1)
    else:
        y = conv2d_s2(x, p1['w'], padding=1)
    # Intermediate activation stays bf16 (conv2's MXU consumes bf16 anyway).
    y = domain_norm_relu(y, p1['gamma'], p1['beta'], l2=True, relu=True,
                         out_dtype=jnp.bfloat16)
    assert y.shape == rem.shape
    if concat:
        # torch.cat((y, rem), 1) + conv2 fused: both weight halves live in the
        # same merged-K weight; the concatenated tensor never touches HBM.
        z = conv2d_s1([y, rem], [p2['wa'], p2['wb']], padding=1)
    else:
        z = conv2d_s1([y + rem], [p2['w']], padding=1)
    z = domain_norm_relu(z, p2['gamma'], p2['beta'], l2=True, relu=True,
                         out_dtype=jnp.float32)
    return z


# ----------------------------------------------------------------------------
# Parameters
# ----------------------------------------------------------------------------
class _KeyGen:
    def __init__(self, key):
        self._key = key

    def __call__(self):
        self._key, sub = jax.random.split(self._key)
        return sub


def _conv_w(key, kh, kw, cin, cout):
    fan_in = kh * kw * cin
    return jax.random.normal(key, (kh, kw, cin, cout),
                             jnp.float32) / math.sqrt(fan_in)


def init_conv2x_params(key, in_channels, out_channels, *, deconv=False,
                       concat=True):
    kg = _KeyGen(key)
    k1 = 4 if deconv else 3
    params = {'conv1': {'w': _conv_w(kg(), k1, k1, in_channels, out_channels),
                        'gamma': jnp.ones((out_channels,), jnp.float32),
                        'beta': jnp.zeros((out_channels,), jnp.float32)}}
    if concat:
        conv2 = {'wa': _conv_w(kg(), 3, 3, out_channels, out_channels),
                 'wb': _conv_w(kg(), 3, 3, out_channels, out_channels)}
    else:
        conv2 = {'w': _conv_w(kg(), 3, 3, out_channels, out_channels)}
    conv2['gamma'] = jnp.ones((out_channels,), jnp.float32)
    conv2['beta'] = jnp.zeros((out_channels,), jnp.float32)
    params['conv2'] = conv2
    return params


# ----------------------------------------------------------------------------
# Pure-JAX reference (f32, HIGHEST precision) for a numerical sanity check
# ----------------------------------------------------------------------------
def _ref_conv(x, w, stride, padding):
    return jax.lax.conv_general_dilated(
        x, w, window_strides=(stride, stride),
        padding=((padding, padding), (padding, padding)),
        dimension_numbers=('NHWC', 'HWIO', 'NHWC'),
        precision=jax.lax.Precision.HIGHEST)


def _ref_deconv(x, w, stride=2, padding=1):
    k = w.shape[0]
    wf = w[::-1, ::-1, :, :]
    pad = k - 1 - padding
    return jax.lax.conv_general_dilated(
        x, wf, window_strides=(1, 1), padding=((pad, pad), (pad, pad)),
        lhs_dilation=(stride, stride),
        dimension_numbers=('NHWC', 'HWIO', 'NHWC'),
        precision=jax.lax.Precision.HIGHEST)


def _ref_domain_norm(x, gamma, beta, l2=True, relu=True):
    if l2:
        nrm = jnp.sqrt(jnp.sum(x * x, axis=-1, keepdims=True))
        x = x / jnp.maximum(nrm, 1e-12)
    mean = jnp.mean(x, axis=(1, 2), keepdims=True)
    var = jnp.mean((x - mean) ** 2, axis=(1, 2), keepdims=True)
    y = (x - mean) / jnp.sqrt(var + 1e-5) * gamma + beta
    if relu:
        y = jnp.maximum(y, 0.0)
    return y


def conv2x_reference(params, x, rem, *, deconv=False, concat=True):
    p1, p2 = params['conv1'], params['conv2']
    if deconv:
        y = _ref_deconv(x, p1['w'])
    else:
        y = _ref_conv(x, p1['w'], 2, 1)
    y = _ref_domain_norm(y, p1['gamma'], p1['beta'])
    if concat:
        z = _ref_conv(y, p2['wa'], 1, 1) + _ref_conv(rem, p2['wb'], 1, 1)
    else:
        z = _ref_conv(y + rem, p2['w'], 1, 1)
    return _ref_domain_norm(z, p2['gamma'], p2['beta'])


# ----------------------------------------------------------------------------
if __name__ == "__main__":
    root = jax.random.PRNGKey(0)
    kp1, kp2, kx1, kr1, kx2, kr2 = jax.random.split(root, 6)

    # --- Case 1: Conv2x(16, 32, deconv=False) -- downsampling path ----------
    p_down = init_conv2x_params(kp1, 16, 32, deconv=False, concat=True)
    x1_nchw = jax.random.normal(kx1, (2, 16, 16, 16), jnp.float32)
    r1_nchw = jax.random.normal(kr1, (2, 32, 8, 8), jnp.float32)
    x1 = jnp.transpose(x1_nchw, (0, 2, 3, 1))
    r1 = jnp.transpose(r1_nchw, (0, 2, 3, 1))

    fwd_down = jax.jit(functools.partial(conv2x_forward, deconv=False,
                                         concat=True))
    out1 = jax.block_until_ready(fwd_down(p_down, x1, r1))
    assert out1.shape == (2, 8, 8, 32)
    assert bool(jnp.all(jnp.isfinite(out1)))
    ref1 = conv2x_reference(p_down, x1, r1, deconv=False, concat=True)
    err1 = float(jnp.max(jnp.abs(out1 - ref1)))
    assert err1 < 0.25, f"down-path mismatch: {err1}"
    out1_nchw = jnp.transpose(out1, (0, 3, 1, 2))
    assert out1_nchw.shape == (2, 32, 8, 8)

    # --- Case 2: Conv2x(32, 16, deconv=True) -- upsampling path -------------
    p_up = init_conv2x_params(kp2, 32, 16, deconv=True, concat=True)
    x2_nchw = jax.random.normal(kx2, (2, 32, 8, 8), jnp.float32)
    r2_nchw = jax.random.normal(kr2, (2, 16, 16, 16), jnp.float32)
    x2 = jnp.transpose(x2_nchw, (0, 2, 3, 1))
    r2 = jnp.transpose(r2_nchw, (0, 2, 3, 1))

    fwd_up = jax.jit(functools.partial(conv2x_forward, deconv=True,
                                       concat=True))
    out2 = jax.block_until_ready(fwd_up(p_up, x2, r2))
    assert out2.shape == (2, 16, 16, 16)
    assert bool(jnp.all(jnp.isfinite(out2)))
    ref2 = conv2x_reference(p_up, x2, r2, deconv=True, concat=True)
    err2 = float(jnp.max(jnp.abs(out2 - ref2)))
    assert err2 < 0.25, f"up-path mismatch: {err2}"
    out2_nchw = jnp.transpose(out2, (0, 3, 1, 2))
    assert out2_nchw.shape == (2, 16, 16, 16)

    print("KERNEL_OK")
</pallas_src>

<mosaic_0001>
module attributes {stable_mosaic.version = 11 : i64} {
  func.func @kernel(%arg0: i32, %arg1: i32, %arg2: memref<1x96x16xbf16, #tpu.memory_space<vmem>>, %arg3: memref<1x96x16xbf16, #tpu.memory_space<vmem>>, %arg4: memref<1x88x16xbf16, #tpu.memory_space<vmem>>, %arg5: memref<1x81x16xbf16, #tpu.memory_space<vmem>>, %arg6: memref<144x32xbf16, #tpu.memory_space<vmem>>, %arg7: memref<1x80x32xf32, #tpu.memory_space<vmem>>) attributes {dimension_semantics = [#tpu.dimension_semantics<parallel>, #tpu.dimension_semantics<parallel>], iteration_bounds = array<i64: 2, 1>, scalar_prefetch = 0 : i64, scratch_operands = 0 : i64, tpu.core_type = #tpu.core_type<tc>, window_params = [{transform_indices = @transform_0, window_bounds = array<i64: 1, 96, 16>}, {transform_indices = @transform_1, window_bounds = array<i64: 1, 96, 16>}, {transform_indices = @transform_2, window_bounds = array<i64: 1, 88, 16>}, {transform_indices = @transform_3, window_bounds = array<i64: 1, 81, 16>}, {pipeline_mode = #tpu.pipeline_mode<synchronous>, transform_indices = @transform_4, window_bounds = array<i64: 144, 32>}, {transform_indices = @transform_5, window_bounds = array<i64: 1, 80, 32>}]} {
    %c80_i32 = arith.constant 80 : i32
    %0 = arith.muli %arg1, %c80_i32 : i32
    %1 = tpu.assume_multiple %0, 80 : i32
    %c0 = arith.constant 0 : index
    %2 = arith.index_cast %1 : i32 to index
    %c0_0 = arith.constant 0 : index
    %3 = vector.load %arg2[%c0, %2, %c0_0] : memref<1x96x16xbf16, #tpu.memory_space<vmem>>, vector<1x96x16xbf16>
    %4 = vector.shape_cast %3 : vector<1x96x16xbf16> to vector<96x16xbf16>
    %5 = vector.extract_strided_slice %4 {offsets = [0, 0], sizes = [80, 16], strides = [1, 1]} : vector<96x16xbf16> to vector<80x16xbf16>
    %6 = vector.extract_strided_slice %4 {offsets = [1, 0], sizes = [80, 16], strides = [1, 1]} : vector<96x16xbf16> to vector<80x16xbf16>
    %7 = vector.extract_strided_slice %4 {offsets = [9, 0], sizes = [80, 16], strides = [1, 1]} : vector<96x16xbf16> to vector<80x16xbf16>
    %8 = vector.extract_strided_slice %4 {offsets = [10, 0], sizes = [80, 16], strides = [1, 1]} : vector<96x16xbf16> to vector<80x16xbf16>
    %c0_1 = arith.constant 0 : index
    %9 = arith.index_cast %1 : i32 to index
    %c0_2 = arith.constant 0 : index
    %10 = vector.load %arg3[%c0_1, %9, %c0_2] : memref<1x96x16xbf16, #tpu.memory_space<vmem>>, vector<1x96x16xbf16>
    %11 = vector.shape_cast %10 : vector<1x96x16xbf16> to vector<96x16xbf16>
    %12 = vector.extract_strided_slice %11 {offsets = [0, 0], sizes = [80, 16], strides = [1, 1]} : vector<96x16xbf16> to vector<80x16xbf16>
    %13 = vector.extract_strided_slice %11 {offsets = [9, 0], sizes = [80, 16], strides = [1, 1]} : vector<96x16xbf16> to vector<80x16xbf16>
    %c0_3 = arith.constant 0 : index
    %14 = arith.index_cast %1 : i32 to index
    %c0_4 = arith.constant 0 : index
    %15 = vector.load %arg4[%c0_3, %14, %c0_4] : memref<1x88x16xbf16, #tpu.memory_space<vmem>>, vector<1x88x16xbf16>
    %16 = vector.shape_cast %15 : vector<1x88x16xbf16> to vector<88x16xbf16>
    %17 = vector.extract_strided_slice %16 {offsets = [0, 0], sizes = [80, 16], strides = [1, 1]} : vector<88x16xbf16> to vector<80x16xbf16>
    %18 = vector.extract_strided_slice %16 {offsets = [1, 0], sizes = [80, 16], strides = [1, 1]} : vector<88x16xbf16> to vector<80x16xbf16>
    %c0_5 = arith.constant 0 : index
    %19 = arith.index_cast %1 : i32 to index
    %c0_6 = arith.constant 0 : index
    %20 = vector.load %arg5[%c0_5, %19, %c0_6] : memref<1x81x16xbf16, #tpu.memory_space<vmem>>, vector<1x80x16xbf16>
    %21 = vector.shape_cast %20 : vector<1x80x16xbf16> to vector<80x16xbf16>
    %22 = tpu.concatenate %5, %6, %7, %8, %12, %13, %17, %18, %21 in 1 : vector<80x16xbf16>, vector<80x16xbf16>, vector<80x16xbf16>, vector<80x16xbf16>, vector<80x16xbf16>, vector<80x16xbf16>, vector<80x16xbf16>, vector<80x16xbf16>, vector<80x16xbf16> -> vector<80x144xbf16>
    %c0_7 = arith.constant 0 : index
    %c0_8 = arith.constant 0 : index
    %23 = vector.load %arg6[%c0_7, %c0_8] : memref<144x32xbf16, #tpu.memory_space<vmem>>, vector<144x32xbf16>
    %cst = arith.constant dense<0.000000e+00> : vector<80x32xf32>
    %24 = tpu.matmul %22, %23, %cst {dimension_numbers = #tpu.dot_dimension_numbers<[1], [0], [0], [1], [0, 0, 1, 1], [], []>} : vector<80x144xbf16>, vector<144x32xbf16>, vector<80x32xf32> -> vector<80x32xf32>
    %c0_9 = arith.constant 0 : index
    %c0_10 = arith.constant 0 : index
    %c0_11 = arith.constant 0 : index
    %25 = vector.load %arg7[%c0_9, %c0_10, %c0_11] : memref<1x80x32xf32, #tpu.memory_space<vmem>>, vector<1x80x32xf32>
    %26 = vector.shape_cast %25 : vector<1x80x32xf32> to vector<80x32xf32>
    %27 = vector.shape_cast %24 : vector<80x32xf32> to vector<1x80x32xf32>
    tpu.vector_store %arg7[%c0_9, %c0_10, %c0_11], %27 {strides = array<i32>} : memref<1x80x32xf32, #tpu.memory_space<vmem>>, vector<1x80x32xf32>,
    return
  }
  func.func @transform_0(%arg0: i32, %arg1: i32) -> (i32, i32, i32) {
    %c0_i32 = arith.constant 0 : i32
    %c0_i32_0 = arith.constant 0 : i32
    %c0_i32_1 = arith.constant 0 : i32
    return %arg0, %c0_i32, %c0_i32_0 : i32, i32, i32
  }
  func.func @transform_1(%arg0: i32, %arg1: i32) -> (i32, i32, i32) {
    %c0_i32 = arith.constant 0 : i32
    %c0_i32_0 = arith.constant 0 : i32
    %c0_i32_1 = arith.constant 0 : i32
    return %arg0, %c0_i32, %c0_i32_0 : i32, i32, i32
  }
  func.func @transform_2(%arg0: i32, %arg1: i32) -> (i32, i32, i32) {
    %c0_i32 = arith.constant 0 : i32
    %c0_i32_0 = arith.constant 0 : i32
    %c0_i32_1 = arith.constant 0 : i32
    return %arg0, %c0_i32, %c0_i32_0 : i32, i32, i32
  }
  func.func @transform_3(%arg0: i32, %arg1: i32) -> (i32, i32, i32) {
    %c0_i32 = arith.constant 0 : i32
    %c0_i32_0 = arith.constant 0 : i32
    %c0_i32_1 = arith.constant 0 : i32
    return %arg0, %c0_i32, %c0_i32_0 : i32, i32, i32
  }
  func.func @transform_4(%arg0: i32, %arg1: i32) -> (i32, i32) {
    %c0_i32 = arith.constant 0 : i32
    %c0_i32_0 = arith.constant 0 : i32
    %c0_i32_1 = arith.constant 0 : i32
    return %c0_i32, %c0_i32_0 : i32, i32
  }
  func.func @transform_5(%arg0: i32, %arg1: i32) -> (i32, i32, i32) {
    %c0_i32 = arith.constant 0 : i32
    %c0_i32_0 = arith.constant 0 : i32
    return %arg0, %arg1, %c0_i32 : i32, i32, i32
  }
}

module attributes {stable_mosaic.version = 11 : i64} {
  func.func @kernel(%arg0: i32, %arg1: memref<1x64x32xf32, #tpu.memory_space<vmem>>, %arg2: memref<1x32xf32, #tpu.memory_space<vmem>>, %arg3: memref<1x32xf32, #tpu.memory_space<vmem>>, %arg4: memref<1x64x32xbf16, #tpu.memory_space<vmem>>) attributes {dimension_semantics = [#tpu.dimension_semantics<parallel>], iteration_bounds = array<i64: 2>, scalar_prefetch = 0 : i64, scratch_operands = 0 : i64, tpu.core_type = #tpu.core_type<tc>, window_params = [{transform_indices = @transform_0, window_bounds = array<i64: 1, 64, 32>}, {pipeline_mode = #tpu.pipeline_mode<synchronous>, transform_indices = @transform_1, window_bounds = array<i64: 1, 32>}, {pipeline_mode = #tpu.pipeline_mode<synchronous>, transform_indices = @transform_2, window_bounds = array<i64: 1, 32>}, {transform_indices = @transform_3, window_bounds = array<i64: 1, 64, 32>}]} {
    %c0 = arith.constant 0 : index
    %c0_0 = arith.constant 0 : index
    %c0_1 = arith.constant 0 : index
    %0 = vector.load %arg1[%c0, %c0_0, %c0_1] : memref<1x64x32xf32, #tpu.memory_space<vmem>>, vector<1x64x32xf32>
    %1 = vector.shape_cast %0 : vector<1x64x32xf32> to vector<64x32xf32>
    %2 = arith.mulf %1, %1 : vector<64x32xf32>
    %cst = arith.constant dense<0.000000e+00> : vector<64xf32>
    %3 = vector.multi_reduction <add>, %2, %cst [1] : vector<64x32xf32> to vector<64xf32>
    %4 = vector.shape_cast %3 : vector<64xf32> to vector<64x1xf32>
    %cst_2 = arith.constant 1.000000e-24 : f32
    %5 = vector.broadcast %cst_2 : f32 to vector<64x1xf32>
    %6 = arith.maximumf %4, %5 : vector<64x1xf32>
    %7 = math.rsqrt %6 : vector<64x1xf32>
    %8 = vector.broadcast %7 : vector<64x1xf32> to vector<64x32xf32>
    %9 = arith.mulf %1, %8 : vector<64x32xf32>
    %cst_3 = arith.constant dense<0.000000e+00> : vector<32xf32>
    %10 = vector.multi_reduction <add>, %9, %cst_3 [0] : vector<64x32xf32> to vector<32xf32>
    %11 = vector.shape_cast %10 : vector<32xf32> to vector<1x32xf32>
    %cst_4 = arith.constant 1.562500e-02 : f32
    %12 = vector.broadcast %cst_4 : f32 to vector<1x32xf32>
    %13 = arith.mulf %11, %12 : vector<1x32xf32>
    %14 = arith.mulf %9, %9 : vector<64x32xf32>
    %cst_5 = arith.constant dense<0.000000e+00> : vector<32xf32>
    %15 = vector.multi_reduction <add>, %14, %cst_5 [0] : vector<64x32xf32> to vector<32xf32>
    %16 = vector.shape_cast %15 : vector<32xf32> to vector<1x32xf32>
    %cst_6 = arith.constant 1.562500e-02 : f32
    %17 = vector.broadcast %cst_6 : f32 to vector<1x32xf32>
    %18 = arith.mulf %16, %17 : vector<1x32xf32>
    %19 = arith.mulf %13, %13 : vector<1x32xf32>
    %20 = arith.subf %18, %19 : vector<1x32xf32>
    %cst_7 = arith.constant 0.000000e+00 : f32
    %21 = vector.broadcast %cst_7 : f32 to vector<1x32xf32>
    %22 = arith.maximumf %20, %21 : vector<1x32xf32>
    %23 = vector.broadcast %13 : vector<1x32xf32> to vector<64x32xf32>
    %24 = arith.subf %9, %23 : vector<64x32xf32>
    %cst_8 = arith.constant 9.99999974E-6 : f32
    %25 = vector.broadcast %cst_8 : f32 to vector<1x32xf32>
    %26 = arith.addf %22, %25 : vector<1x32xf32>
    %27 = math.rsqrt %26 : vector<1x32xf32>
    %28 = vector.broadcast %27 : vector<1x32xf32> to vector<64x32xf32>
    %29 = arith.mulf %24, %28 : vector<64x32xf32>
    %c0_9 = arith.constant 0 : index
    %c0_10 = arith.constant 0 : index
    %30 = vector.load %arg2[%c0_9, %c0_10] : memref<1x32xf32, #tpu.memory_space<vmem>>, vector<1x32xf32>
    %31 = vector.broadcast %30 : vector<1x32xf32> to vector<64x32xf32>
    %32 = arith.mulf %29, %31 : vector<64x32xf32>
    %c0_11 = arith.constant 0 : index
    %c0_12 = arith.constant 0 : index
    %33 = vector.load %arg3[%c0_11, %c0_12] : memref<1x32xf32, #tpu.memory_space<vmem>>, vector<1x32xf32>
    %34 = vector.broadcast %33 : vector<1x32xf32> to vector<64x32xf32>
    %35 = arith.addf %32, %34 : vector<64x32xf32>
    %cst_13 = arith.constant 0.000000e+00 : f32
    %36 = vector.broadcast %cst_13 : f32 to vector<64x32xf32>
    %37 = arith.maximumf %35, %36 : vector<64x32xf32>
    %38 = arith.truncf %37 : vector<64x32xf32> to vector<64x32xbf16>
    %c0_14 = arith.constant 0 : index
    %c0_15 = arith.constant 0 : index
    %c0_16 = arith.constant 0 : index
    %39 = vector.load %arg4[%c0_14, %c0_15, %c0_16] : memref<1x64x32xbf16, #tpu.memory_space<vmem>>, vector<1x64x32xbf16>
    %40 = vector.shape_cast %39 : vector<1x64x32xbf16> to vector<64x32xbf16>
    %41 = vector.shape_cast %38 : vector<64x32xbf16> to vector<1x64x32xbf16>
    tpu.vector_store %arg4[%c0_14, %c0_15, %c0_16], %41 {strides = array<i32>} : memref<1x64x32xbf16, #tpu.memory_space<vmem>>, vector<1x64x32xbf16>,
    return
  }
  func.func @transform_0(%arg0: i32) -> (i32, i32, i32) {
    %c0_i32 = arith.constant 0 : i32
    %c0_i32_0 = arith.constant 0 : i32
    %c0_i32_1 = arith.constant 0 : i32
    return %arg0, %c0_i32, %c0_i32_0 : i32, i32, i32
  }
  func.func @transform_1(%arg0: i32) -> (i32, i32) {
    %c0_i32 = arith.constant 0 : i32
    %c0_i32_0 = arith.constant 0 : i32
    %c0_i32_1 = arith.constant 0 : i32
    return %c0_i32, %c0_i32_0 : i32, i32
  }
  func.func @transform_2(%arg0: i32) -> (i32, i32) {
    %c0_i32 = arith.constant 0 : i32
    %c0_i32_0 = arith.constant 0 : i32
    %c0_i32_1 = arith.constant 0 : i32
    return %c0_i32, %c0_i32_0 : i32, i32
  }
  func.func @transform_3(%arg0: i32) -> (i32, i32, i32) {
    %c0_i32 = arith.constant 0 : i32
    %c0_i32_0 = arith.constant 0 : i32
    %c0_i32_1 = arith.constant 0 : i32
    return %arg0, %c0_i32, %c0_i32_0 : i32, i32, i32
  }
}

module attributes {stable_mosaic.version = 11 : i64} {
  func.func @kernel(%arg0: i32, %arg1: i32, %arg2: memref<1x104x32xbf16, #tpu.memory_space<vmem>>, %arg3: memref<1x104x32xbf16, #tpu.memory_space<vmem>>, %arg4: memref<576x32xbf16, #tpu.memory_space<vmem>>, %arg5: memref<1x80x32xf32, #tpu.memory_space<vmem>>) attributes {dimension_semantics = [#tpu.dimension_semantics<parallel>, #tpu.dimension_semantics<parallel>], iteration_bounds = array<i64: 2, 1>, scalar_prefetch = 0 : i64, scratch_operands = 0 : i64, tpu.core_type = #tpu.core_type<tc>, window_params = [{transform_indices = @transform_0, window_bounds = array<i64: 1, 104, 32>}, {transform_indices = @transform_1, window_bounds = array<i64: 1, 104, 32>}, {pipeline_mode = #tpu.pipeline_mode<synchronous>, transform_indices = @transform_2, window_bounds = array<i64: 576, 32>}, {transform_indices = @transform_3, window_bounds = array<i64: 1, 80, 32>}]} {
    %c80_i32 = arith.constant 80 : i32
    %0 = arith.muli %arg1, %c80_i32 : i32
    %1 = tpu.assume_multiple %0, 80 : i32
    %c0 = arith.constant 0 : index
    %2 = arith.index_cast %1 : i32 to index
    %c0_0 = arith.constant 0 : index
    %3 = vector.load %arg2[%c0, %2, %c0_0] : memref<1x104x32xbf16, #tpu.memory_space<vmem>>, vector<1x104x32xbf16>
    %4 = vector.shape_cast %3 : vector<1x104x32xbf16> to vector<104x32xbf16>
    %5 = vector.extract_strided_slice %4 {offsets = [0, 0], sizes = [80, 32], strides = [1, 1]} : vector<104x32xbf16> to vector<80x32xbf16>
    %6 = vector.extract_strided_slice %4 {offsets = [1, 0], sizes = [80, 32], strides = [1, 1]} : vector<104x32xbf16> to vector<80x32xbf16>
    %7 = vector.extract_strided_slice %4 {offsets = [2, 0], sizes = [80, 32], strides = [1, 1]} : vector<104x32xbf16> to vector<80x32xbf16>
    %8 = vector.extract_strided_slice %4 {offsets = [10, 0], sizes = [80, 32], strides = [1, 1]} : vector<104x32xbf16> to vector<80x32xbf16>
    %9 = vector.extract_strided_slice %4 {offsets = [11, 0], sizes = [80, 32], strides = [1, 1]} : vector<104x32xbf16> to vector<80x32xbf16>
    %10 = vector.extract_strided_slice %4 {offsets = [12, 0], sizes = [80, 32], strides = [1, 1]} : vector<104x32xbf16> to vector<80x32xbf16>
    %11 = vector.extract_strided_slice %4 {offsets = [20, 0], sizes = [80, 32], strides = [1, 1]} : vector<104x32xbf16> to vector<80x32xbf16>
    %12 = vector.extract_strided_slice %4 {offsets = [21, 0], sizes = [80, 32], strides = [1, 1]} : vector<104x32xbf16> to vector<80x32xbf16>
    %13 = vector.extract_strided_slice %4 {offsets = [22, 0], sizes = [80, 32], strides = [1, 1]} : vector<104x32xbf16> to vector<80x32xbf16>
    %c0_1 = arith.constant 0 : index
    %14 = arith.index_cast %1 : i32 to index
    %c0_2 = arith.constant 0 : index
    %15 = vector.load %arg3[%c0_1, %14, %c0_2] : memref<1x104x32xbf16, #tpu.memory_space<vmem>>, vector<1x104x32xbf16>
    %16 = vector.shape_cast %15 : vector<1x104x32xbf16> to vector<104x32xbf16>
    %17 = vector.extract_strided_slice %16 {offsets = [0, 0], sizes = [80, 32], strides = [1, 1]} : vector<104x32xbf16> to vector<80x32xbf16>
    %18 = vector.extract_strided_slice %16 {offsets = [1, 0], sizes = [80, 32], strides = [1, 1]} : vector<104x32xbf16> to vector<80x32xbf16>
    %19 = vector.extract_strided_slice %16 {offsets = [2, 0], sizes = [80, 32], strides = [1, 1]} : vector<104x32xbf16> to vector<80x32xbf16>
    %20 = vector.extract_strided_slice %16 {offsets = [10, 0], sizes = [80, 32], strides = [1, 1]} : vector<104x32xbf16> to vector<80x32xbf16>
    %21 = vector.extract_strided_slice %16 {offsets = [11, 0], sizes = [80, 32], strides = [1, 1]} : vector<104x32xbf16> to vector<80x32xbf16>
    %22 = vector.extract_strided_slice %16 {offsets = [12, 0], sizes = [80, 32], strides = [1, 1]} : vector<104x32xbf16> to vector<80x32xbf16>
    %23 = vector.extract_strided_slice %16 {offsets = [20, 0], sizes = [80, 32], strides = [1, 1]} : vector<104x32xbf16> to vector<80x32xbf16>
    %24 = vector.extract_strided_slice %16 {offsets = [21, 0], sizes = [80, 32], strides = [1, 1]} : vector<104x32xbf16> to vector<80x32xbf16>
    %25 = vector.extract_strided_slice %16 {offsets = [22, 0], sizes = [80, 32], strides = [1, 1]} : vector<104x32xbf16> to vector<80x32xbf16>
    %26 = tpu.concatenate %5, %6, %7, %8, %9, %10, %11, %12, %13, %17, %18, %19, %20, %21, %22, %23 in 1 : vector<80x32xbf16>, vector<80x32xbf16>, vector<80x32xbf16>, vector<80x32xbf16>, vector<80x32xbf16>, vector<80x32xbf16>, vector<80x32xbf16>, vector<80x32xbf16>, vector<80x32xbf16>, vector<80x32xbf16>, vector<80x32xbf16>, vector<80x32xbf16>, vector<80x32xbf16>, vector<80x32xbf16>, vector<80x32xbf16>, vector<80x32xbf16> -> vector<80x512xbf16>
    %27 = tpu.concatenate %24, %25 in 1 : vector<80x32xbf16>, vector<80x32xbf16> -> vector<80x64xbf16>
    %28 = tpu.concatenate %26, %27 in 1 : vector<80x512xbf16>, vector<80x64xbf16> -> vector<80x576xbf16>
    %c0_3 = arith.constant 0 : index
    %c0_4 = arith.constant 0 : index
    %29 = vector.load %arg4[%c0_3, %c0_4] : memref<576x32xbf16, #tpu.memory_space<vmem>>, vector<576x32xbf16>
    %cst = arith.constant dense<0.000000e+00> : vector<80x32xf32>
    %30 = tpu.matmul %28, %29, %cst {dimension_numbers = #tpu.dot_dimension_numbers<[1], [0], [0], [1], [0, 0, 1, 1], [], []>} : vector<80x576xbf16>, vector<576x32xbf16>, vector<80x32xf32> -> vector<80x32xf32>
    %c0_5 = arith.constant 0 : index
    %c0_6 = arith.constant 0 : index
    %c0_7 = arith.constant 0 : index
    %31 = vector.load %arg5[%c0_5, %c0_6, %c0_7] : memref<1x80x32xf32, #tpu.memory_space<vmem>>, vector<1x80x32xf32>
    %32 = vector.shape_cast %31 : vector<1x80x32xf32> to vector<80x32xf32>
    %33 = vector.shape_cast %30 : vector<80x32xf32> to vector<1x80x32xf32>
    tpu.vector_store %arg5[%c0_5, %c0_6, %c0_7], %33 {strides = array<i32>} : memref<1x80x32xf32, #tpu.memory_space<vmem>>, vector<1x80x32xf32>,
    return
  }
  func.func @transform_0(%arg0: i32, %arg1: i32) -> (i32, i32, i32) {
    %c0_i32 = arith.constant 0 : i32
    %c0_i32_0 = arith.constant 0 : i32
    %c0_i32_1 = arith.constant 0 : i32
    return %arg0, %c0_i32, %c0_i32_0 : i32, i32, i32
  }
  func.func @transform_1(%arg0: i32, %arg1: i32) -> (i32, i32, i32) {
    %c0_i32 = arith.constant 0 : i32
    %c0_i32_0 = arith.constant 0 : i32
    %c0_i32_1 = arith.constant 0 : i32
    return %arg0, %c0_i32, %c0_i32_0 : i32, i32, i32
  }
  func.func @transform_2(%arg0: i32, %arg1: i32) -> (i32, i32) {
    %c0_i32 = arith.constant 0 : i32
    %c0_i32_0 = arith.constant 0 : i32
    %c0_i32_1 = arith.constant 0 : i32
    return %c0_i32, %c0_i32_0 : i32, i32
  }
  func.func @transform_3(%arg0: i32, %arg1: i32) -> (i32, i32, i32) {
    %c0_i32 = arith.constant 0 : i32
    %c0_i32_0 = arith.constant 0 : i32
    return %arg0, %arg1, %c0_i32 : i32, i32, i32
  }
}

module attributes {stable_mosaic.version = 11 : i64} {
  func.func @kernel(%arg0: i32, %arg1: memref<1x64x32xf32, #tpu.memory_space<vmem>>, %arg2: memref<1x32xf32, #tpu.memory_space<vmem>>, %arg3: memref<1x32xf32, #tpu.memory_space<vmem>>, %arg4: memref<1x64x32xf32, #tpu.memory_space<vmem>>) attributes {dimension_semantics = [#tpu.dimension_semantics<parallel>], iteration_bounds = array<i64: 2>, scalar_prefetch = 0 : i64, scratch_operands = 0 : i64, tpu.core_type = #tpu.core_type<tc>, window_params = [{transform_indices = @transform_0, window_bounds = array<i64: 1, 64, 32>}, {pipeline_mode = #tpu.pipeline_mode<synchronous>, transform_indices = @transform_1, window_bounds = array<i64: 1, 32>}, {pipeline_mode = #tpu.pipeline_mode<synchronous>, transform_indices = @transform_2, window_bounds = array<i64: 1, 32>}, {transform_indices = @transform_3, window_bounds = array<i64: 1, 64, 32>}]} {
    %c0 = arith.constant 0 : index
    %c0_0 = arith.constant 0 : index
    %c0_1 = arith.constant 0 : index
    %0 = vector.load %arg1[%c0, %c0_0, %c0_1] : memref<1x64x32xf32, #tpu.memory_space<vmem>>, vector<1x64x32xf32>
    %1 = vector.shape_cast %0 : vector<1x64x32xf32> to vector<64x32xf32>
    %2 = arith.mulf %1, %1 : vector<64x32xf32>
    %cst = arith.constant dense<0.000000e+00> : vector<64xf32>
    %3 = vector.multi_reduction <add>, %2, %cst [1] : vector<64x32xf32> to vector<64xf32>
    %4 = vector.shape_cast %3 : vector<64xf32> to vector<64x1xf32>
    %cst_2 = arith.constant 1.000000e-24 : f32
    %5 = vector.broadcast %cst_2 : f32 to vector<64x1xf32>
    %6 = arith.maximumf %4, %5 : vector<64x1xf32>
    %7 = math.rsqrt %6 : vector<64x1xf32>
    %8 = vector.broadcast %7 : vector<64x1xf32> to vector<64x32xf32>
    %9 = arith.mulf %1, %8 : vector<64x32xf32>
    %cst_3 = arith.constant dense<0.000000e+00> : vector<32xf32>
    %10 = vector.multi_reduction <add>, %9, %cst_3 [0] : vector<64x32xf32> to vector<32xf32>
    %11 = vector.shape_cast %10 : vector<32xf32> to vector<1x32xf32>
    %cst_4 = arith.constant 1.562500e-02 : f32
    %12 = vector.broadcast %cst_4 : f32 to vector<1x32xf32>
    %13 = arith.mulf %11, %12 : vector<1x32xf32>
    %14 = arith.mulf %9, %9 : vector<64x32xf32>
    %cst_5 = arith.constant dense<0.000000e+00> : vector<32xf32>
    %15 = vector.multi_reduction <add>, %14, %cst_5 [0] : vector<64x32xf32> to vector<32xf32>
    %16 = vector.shape_cast %15 : vector<32xf32> to vector<1x32xf32>
    %cst_6 = arith.constant 1.562500e-02 : f32
    %17 = vector.broadcast %cst_6 : f32 to vector<1x32xf32>
    %18 = arith.mulf %16, %17 : vector<1x32xf32>
    %19 = arith.mulf %13, %13 : vector<1x32xf32>
    %20 = arith.subf %18, %19 : vector<1x32xf32>
    %cst_7 = arith.constant 0.000000e+00 : f32
    %21 = vector.broadcast %cst_7 : f32 to vector<1x32xf32>
    %22 = arith.maximumf %20, %21 : vector<1x32xf32>
    %23 = vector.broadcast %13 : vector<1x32xf32> to vector<64x32xf32>
    %24 = arith.subf %9, %23 : vector<64x32xf32>
    %cst_8 = arith.constant 9.99999974E-6 : f32
    %25 = vector.broadcast %cst_8 : f32 to vector<1x32xf32>
    %26 = arith.addf %22, %25 : vector<1x32xf32>
    %27 = math.rsqrt %26 : vector<1x32xf32>
    %28 = vector.broadcast %27 : vector<1x32xf32> to vector<64x32xf32>
    %29 = arith.mulf %24, %28 : vector<64x32xf32>
    %c0_9 = arith.constant 0 : index
    %c0_10 = arith.constant 0 : index
    %30 = vector.load %arg2[%c0_9, %c0_10] : memref<1x32xf32, #tpu.memory_space<vmem>>, vector<1x32xf32>
    %31 = vector.broadcast %30 : vector<1x32xf32> to vector<64x32xf32>
    %32 = arith.mulf %29, %31 : vector<64x32xf32>
    %c0_11 = arith.constant 0 : index
    %c0_12 = arith.constant 0 : index
    %33 = vector.load %arg3[%c0_11, %c0_12] : memref<1x32xf32, #tpu.memory_space<vmem>>, vector<1x32xf32>
    %34 = vector.broadcast %33 : vector<1x32xf32> to vector<64x32xf32>
    %35 = arith.addf %32, %34 : vector<64x32xf32>
    %cst_13 = arith.constant 0.000000e+00 : f32
    %36 = vector.broadcast %cst_13 : f32 to vector<64x32xf32>
    %37 = arith.maximumf %35, %36 : vector<64x32xf32>
    %c0_14 = arith.constant 0 : index
    %c0_15 = arith.constant 0 : index
    %c0_16 = arith.constant 0 : index
    %38 = vector.load %arg4[%c0_14, %c0_15, %c0_16] : memref<1x64x32xf32, #tpu.memory_space<vmem>>, vector<1x64x32xf32>
    %39 = vector.shape_cast %38 : vector<1x64x32xf32> to vector<64x32xf32>
    %40 = vector.shape_cast %37 : vector<64x32xf32> to vector<1x64x32xf32>
    tpu.vector_store %arg4[%c0_14, %c0_15, %c0_16], %40 {strides = array<i32>} : memref<1x64x32xf32, #tpu.memory_space<vmem>>, vector<1x64x32xf32>,
    return
  }
  func.func @transform_0(%arg0: i32) -> (i32, i32, i32) {
    %c0_i32 = arith.constant 0 : i32
    %c0_i32_0 = arith.constant 0 : i32
    %c0_i32_1 = arith.constant 0 : i32
    return %arg0, %c0_i32, %c0_i32_0 : i32, i32, i32
  }
  func.func @transform_1(%arg0: i32) -> (i32, i32) {
    %c0_i32 = arith.constant 0 : i32
    %c0_i32_0 = arith.constant 0 : i32
    %c0_i32_1 = arith.constant 0 : i32
    return %c0_i32, %c0_i32_0 : i32, i32
  }
  func.func @transform_2(%arg0: i32) -> (i32, i32) {
    %c0_i32 = arith.constant 0 : i32
    %c0_i32_0 = arith.constant 0 : i32
    %c0_i32_1 = arith.constant 0 : i32
    return %c0_i32, %c0_i32_0 : i32, i32
  }
  func.func @transform_3(%arg0: i32) -> (i32, i32, i32) {
    %c0_i32 = arith.constant 0 : i32
    %c0_i32_0 = arith.constant 0 : i32
    %c0_i32_1 = arith.constant 0 : i32
    return %arg0, %c0_i32, %c0_i32_0 : i32, i32, i32
  }
}

</mosaic_0001>

<llo_original>
// kernel: conv2x_forward.5
$region0: #{conv2x_forward.5}
  #allocation0 [shape = 'u32[]', space=smem, size = 0x4, offset = 0x4, fixed_abs, tag = 'smem constant byte address 0x4 - core index']
  #allocation1 [shape = 'u32[144,128]{1,0:T(1,128)}', space=vmem, size = 0x12000, scoped, tag = 'internal scratch']
  %s0 = inlined_call_operand.vmem [shape: f32[2,64,32], index: 0, kind: input, shape index: {}]
  %s1 = inlined_call_operand.vmem [shape: f32[1,32], index: 1, kind: input, shape index: {}]
  %s2 = inlined_call_operand.vmem [shape: f32[1,32], index: 2, kind: input, shape index: {}]
  %s3 = inlined_call_operand.vmem [shape: bf16[2,64,32], index: 3, kind: output, shape index: {}]
  %s4 = sld [smem:[#allocation0]]
  $region45: #{conv2x_forward.5} parent=0
    _
  %s6 = ssub.s32 1, %s4
  %s7 = scalar_select 0, %s6, %s4
  loop: start=0, step=1, limit=4
  $region2: #{conv2x_forward.5} parent=0 // loop_pre_header
    _
  $region3: #{conv2x_forward.5} parent=0 // loop_header
    %s9 = sphi 0, %s13
    %p10 = scmp.ge.s32.totalorder %s9, 4
    %s19 = sphi 0, %s21
    %s22 = sphi 0, %s19
    %s23 = sphi 0, %s22
    %s39 = sphi 0, %s23
    %s43 = sphi 0, %s43
    %s45 = sphi 0, %s43
    %s46 = sphi 0, %s45
    %s60 = sphi 0, %s46
    %s64 = sphi 0, %s64
    %s66 = sphi 0, %s64
    %s67 = sphi 0, %s66
    %s81 = sphi 0, %s67
    %s87 = sphi 0, %s89
    %s90 = sphi 0, %s87
    %s91 = sphi 0, %s90
    %s107 = sphi 0, %s91
  $region4: #{conv2x_forward.5} parent=0 // loop_header_branch
    %12 = sbr.rel (%p10) target = $region8
  $region5: #{conv2x_forward.5} parent=0 // loop_body
    %s14 = ssub.s32 %s9, 1
    %s15 = ssub.s32 %s9, 2
    %s16 = sadd.s32 %s9, 1
    %s17 = ssub.s32 %s9, %s16
    %p18 = scmp.eq.s32.totalorder %s17, 0
    %s20 = sadd.s32 %s19, 1
    %s21 = scalar_select %p18, %s19, %s20
    %p24 = pneg %p18
    %p25 = scmp.eq.s32.totalorder %s9, 1
    %p26 = por %p24, %p25
    %p27 = scmp.ne.s32.totalorder %s19, %s22
    %p28 = scmp.eq.s32.totalorder %s9, 0
    %p29 = por %p27, %p28
    %p30 = scmp.ne.s32.totalorder %s19, %s22
    %p31 = scmp.eq.s32.totalorder %s14, 1
    %p32 = por %p30, %p31
    %p33 = scmp.ne.s32.totalorder %s22, %s23
    %p34 = scmp.eq.s32.totalorder %s14, 0
    %p35 = por %p33, %p34
    %p36 = scmp.ne.s32.totalorder %s22, %s23
    %p37 = scmp.eq.s32.totalorder %s15, 1
    %p38 = por %p36, %p37
    %p40 = scmp.ne.s32.totalorder %s23, %s39
    %p41 = scmp.eq.s32.totalorder %s15, 0
    %p42 = por %p40, %p41
    %s44 = sadd.s32 %s43, 1
    %p47 = scmp.eq.s32.totalorder %s9, 1
    %p48 = scmp.ne.s32.totalorder %s43, %s45
    %p49 = scmp.eq.s32.totalorder %s9, 0
    %p50 = por %p48, %p49
    %p51 = scmp.ne.s32.totalorder %s43, %s45
    %p52 = scmp.eq.s32.totalorder %s14, 1
    %p53 = por %p51, %p52
    %p54 = scmp.ne.s32.totalorder %s45, %s46
    %p55 = scmp.eq.s32.totalorder %s14, 0
    %p56 = por %p54, %p55
    %p57 = scmp.ne.s32.totalorder %s45, %s46
    %p58 = scmp.eq.s32.totalorder %s15, 1
    %p59 = por %p57, %p58
    %p61 = scmp.ne.s32.totalorder %s46, %s60
    %p62 = scmp.eq.s32.totalorder %s15, 0
    %p63 = por %p61, %p62
    %s65 = sadd.s32 %s64, 1
    %p68 = scmp.eq.s32.totalorder %s9, 1
    %p69 = scmp.ne.s32.totalorder %s64, %s66
    %p70 = scmp.eq.s32.totalorder %s9, 0
    %p71 = por %p69, %p70
    %p72 = scmp.ne.s32.totalorder %s64, %s66
    %p73 = scmp.eq.s32.totalorder %s14, 1
    %p74 = por %p72, %p73
    %p75 = scmp.ne.s32.totalorder %s66, %s67
    %p76 = scmp.eq.s32.totalorder %s14, 0
    %p77 = por %p75, %p76
    %p78 = scmp.ne.s32.totalorder %s66, %s67
    %p79 = scmp.eq.s32.totalorder %s15, 1
    %p80 = por %p78, %p79
    %p82 = scmp.ne.s32.totalorder %s67, %s81
    %p83 = scmp.eq.s32.totalorder %s15, 0
    %p84 = por %p82, %p83
    %s85 = ssub.s32 %s9, %s16
    %p86 = scmp.eq.s32.totalorder %s85, 0
    %s88 = sadd.s32 %s87, 1
    %s89 = scalar_select %p86, %s87, %s88
    %p92 = pneg %p86
    %p93 = scmp.eq.s32.totalorder %s9, 1
    %p94 = por %p92, %p93
    %p95 = scmp.ne.s32.totalorder %s87, %s90
    %p96 = scmp.eq.s32.totalorder %s9, 0
    %p97 = por %p95, %p96
    %p98 = scmp.ne.s32.totalorder %s87, %s90
    %p99 = scmp.eq.s32.totalorder %s14, 1
    %p100 = por %p98, %p99
    %p101 = scmp.ne.s32.totalorder %s90, %s91
    %p102 = scmp.eq.s32.totalorder %s14, 0
    %p103 = por %p101, %p102
    %p104 = scmp.ne.s32.totalorder %s90, %s91
    %p105 = scmp.eq.s32.totalorder %s15, 1
    %p106 = por %p104, %p105
    %p108 = scmp.ne.s32.totalorder %s91, %s107
    %p109 = scmp.eq.s32.totalorder %s15, 0
    %p110 = por %p108, %p109
    %p111 = scmp.le.s32.totalorder 1, %s9
    %p112 = scmp.lt.s32.totalorder %s9, 3
    %p113 = pnand %p111, %p112
    %p114 = pneg %p113
    // Predicated region
    $region9: #{conv2x_forward.5} parent=5 // pred_check
      _
    $region10: #{conv2x_forward.5} parent=5 // pred_check_branch
      %116 = sbr.rel (%p113) target = $region12
    $region11: #{conv2x_forward.5} parent=5 // pred_region
      %s117 = ssub.s32 %s9, 1
      // Predicated region
      $region13: #{conv2x_forward.5} parent=11 // pred_check
        %p118 = pneg %p56
      $region14: #{conv2x_forward.5} parent=11 // pred_check_branch
        %120 = sbr.rel (%p118) target = $region16
      $region15: #{conv2x_forward.5} parent=11 // pred_region
        _
      $region16: #{conv2x_forward.5} parent=11 // pred_fallthru
        _
      // Predicated region
      $region17: #{conv2x_forward.5} parent=11 // pred_check
        %p121 = pneg %p77
      $region18: #{conv2x_forward.5} parent=11 // pred_check_branch
        %123 = sbr.rel (%p121) target = $region20
      $region19: #{conv2x_forward.5} parent=11 // pred_region
        _
      $region20: #{conv2x_forward.5} parent=11 // pred_fallthru
        _
    $region12: #{conv2x_forward.5} parent=5 // pred_fallthru
      _
    %p124 = scmp.lt.s32.totalorder %s9, 2
    // Predicated region
    $region21: #{conv2x_forward.5} parent=5 // pred_check
      %p125 = pneg %p124
    $region22: #{conv2x_forward.5} parent=5 // pred_check_branch
      %127 = sbr.rel (%p125) target = $region24
    $region23: #{conv2x_forward.5} parent=5 // pred_region
      // Predicated region
      $region25: #{conv2x_forward.5} parent=23 // pred_check
        %p128 = pneg %p29
      $region26: #{conv2x_forward.5} parent=23 // pred_check_branch
        %130 = sbr.rel (%p128) target = $region28
      $region27: #{conv2x_forward.5} parent=23 // pred_region
        %p131 = scmp.lt.s32.totalorder %s9, 1
        %s132 = scalar_select %p131, %s9, 1
        %s133 = smul.addr %s132, 8
        %s134 = smul.addr %s133, 8
        %s135 = scalar_lea.vmem %s0, %s134
      $region28: #{conv2x_forward.5} parent=23 // pred_fallthru
        _
    $region24: #{conv2x_forward.5} parent=5 // pred_fallthru
      _
    %p136 = scmp.le.s32.totalorder 1, %s9
    %p137 = scmp.lt.s32.totalorder %s9, 3
    %p138 = pnand %p136, %p137
    %p139 = pneg %p138
    // Predicated region
    $region29: #{conv2x_forward.5} parent=5 // pred_check
      _
    $region30: #{conv2x_forward.5} parent=5 // pred_check_branch
      %141 = sbr.rel (%p138) target = $region32
    $region31: #{conv2x_forward.5} parent=5 // pred_region
      %s142 = ssub.s32 %s9, 1
      %p143 = scmp.lt.s32.totalorder %s14, 1
      %s144 = scalar_select %p143, %s14, 1
      %s145 = smul.addr %s144, 8
      %s146 = smul.addr %s145, 8
      %s147 = scalar_lea.vmem %s0, %s146
      %p148 = pneg %p35
      %p149 = pneg %p32
      %p150 = pneg %p56
      %p151 = pneg %p53
      %p152 = pneg %p77
      %p153 = pneg %p74
      %p154 = pneg %p103
      %p155 = pneg %p100
      %p156 = scmp.lt.s32.totalorder %s14, 1
      %s157 = scalar_select %p156, %s14, 1
      %s158 = smul.addr %s157, 8
      %s159 = smul.addr %s158, 4
      %s160 = scalar_lea.vmem %s3, %s159
      %p161 = scmp.lt.s32.totalorder %s14, 1
      %s162 = scalar_select %p161, %s14, 1
      %s163 = smul.addr %s162, 8
      %s164 = smul.addr %s163, 8
      %s165 = scalar_lea.vmem %s0, %s164
      %p166 = scmp.lt.s32.totalorder %s14, 1
      %s167 = scalar_select %p166, %s14, 1
      %s168 = smul.addr %s167, 8
      %s169 = smul.addr %s168, 4
      %s170 = scalar_lea.vmem %s3, %s169
      %v171 = vld [vmem:[%s165] sm:$0xff]
      %v172 = vld [vmem:[%s165 + $0x8] sm:$0xff]
      %v173 = vld [vmem:[%s165 + $0x10] sm:$0xff]
      %v174 = vld [vmem:[%s165 + $0x18] sm:$0xff]
      %v175 = vld [vmem:[%s165 + $0x20] sm:$0xff]
      %v176 = vld [vmem:[%s165 + $0x28] sm:$0xff]
      %v177 = vld [vmem:[%s165 + $0x30] sm:$0xff]
      %v178 = vld [vmem:[%s165 + $0x38] sm:$0xff]
      %v179 = vmul.f32 %v171, %v171
      %v180 = vmul.f32 %v172, %v172
      %v181 = vmul.f32 %v173, %v173
      %v182 = vmul.f32 %v174, %v174
      %v183 = vmul.f32 %v175, %v175
      %v184 = vmul.f32 %v176, %v176
      %v185 = vmul.f32 %v177, %v177
      %v186 = vmul.f32 %v178, %v178
      %vm187 = vcmask 261120
      %v188 = vsel %vm187, %v179, 0.0
      %189 = vadd.xlane.f32.xlu0 %v188
      %v190 = vpop.xlane.xlu0 %189
      %v191 = vsel %vm187, %v180, 0.0
      %192 = vadd.xlane.f32.xlu0 %v191
      %v193 = vpop.xlane.xlu0 %192
      %v194 = vsel %vm187, %v181, 0.0
      %195 = vadd.xlane.f32.xlu0 %v194
      %v196 = vpop.xlane.xlu0 %195
      %v197 = vsel %vm187, %v182, 0.0
      %198 = vadd.xlane.f32.xlu0 %v197
      %v199 = vpop.xlane.xlu0 %198
      %v200 = vsel %vm187, %v183, 0.0
      %201 = vadd.xlane.f32.xlu0 %v200
      %v202 = vpop.xlane.xlu0 %201
      %v203 = vsel %vm187, %v184, 0.0
      %204 = vadd.xlane.f32.xlu0 %v203
      %v205 = vpop.xlane.xlu0 %204
      %v206 = vsel %vm187, %v185, 0.0
      %207 = vadd.xlane.f32.xlu0 %v206
      %v208 = vpop.xlane.xlu0 %207
      %v209 = vsel %vm187, %v186, 0.0
      %210 = vadd.xlane.f32.xlu0 %v209
      %v211 = vpop.xlane.xlu0 %210
      %v212 = vmax.f32 %v190, 1e-24
      %v213 = vmax.f32 %v193, 1e-24
      %v214 = vmax.f32 %v196, 1e-24
      %v215 = vmax.f32 %v199, 1e-24
      %v216 = vmax.f32 %v202, 1e-24
      %v217 = vmax.f32 %v205, 1e-24
      %v218 = vmax.f32 %v208, 1e-24
      %v219 = vmax.f32 %v211, 1e-24
      %v220 = vrsqrt.pop %v212
      %v221 = vrsqrt.pop %v213
      %v222 = vrsqrt.pop %v214
      %v223 = vrsqrt.pop %v215
      %v224 = vrsqrt.pop %v216
      %v225 = vrsqrt.pop %v217
      %v226 = vrsqrt.pop %v218
      %v227 = vrsqrt.pop %v219
      %v228 = vmul.f32 %v171, %v220
      %v229 = vmul.f32 %v172, %v221
      %v230 = vmul.f32 %v173, %v222
      %v231 = vmul.f32 %v174, %v223
      %v232 = vmul.f32 %v175, %v224
      %v233 = vmul.f32 %v176, %v225
      %v234 = vmul.f32 %v177, %v226
      %v235 = vmul.f32 %v178, %v227
      %v236 = vsel %vm187, %v228, 0.0
      %v237 = vsel %vm187, %v229, 0.0
      %v238 = vadd.f32 %v236, %v237
      %v239 = vsel %vm187, %v230, 0.0
      %v240 = vadd.f32 %v238, %v239
      %v241 = vsel %vm187, %v231, 0.0
      %v242 = vadd.f32 %v240, %v241
      %v243 = vsel %vm187, %v232, 0.0
      %v244 = vadd.f32 %v242, %v243
      %v245 = vsel %vm187, %v233, 0.0
      %v246 = vadd.f32 %v244, %v245
      %v247 = vsel %vm187, %v234, 0.0
      %v248 = vadd.f32 %v246, %v247
      %v249 = vsel %vm187, %v235, 0.0
      %v250 = vadd.f32 %v248, %v249
      %v251 = vrot.slane %v250, 4
      %v252 = vadd.f32 %v250, %v251
      %v253 = vrot.slane %v252, 2
      %v254 = vadd.f32 %v252, %v253
      %v255 = vrot.slane %v254, 1
      %v256 = vadd.f32 %v254, %v255
      %v257 = vmul.f32 %v256, 0.015625
      %v258 = vmul.f32 %v228, %v228
      %v259 = vmul.f32 %v229, %v229
      %v260 = vmul.f32 %v230, %v230
      %v261 = vmul.f32 %v231, %v231
      %v262 = vmul.f32 %v232, %v232
      %v263 = vmul.f32 %v233, %v233
      %v264 = vmul.f32 %v234, %v234
      %v265 = vmul.f32 %v235, %v235
      %v266 = vsel %vm187, %v258, 0.0
      %v267 = vsel %vm187, %v259, 0.0
      %v268 = vadd.f32 %v266, %v267
      %v269 = vsel %vm187, %v260, 0.0
      %v270 = vadd.f32 %v268, %v269
      %v271 = vsel %vm187, %v261, 0.0
      %v272 = vadd.f32 %v270, %v271
      %v273 = vsel %vm187, %v262, 0.0
      %v274 = vadd.f32 %v272, %v273
      %v275 = vsel %vm187, %v263, 0.0
      %v276 = vadd.f32 %v274, %v275
      %v277 = vsel %vm187, %v264, 0.0
      %v278 = vadd.f32 %v276, %v277
      %v279 = vsel %vm187, %v265, 0.0
      %v280 = vadd.f32 %v278, %v279
      %v281 = vrot.slane %v280, 4
      %v282 = vadd.f32 %v280, %v281
      %v283 = vrot.slane %v282, 2
      %v284 = vadd.f32 %v282, %v283
      %v285 = vrot.slane %v284, 1
      %v286 = vadd.f32 %v284, %v285
      %v287 = vmul.f32 %v286, 0.015625
      %v288 = vmul.f32 %v257, %v257
      %v289 = vsub.f32 %v287, %v288
      %v290 = vmax.f32 %v289, 0.0
      %v291 = vsub.f32 %v228, %v257
      %v292 = vsub.f32 %v229, %v257
      %v293 = vsub.f32 %v230, %v257
      %v294 = vsub.f32 %v231, %v257
      %v295 = vsub.f32 %v232, %v257
      %v296 = vsub.f32 %v233, %v257
      %v297 = vsub.f32 %v234, %v257
      %v298 = vsub.f32 %v235, %v257
      %v299 = vadd.f32 %v290, 1e-05
      %v300 = vrsqrt.pop %v299
      %v301 = vmul.f32 %v291, %v300
      %v302 = vmul.f32 %v292, %v300
      %v303 = vmul.f32 %v293, %v300
      %v304 = vmul.f32 %v294, %v300
      %v305 = vmul.f32 %v295, %v300
      %v306 = vmul.f32 %v296, %v300
      %v307 = vmul.f32 %v297, %v300
      %v308 = vmul.f32 %v298, %v300
      %v309 = vld [vmem:[%s1] sm:$0x1]
      %v311 = vlaneseq
      %v312 = vshrl.u32 %v311, 7
      %v313 = vsub.s32 0, %v312
      %v314 = vrot.slane %v309, %v313
      %v316 = vmul.f32 %v301, %v314
      %v317 = vmul.f32 %v302, %v314
      %v318 = vmul.f32 %v303, %v314
      %v319 = vmul.f32 %v304, %v314
      %v320 = vmul.f32 %v305, %v314
      %v321 = vmul.f32 %v306, %v314
      %v322 = vmul.f32 %v307, %v314
      %v323 = vmul.f32 %v308, %v314
      %v324 = vld [vmem:[%s2] sm:$0x1]
      %v326 = vlaneseq
      %v327 = vshrl.u32 %v326, 7
      %v328 = vsub.s32 0, %v327
      %v329 = vrot.slane %v324, %v328
      %v331 = vadd.f32 %v316, %v329
      %v332 = vadd.f32 %v317, %v329
      %v333 = vadd.f32 %v318, %v329
      %v334 = vadd.f32 %v319, %v329
      %v335 = vadd.f32 %v320, %v329
      %v336 = vadd.f32 %v321, %v329
      %v337 = vadd.f32 %v322, %v329
      %v338 = vadd.f32 %v323, %v329
      %v339 = vmax.f32 %v331, 0.0
      %v340 = vmax.f32 %v332, 0.0
      %v341 = vmax.f32 %v333, 0.0
      %v342 = vmax.f32 %v334, 0.0
      %v343 = vmax.f32 %v335, 0.0
      %v344 = vmax.f32 %v336, 0.0
      %v345 = vmax.f32 %v337, 0.0
      %v346 = vmax.f32 %v338, 0.0
      %v347 = vpack.c.bf16 %v340, %v339
      %v348 = vpack.c.bf16 %v342, %v341
      %v349 = vpack.c.bf16 %v344, %v343
      %v350 = vpack.c.bf16 %v346, %v345
      %v355 = vunpack.c.l.b16 %v347
      %v356 = vunpack.c.h.b16 %v347
      %v357 = vunpack.c.l.b16 %v348
      %v358 = vunpack.c.h.b16 %v348
      %v359 = vunpack.c.l.b16 %v349
      %v360 = vunpack.c.h.b16 %v349
      %v361 = vunpack.c.l.b16 %v350
      %v362 = vunpack.c.h.b16 %v350
      %v363 = vpack.c.b16 %v355, %v355
      %v364 = vpack.c.b16 %v356, %v356
      %v365 = vpack.c.b16 %v357, %v357
      %v366 = vpack.c.b16 %v358, %v358
      %v367 = vpack.c.b16 %v359, %v359
      %v368 = vpack.c.b16 %v360, %v360
      %v369 = vpack.c.b16 %v361, %v361
      %v370 = vpack.c.b16 %v362, %v362
      %vm379 = vcmask 257024
      %380 = vst.msk [vmem:[%s170] sm:$0xf] %vm379, %v363
      %381 = vst.msk [vmem:[%s170 + $0x4] sm:$0xf] %vm379, %v364
      %382 = vst.msk [vmem:[%s170 + $0x8] sm:$0xf] %vm379, %v365
      %383 = vst.msk [vmem:[%s170 + $0xc] sm:$0xf] %vm379, %v366
      %384 = vst.msk [vmem:[%s170 + $0x10] sm:$0xf] %vm379, %v367
      %385 = vst.msk [vmem:[%s170 + $0x14] sm:$0xf] %vm379, %v368
      %386 = vst.msk [vmem:[%s170 + $0x18] sm:$0xf] %vm379, %v369
      %387 = vst.msk [vmem:[%s170 + $0x1c] sm:$0xf] %vm379, %v370
      %p388 = scmp.lt.s32.totalorder %s14, 1
      %s389 = scalar_select %p388, %s14, 1
      %s390 = smul.addr %s389, 8
      %s391 = smul.addr %s390, 4
      %s392 = scalar_lea.vmem %s3, %s391
      // Predicated region
      $region33: #{conv2x_forward.5} parent=31 // pred_check
        %p393 = pneg %p100
      $region34: #{conv2x_forward.5} parent=31 // pred_check_branch
        %395 = sbr.rel (%p393) target = $region36
      $region35: #{conv2x_forward.5} parent=31 // pred_region
        _
      $region36: #{conv2x_forward.5} parent=31 // pred_fallthru
        _
    $region32: #{conv2x_forward.5} parent=5 // pred_fallthru
      _
    %p396 = scmp.le.s32.totalorder 2, %s9
    // Predicated region
    $region37: #{conv2x_forward.5} parent=5 // pred_check
      %p397 = pneg %p396
    $region38: #{conv2x_forward.5} parent=5 // pred_check_branch
      %399 = sbr.rel (%p397) target = $region40
    $region39: #{conv2x_forward.5} parent=5 // pred_region
      %s400 = ssub.s32 %s9, 2
      // Predicated region
      $region41: #{conv2x_forward.5} parent=39 // pred_check
        %p401 = pneg %p106
      $region42: #{conv2x_forward.5} parent=39 // pred_check_branch
        %403 = sbr.rel (%p401) target = $region44
      $region43: #{conv2x_forward.5} parent=39 // pred_region
        %p404 = scmp.lt.s32.totalorder %s15, 1
        %s405 = scalar_select %p404, %s15, 1
        %s406 = smul.addr %s405, 8
        %s407 = smul.addr %s406, 4
        %s408 = scalar_lea.vmem %s3, %s407
      $region44: #{conv2x_forward.5} parent=39 // pred_fallthru
        _
    $region40: #{conv2x_forward.5} parent=5 // pred_fallthru
      _
  $region6: #{conv2x_forward.5} parent=0 // loop_footer
    %s13 = sadd.s32 1, %s9
  $region7: #{conv2x_forward.5} parent=0 // loop_footer_branch
    %8 = sbr.rel target = $region3
  $region8: #{conv2x_forward.5} parent=0 // loop_exit
    _

// kernel: conv2x_forward.4
$region0: #{conv2x_forward.4}
  #allocation0 [shape = 'u32[]', space=smem, size = 0x4, offset = 0x4, fixed_abs, tag = 'smem constant byte address 0x4 - core index']
  #allocation1 [shape = 'u32[144,128]{1,0:T(1,128)}', space=vmem, size = 0x12000, scoped, tag = 'internal scratch']
  %s0 = inlined_call_operand.vmem [shape: bf16[2,96,16], index: 0, kind: input, shape index: {}]
  %s1 = inlined_call_operand.vmem [shape: bf16[2,96,16], index: 1, kind: input, shape index: {}]
  %s2 = inlined_call_operand.vmem [shape: bf16[2,88,16], index: 2, kind: input, shape index: {}]
  %s3 = inlined_call_operand.vmem [shape: bf16[2,81,16], index: 3, kind: input, shape index: {}]
  %s4 = inlined_call_operand.vmem [shape: bf16[144,32], index: 4, kind: input, shape index: {}]
  %s5 = inlined_call_operand.vmem [shape: f32[2,80,32], index: 5, kind: output, shape index: {}]
  %s6 = sld [smem:[#allocation0]]
  $region53: #{conv2x_forward.4} parent=0
    _
  %s8 = ssub.s32 1, %s6
  %s9 = scalar_select 0, %s8, %s6
  loop: start=0, step=1, limit=4
  $region2: #{conv2x_forward.4} parent=0 // loop_pre_header
    _
  $region3: #{conv2x_forward.4} parent=0 // loop_header
    %s11 = sphi 0, %s15
    %p12 = scmp.ge.s32.totalorder %s11, 4
    %s18 = sphi 0, %s30
    %s19 = sphi 0, %s26
    %s20 = sphi 0, %s18
    %s21 = sphi 0, %s19
    %s22 = sphi 0, %s20
    %s23 = sphi 0, %s21
    %s33 = sphi 0, %s35
    %s36 = sphi 0, %s33
    %s37 = sphi 0, %s36
    %s53 = sphi 0, %s37
    %s59 = sphi 0, %s61
    %s62 = sphi 0, %s59
    %s63 = sphi 0, %s62
    %s79 = sphi 0, %s63
    %s85 = sphi 0, %s87
    %s88 = sphi 0, %s85
    %s89 = sphi 0, %s88
    %s105 = sphi 0, %s89
    %s111 = sphi 0, %s113
    %s114 = sphi 0, %s111
    %s115 = sphi 0, %s114
    %s131 = sphi 0, %s115
    %s135 = sphi 0, %s135
    %s137 = sphi 0, %s135
    %s138 = sphi 0, %s137
    %s152 = sphi 0, %s138
    %s160 = sphi 0, %s162
    %s163 = sphi 0, %s160
    %s164 = sphi 0, %s163
    %s180 = sphi 0, %s164
  $region4: #{conv2x_forward.4} parent=0 // loop_header_branch
    %14 = sbr.rel (%p12) target = $region8
  $region5: #{conv2x_forward.4} parent=0 // loop_body
    %s16 = ssub.s32 %s11, 1
    %s17 = ssub.s32 %s11, 2
    %s24 = sadd.s32 1, %s19
    %p25 = scmp.ge.s32.totalorder %s24, 1
    %s26 = scalar_select %p25, 0, %s24
    %s27 = sadd.s32 1, %s18
    %s28 = scalar_select %p25, %s27, %s18
    %p29 = scmp.ge.s32.totalorder %s28, 2
    %s30 = scalar_select %p29, 0, %s28
    %s31 = ssub.s32 %s18, %s30
    %p32 = scmp.eq.s32.totalorder %s31, 0
    %s34 = sadd.s32 %s33, 1
    %s35 = scalar_select %p32, %s33, %s34
    %p38 = pneg %p32
    %p39 = scmp.eq.s32.totalorder %s11, 1
    %p40 = por %p38, %p39
    %p41 = scmp.ne.s32.totalorder %s33, %s36
    %p42 = scmp.eq.s32.totalorder %s11, 0
    %p43 = por %p41, %p42
    %p44 = scmp.ne.s32.totalorder %s33, %s36
    %p45 = scmp.eq.s32.totalorder %s16, 1
    %p46 = por %p44, %p45
    %p47 = scmp.ne.s32.totalorder %s36, %s37
    %p48 = scmp.eq.s32.totalorder %s16, 0
    %p49 = por %p47, %p48
    %p50 = scmp.ne.s32.totalorder %s36, %s37
    %p51 = scmp.eq.s32.totalorder %s17, 1
    %p52 = por %p50, %p51
    %p54 = scmp.ne.s32.totalorder %s37, %s53
    %p55 = scmp.eq.s32.totalorder %s17, 0
    %p56 = por %p54, %p55
    %s57 = ssub.s32 %s18, %s30
    %p58 = scmp.eq.s32.totalorder %s57, 0
    %s60 = sadd.s32 %s59, 1
    %s61 = scalar_select %p58, %s59, %s60
    %p64 = pneg %p58
    %p65 = scmp.eq.s32.totalorder %s11, 1
    %p66 = por %p64, %p65
    %p67 = scmp.ne.s32.totalorder %s59, %s62
    %p68 = scmp.eq.s32.totalorder %s11, 0
    %p69 = por %p67, %p68
    %p70 = scmp.ne.s32.totalorder %s59, %s62
    %p71 = scmp.eq.s32.totalorder %s16, 1
    %p72 = por %p70, %p71
    %p73 = scmp.ne.s32.totalorder %s62, %s63
    %p74 = scmp.eq.s32.totalorder %s16, 0
    %p75 = por %p73, %p74
    %p76 = scmp.ne.s32.totalorder %s62, %s63
    %p77 = scmp.eq.s32.totalorder %s17, 1
    %p78 = por %p76, %p77
    %p80 = scmp.ne.s32.totalorder %s63, %s79
    %p81 = scmp.eq.s32.totalorder %s17, 0
    %p82 = por %p80, %p81
    %s83 = ssub.s32 %s18, %s30
    %p84 = scmp.eq.s32.totalorder %s83, 0
    %s86 = sadd.s32 %s85, 1
    %s87 = scalar_select %p84, %s85, %s86
    %p90 = pneg %p84
    %p91 = scmp.eq.s32.totalorder %s11, 1
    %p92 = por %p90, %p91
    %p93 = scmp.ne.s32.totalorder %s85, %s88
    %p94 = scmp.eq.s32.totalorder %s11, 0
    %p95 = por %p93, %p94
    %p96 = scmp.ne.s32.totalorder %s85, %s88
    %p97 = scmp.eq.s32.totalorder %s16, 1
    %p98 = por %p96, %p97
    %p99 = scmp.ne.s32.totalorder %s88, %s89
    %p100 = scmp.eq.s32.totalorder %s16, 0
    %p101 = por %p99, %p100
    %p102 = scmp.ne.s32.totalorder %s88, %s89
    %p103 = scmp.eq.s32.totalorder %s17, 1
    %p104 = por %p102, %p103
    %p106 = scmp.ne.s32.totalorder %s89, %s105
    %p107 = scmp.eq.s32.totalorder %s17, 0
    %p108 = por %p106, %p107
    %s109 = ssub.s32 %s18, %s30
    %p110 = scmp.eq.s32.totalorder %s109, 0
    %s112 = sadd.s32 %s111, 1
    %s113 = scalar_select %p110, %s111, %s112
    %p116 = pneg %p110
    %p117 = scmp.eq.s32.totalorder %s11, 1
    %p118 = por %p116, %p117
    %p119 = scmp.ne.s32.totalorder %s111, %s114
    %p120 = scmp.eq.s32.totalorder %s11, 0
    %p121 = por %p119, %p120
    %p122 = scmp.ne.s32.totalorder %s111, %s114
    %p123 = scmp.eq.s32.totalorder %s16, 1
    %p124 = por %p122, %p123
    %p125 = scmp.ne.s32.totalorder %s114, %s115
    %p126 = scmp.eq.s32.totalorder %s16, 0
    %p127 = por %p125, %p126
    %p128 = scmp.ne.s32.totalorder %s114, %s115
    %p129 = scmp.eq.s32.totalorder %s17, 1
    %p130 = por %p128, %p129
    %p132 = scmp.ne.s32.totalorder %s115, %s131
    %p133 = scmp.eq.s32.totalorder %s17, 0
    %p134 = por %p132, %p133
    %s136 = sadd.s32 %s135, 1
    %p139 = scmp.eq.s32.totalorder %s11, 1
    %p140 = scmp.ne.s32.totalorder %s135, %s137
    %p141 = scmp.eq.s32.totalorder %s11, 0
    %p142 = por %p140, %p141
    %p143 = scmp.ne.s32.totalorder %s135, %s137
    %p144 = scmp.eq.s32.totalorder %s16, 1
    %p145 = por %p143, %p144
    %p146 = scmp.ne.s32.totalorder %s137, %s138
    %p147 = scmp.eq.s32.totalorder %s16, 0
    %p148 = por %p146, %p147
    %p149 = scmp.ne.s32.totalorder %s137, %s138
    %p150 = scmp.eq.s32.totalorder %s17, 1
    %p151 = por %p149, %p150
    %p153 = scmp.ne.s32.totalorder %s138, %s152
    %p154 = scmp.eq.s32.totalorder %s17, 0
    %p155 = por %p153, %p154
    %s156 = ssub.s32 %s18, %s30
    %s157 = ssub.s32 %s19, %s26
    %s158 = sor.u32 %s156, %s157
    %p159 = scmp.eq.s32.totalorder %s158, 0
    %s161 = sadd.s32 %s160, 1
    %s162 = scalar_select %p159, %s160, %s161
    %p165 = pneg %p159
    %p166 = scmp.eq.s32.totalorder %s11, 1
    %p167 = por %p165, %p166
    %p168 = scmp.ne.s32.totalorder %s160, %s163
    %p169 = scmp.eq.s32.totalorder %s11, 0
    %p170 = por %p168, %p169
    %p171 = scmp.ne.s32.totalorder %s160, %s163
    %p172 = scmp.eq.s32.totalorder %s16, 1
    %p173 = por %p171, %p172
    %p174 = scmp.ne.s32.totalorder %s163, %s164
    %p175 = scmp.eq.s32.totalorder %s16, 0
    %p176 = por %p174, %p175
    %p177 = scmp.ne.s32.totalorder %s163, %s164
    %p178 = scmp.eq.s32.totalorder %s17, 1
    %p179 = por %p177, %p178
    %p181 = scmp.ne.s32.totalorder %s164, %s180
    %p182 = scmp.eq.s32.totalorder %s17, 0
    %p183 = por %p181, %p182
    %p184 = scmp.le.s32.totalorder 1, %s11
    %p185 = scmp.lt.s32.totalorder %s11, 3
    %p186 = pnand %p184, %p185
    %p187 = pneg %p186
    // Predicated region
    $region9: #{conv2x_forward.4} parent=5 // pred_check
      _
    $region10: #{conv2x_forward.4} parent=5 // pred_check_branch
      %189 = sbr.rel (%p186) target = $region12
    $region11: #{conv2x_forward.4} parent=5 // pred_region
      %s190 = ssub.s32 %s11, 1
      // Predicated region
      $region13: #{conv2x_forward.4} parent=11 // pred_check
        %p191 = pneg %p148
      $region14: #{conv2x_forward.4} parent=11 // pred_check_branch
        %193 = sbr.rel (%p191) target = $region16
      $region15: #{conv2x_forward.4} parent=11 // pred_region
        _
      $region16: #{conv2x_forward.4} parent=11 // pred_fallthru
        _
    $region12: #{conv2x_forward.4} parent=5 // pred_fallthru
      _
    %p194 = scmp.lt.s32.totalorder %s11, 2
    // Predicated region
    $region17: #{conv2x_forward.4} parent=5 // pred_check
      %p195 = pneg %p194
    $region18: #{conv2x_forward.4} parent=5 // pred_check_branch
      %197 = sbr.rel (%p195) target = $region20
    $region19: #{conv2x_forward.4} parent=5 // pred_region
      // Predicated region
      $region21: #{conv2x_forward.4} parent=19 // pred_check
        %p198 = pneg %p43
      $region22: #{conv2x_forward.4} parent=19 // pred_check_branch
        %200 = sbr.rel (%p198) target = $region24
      $region23: #{conv2x_forward.4} parent=19 // pred_region
        %p201 = scmp.lt.s32.totalorder %s18, 1
        %s202 = scalar_select %p201, %s18, 1
        %s203 = smul.addr %s202, 12
        %s204 = smul.addr %s203, 4
        %s205 = scalar_lea.vmem %s0, %s204
      $region24: #{conv2x_forward.4} parent=19 // pred_fallthru
        _
      // Predicated region
      $region25: #{conv2x_forward.4} parent=19 // pred_check
        %p206 = pneg %p69
      $region26: #{conv2x_forward.4} parent=19 // pred_check_branch
        %208 = sbr.rel (%p206) target = $region28
      $region27: #{conv2x_forward.4} parent=19 // pred_region
        %p209 = scmp.lt.s32.totalorder %s18, 1
        %s210 = scalar_select %p209, %s18, 1
        %s211 = smul.addr %s210, 12
        %s212 = smul.addr %s211, 4
        %s213 = scalar_lea.vmem %s1, %s212
      $region28: #{conv2x_forward.4} parent=19 // pred_fallthru
        _
      // Predicated region
      $region29: #{conv2x_forward.4} parent=19 // pred_check
        %p214 = pneg %p95
      $region30: #{conv2x_forward.4} parent=19 // pred_check_branch
        %216 = sbr.rel (%p214) target = $region32
      $region31: #{conv2x_forward.4} parent=19 // pred_region
        %p217 = scmp.lt.s32.totalorder %s18, 1
        %s218 = scalar_select %p217, %s18, 1
        %s219 = smul.addr %s218, 11
        %s220 = smul.addr %s219, 4
        %s221 = scalar_lea.vmem %s2, %s220
      $region32: #{conv2x_forward.4} parent=19 // pred_fallthru
        _
      // Predicated region
      $region33: #{conv2x_forward.4} parent=19 // pred_check
        %p222 = pneg %p121
      $region34: #{conv2x_forward.4} parent=19 // pred_check_branch
        %224 = sbr.rel (%p222) target = $region36
      $region35: #{conv2x_forward.4} parent=19 // pred_region
        %p225 = scmp.lt.s32.totalorder %s18, 1
        %s226 = scalar_select %p225, %s18, 1
        %s227 = smul.addr %s226, 11
        %s228 = smul.addr %s227, 4
        %s229 = scalar_lea.vmem %s3, %s228
      $region36: #{conv2x_forward.4} parent=19 // pred_fallthru
        _
    $region20: #{conv2x_forward.4} parent=5 // pred_fallthru
      _
    %p230 = scmp.le.s32.totalorder 1, %s11
    %p231 = scmp.lt.s32.totalorder %s11, 3
    %p232 = pnand %p230, %p231
    %p233 = pneg %p232
    // Predicated region
    $region37: #{conv2x_forward.4} parent=5 // pred_check
      _
    $region38: #{conv2x_forward.4} parent=5 // pred_check_branch
      %235 = sbr.rel (%p232) target = $region40
    $region39: #{conv2x_forward.4} parent=5 // pred_region
      %s236 = ssub.s32 %s11, 1
      %p237 = scmp.lt.s32.totalorder %s20, 1
      %s238 = scalar_select %p237, %s20, 1
      %s239 = smul.addr %s238, 12
      %s240 = smul.addr %s239, 4
      %s241 = scalar_lea.vmem %s0, %s240
      %p242 = pneg %p49
      %p243 = pneg %p46
      %p244 = scmp.lt.s32.totalorder %s20, 1
      %s245 = scalar_select %p244, %s20, 1
      %s246 = smul.addr %s245, 12
      %s247 = smul.addr %s246, 4
      %s248 = scalar_lea.vmem %s1, %s247
      %p249 = pneg %p75
      %p250 = pneg %p72
      %p251 = scmp.lt.s32.totalorder %s20, 1
      %s252 = scalar_select %p251, %s20, 1
      %s253 = smul.addr %s252, 11
      %s254 = smul.addr %s253, 4
      %s255 = scalar_lea.vmem %s2, %s254
      %p256 = pneg %p101
      %p257 = pneg %p98
      %p258 = scmp.lt.s32.totalorder %s20, 1
      %s259 = scalar_select %p258, %s20, 1
      %s260 = smul.addr %s259, 11
      %s261 = smul.addr %s260, 4
      %s262 = scalar_lea.vmem %s3, %s261
      %p263 = pneg %p127
      %p264 = pneg %p124
      %p265 = pneg %p148
      %p266 = pneg %p145
      %p267 = pneg %p176
      %p268 = pneg %p173
      %s269 = smul.u32 10, %s21
      %p270 = scmp.lt.s32.totalorder %s20, 1
      %s271 = scalar_select %p270, %s20, 1
      %p272 = scmp.lt.s32.totalorder %s269, 9
      %s273 = scalar_select %p272, %s269, 9
      %s274 = smul.addr %s271, 10
      %s275 = sadd.s32 %s273, %s274
      %s276 = smul.addr %s275, 8
      %s277 = scalar_lea.vmem %s5, %s276
      %p278 = scmp.lt.s32.totalorder %s20, 1
      %s279 = scalar_select %p278, %s20, 1
      %s280 = smul.addr %s279, 12
      %s281 = smul.addr %s280, 4
      %s282 = scalar_lea.vmem %s0, %s281
      %p283 = scmp.lt.s32.totalorder %s20, 1
      %s284 = scalar_select %p283, %s20, 1
      %s285 = smul.addr %s284, 12
      %s286 = smul.addr %s285, 4
      %s287 = scalar_lea.vmem %s1, %s286
      %p288 = scmp.lt.s32.totalorder %s20, 1
      %s289 = scalar_select %p288, %s20, 1
      %s290 = smul.addr %s289, 11
      %s291 = smul.addr %s290, 4
      %s292 = scalar_lea.vmem %s2, %s291
      %p293 = scmp.lt.s32.totalorder %s20, 1
      %s294 = scalar_select %p293, %s20, 1
      %s295 = smul.addr %s294, 11
      %s296 = smul.addr %s295, 4
      %s297 = scalar_lea.vmem %s3, %s296
      %s298 = smul.u32 10, %s21
      %p299 = scmp.lt.s32.totalorder %s20, 1
      %s300 = scalar_select %p299, %s20, 1
      %p301 = scmp.lt.s32.totalorder %s298, 9
      %s302 = scalar_select %p301, %s298, 9
      %s303 = smul.addr %s300, 10
      %s304 = sadd.s32 %s302, %s303
      %s305 = smul.addr %s304, 8
      %s306 = scalar_lea.vmem %s5, %s305
      %s307 = smul.u32 10, %s21
      %s309 = smul.u32 %s21, 80
      %s310 = sshra.s32 %s309, 3
      %s311 = sand.u32 %s309, 7
      %s312 = smul.addr %s310, 4
      %s313 = scalar_lea.vmem %s282, %s312
      %v314 = vld [vmem:[%s313] sm:$0xf]
      %v315 = vld [vmem:[%s313 + $0x4] sm:$0xf]
      %v316 = vld [vmem:[%s313 + $0x8] sm:$0xf]
      %v317 = vld [vmem:[%s313 + $0xc] sm:$0xf]
      %v318 = vld [vmem:[%s313 + $0x10] sm:$0xf]
      %v319 = vld [vmem:[%s313 + $0x14] sm:$0xf]
      %v320 = vld [vmem:[%s313 + $0x18] sm:$0xf]
      %v321 = vld [vmem:[%s313 + $0x1c] sm:$0xf]
      %v322 = vld [vmem:[%s313 + $0x20] sm:$0xf]
      %v323 = vld [vmem:[%s313 + $0x24] sm:$0xf]
      %v324 = vld [vmem:[%s313 + $0x28] sm:$0xf]
      %v325 = vld [vmem:[%s313 + $0x2c] sm:$0xf]
      %s326 = smul.addr %s310, 4
      %s327 = scalar_lea.vmem %s287, %s326
      %v328 = vld [vmem:[%s327] sm:$0xf]
      %v329 = vld [vmem:[%s327 + $0x4] sm:$0xf]
      %v330 = vld [vmem:[%s327 + $0x8] sm:$0xf]
      %v331 = vld [vmem:[%s327 + $0xc] sm:$0xf]
      %v332 = vld [vmem:[%s327 + $0x10] sm:$0xf]
      %v333 = vld [vmem:[%s327 + $0x14] sm:$0xf]
      %v334 = vld [vmem:[%s327 + $0x18] sm:$0xf]
      %v335 = vld [vmem:[%s327 + $0x1c] sm:$0xf]
      %v336 = vld [vmem:[%s327 + $0x20] sm:$0xf]
      %v337 = vld [vmem:[%s327 + $0x24] sm:$0xf]
      %v338 = vld [vmem:[%s327 + $0x28] sm:$0xf]
      %v339 = vld [vmem:[%s327 + $0x2c] sm:$0xf]
      %s340 = smul.addr %s310, 4
      %s341 = scalar_lea.vmem %s292, %s340
      %v342 = vld [vmem:[%s341] sm:$0xf]
      %v343 = vld [vmem:[%s341 + $0x4] sm:$0xf]
      %v344 = vld [vmem:[%s341 + $0x8] sm:$0xf]
      %v345 = vld [vmem:[%s341 + $0xc] sm:$0xf]
      %v346 = vld [vmem:[%s341 + $0x10] sm:$0xf]
      %v347 = vld [vmem:[%s341 + $0x14] sm:$0xf]
      %v348 = vld [vmem:[%s341 + $0x18] sm:$0xf]
      %v349 = vld [vmem:[%s341 + $0x1c] sm:$0xf]
      %v350 = vld [vmem:[%s341 + $0x20] sm:$0xf]
      %v351 = vld [vmem:[%s341 + $0x24] sm:$0xf]
      %v352 = vld [vmem:[%s341 + $0x28] sm:$0xf]
      %s353 = smul.addr %s310, 4
      %s354 = scalar_lea.vmem %s297, %s353
      %v355 = vld [vmem:[%s354] sm:$0xf]
      %v356 = vld [vmem:[%s354 + $0x4] sm:$0xf]
      %v357 = vld [vmem:[%s354 + $0x8] sm:$0xf]
      %v358 = vld [vmem:[%s354 + $0xc] sm:$0xf]
      %v359 = vld [vmem:[%s354 + $0x10] sm:$0xf]
      %v360 = vld [vmem:[%s354 + $0x14] sm:$0xf]
      %v361 = vld [vmem:[%s354 + $0x18] sm:$0xf]
      %v362 = vld [vmem:[%s354 + $0x1c] sm:$0xf]
      %v363 = vld [vmem:[%s354 + $0x20] sm:$0xf]
      %v364 = vld [vmem:[%s354 + $0x24] sm:$0xf]
      %v375 = vunpack.c.l.b16 %v314
      %v376 = vunpack.c.l.b16 %v315
      %v377 = vunpack.c.l.b16 %v316
      %v378 = vunpack.c.l.b16 %v317
      %v379 = vunpack.c.l.b16 %v318
      %v380 = vunpack.c.l.b16 %v319
      %v381 = vunpack.c.l.b16 %v320
      %v382 = vunpack.c.l.b16 %v321
      %v383 = vunpack.c.l.b16 %v322
      %v384 = vunpack.c.l.b16 %v323
      %v385 = vpack.c.b16 %v376, %v375
      %v386 = vpack.c.b16 %v378, %v377
      %v387 = vpack.c.b16 %v380, %v379
      %v388 = vpack.c.b16 %v382, %v381
      %v389 = vpack.c.b16 %v384, %v383
      %v391 = vunpack.c.l.b16 %v324
      %v392 = vpack.c.b16 %v391, %v391
      %vm393 = vsmask.f32 7424
      %v395 = vshrl.u32 %v385, 16
      %v397 = vshll.u32 %v385, 16
      %v399 = vrot.slane %v397, 1
      %v400 = vor.u32 %v395, %v399
      %v402 = vshll.u32 %v386, 16
      %v404 = vrot.slane %v402, 1
      %v405 = vsel %vm393, %v400, %v404
      %v406 = vshrl.u32 %v386, 16
      %v408 = vor.u32 %v406, %v404
      %v410 = vshll.u32 %v387, 16
      %v412 = vrot.slane %v410, 1
      %v413 = vsel %vm393, %v408, %v412
      %v414 = vshrl.u32 %v387, 16
      %v416 = vor.u32 %v414, %v412
      %v418 = vshll.u32 %v388, 16
      %v420 = vrot.slane %v418, 1
      %v421 = vsel %vm393, %v416, %v420
      %v422 = vshrl.u32 %v388, 16
      %v424 = vor.u32 %v422, %v420
      %v426 = vshll.u32 %v389, 16
      %v428 = vrot.slane %v426, 1
      %v429 = vsel %vm393, %v424, %v428
      %v430 = vshrl.u32 %v389, 16
      %v432 = vor.u32 %v430, %v428
      %v434 = vshll.u32 %v392, 16
      %v436 = vrot.slane %v434, 1
      %v437 = vsel %vm393, %v432, %v436
      %438 = vrot.lane.b32.xlu0 %v405, 16
      %v439 = vpop.permute.xlu0 %438
      %440 = vrot.lane.b32.xlu0 %v413, 16
      %v441 = vpop.permute.xlu0 %440
      %442 = vrot.lane.b32.xlu0 %v421, 16
      %v443 = vpop.permute.xlu0 %442
      %444 = vrot.lane.b32.xlu0 %v429, 16
      %v445 = vpop.permute.xlu0 %444
      %446 = vrot.lane.b32.xlu0 %v437, 16
      %v447 = vpop.permute.xlu0 %446
      %v449 = vunpack.c.l.b16 %v325
      %v450 = vpack.c.b16 %v377, %v376
      %v451 = vpack.c.b16 %v379, %v378
      %v452 = vpack.c.b16 %v381, %v380
      %v453 = vpack.c.b16 %v383, %v382
      %v454 = vpack.c.b16 %v391, %v384
      %v455 = vpack.c.b16 %v449, %v449
      %v457 = vshrl.u32 %v450, 16
      %v459 = vshll.u32 %v450, 16
      %v461 = vrot.slane %v459, 1
      %v462 = vor.u32 %v457, %v461
      %v464 = vshll.u32 %v451, 16
      %v466 = vrot.slane %v464, 1
      %v467 = vsel %vm393, %v462, %v466
      %v468 = vshrl.u32 %v451, 16
      %v470 = vor.u32 %v468, %v466
      %v472 = vshll.u32 %v452, 16
      %v474 = vrot.slane %v472, 1
      %v475 = vsel %vm393, %v470, %v474
      %v476 = vshrl.u32 %v452, 16
      %v478 = vor.u32 %v476, %v474
      %v480 = vshll.u32 %v453, 16
      %v482 = vrot.slane %v480, 1
      %v483 = vsel %vm393, %v478, %v482
      %v484 = vshrl.u32 %v453, 16
      %v486 = vor.u32 %v484, %v482
      %v488 = vshll.u32 %v454, 16
      %v490 = vrot.slane %v488, 1
      %v491 = vsel %vm393, %v486, %v490
      %v492 = vshrl.u32 %v454, 16
      %v494 = vor.u32 %v492, %v490
      %v496 = vshll.u32 %v455, 16
      %v498 = vrot.slane %v496, 1
      %v499 = vsel %vm393, %v494, %v498
      %500 = vrot.lane.b32.xlu0 %v467, 32
      %v501 = vpop.permute.xlu0 %500
      %502 = vrot.lane.b32.xlu0 %v475, 32
      %v503 = vpop.permute.xlu0 %502
      %504 = vrot.lane.b32.xlu0 %v483, 32
      %v505 = vpop.permute.xlu0 %504
      %506 = vrot.lane.b32.xlu0 %v491, 32
      %v507 = vpop.permute.xlu0 %506
      %508 = vrot.lane.b32.xlu0 %v499, 32
      %v509 = vpop.permute.xlu0 %508
      %vm510 = vcmask 1046528
      %v511 = vrot.slane %v450, 1
      %v512 = vrot.slane %v451, 1
      %v513 = vsel %vm510, %v511, %v512
      %v514 = vrot.slane %v452, 1
      %v515 = vsel %vm510, %v512, %v514
      %v516 = vrot.slane %v453, 1
      %v517 = vsel %vm510, %v514, %v516
      %v518 = vrot.slane %v454, 1
      %v519 = vsel %vm510, %v516, %v518
      %v520 = vrot.slane %v455, 1
      %v521 = vsel %vm510, %v518, %v520
      %522 = vrot.lane.b32.xlu0 %v513, 48
      %v523 = vpop.permute.xlu0 %522
      %524 = vrot.lane.b32.xlu0 %v515, 48
      %v525 = vpop.permute.xlu0 %524
      %526 = vrot.lane.b32.xlu0 %v517, 48
      %v527 = vpop.permute.xlu0 %526
      %528 = vrot.lane.b32.xlu0 %v519, 48
      %v529 = vpop.permute.xlu0 %528
      %530 = vrot.lane.b32.xlu0 %v521, 48
      %v531 = vpop.permute.xlu0 %530
      %v542 = vunpack.c.l.b16 %v328
      %v543 = vunpack.c.l.b16 %v329
      %v544 = vunpack.c.l.b16 %v330
      %v545 = vunpack.c.l.b16 %v331
      %v546 = vunpack.c.l.b16 %v332
      %v547 = vunpack.c.l.b16 %v333
      %v548 = vunpack.c.l.b16 %v334
      %v549 = vunpack.c.l.b16 %v335
      %v550 = vunpack.c.l.b16 %v336
      %v551 = vunpack.c.l.b16 %v337
      %v552 = vpack.c.b16 %v543, %v542
      %v553 = vpack.c.b16 %v545, %v544
      %v554 = vpack.c.b16 %v547, %v546
      %v555 = vpack.c.b16 %v549, %v548
      %v556 = vpack.c.b16 %v551, %v550
      %557 = vrot.lane.b32.xlu0 %v552, 64
      %v558 = vpop.permute.xlu0 %557
      %559 = vrot.lane.b32.xlu0 %v553, 64
      %v560 = vpop.permute.xlu0 %559
      %561 = vrot.lane.b32.xlu0 %v554, 64
      %v562 = vpop.permute.xlu0 %561
      %563 = vrot.lane.b32.xlu0 %v555, 64
      %v564 = vpop.permute.xlu0 %563
      %565 = vrot.lane.b32.xlu0 %v556, 64
      %v566 = vpop.permute.xlu0 %565
      %v569 = vunpack.c.l.b16 %v338
      %v570 = vunpack.c.l.b16 %v339
      %v571 = vpack.c.b16 %v544, %v543
      %v572 = vpack.c.b16 %v546, %v545
      %v573 = vpack.c.b16 %v548, %v547
      %v574 = vpack.c.b16 %v550, %v549
      %v575 = vpack.c.b16 %v569, %v551
      %v576 = vpack.c.b16 %v570, %v570
      %v578 = vshrl.u32 %v571, 16
      %v580 = vshll.u32 %v571, 16
      %v582 = vrot.slane %v580, 1
      %v583 = vor.u32 %v578, %v582
      %v585 = vshll.u32 %v572, 16
      %v587 = vrot.slane %v585, 1
      %v588 = vsel %vm393, %v583, %v587
      %v589 = vshrl.u32 %v572, 16
      %v591 = vor.u32 %v589, %v587
      %v593 = vshll.u32 %v573, 16
      %v595 = vrot.slane %v593, 1
      %v596 = vsel %vm393, %v591, %v595
      %v597 = vshrl.u32 %v573, 16
      %v599 = vor.u32 %v597, %v595
      %v601 = vshll.u32 %v574, 16
      %v603 = vrot.slane %v601, 1
      %v604 = vsel %vm393, %v599, %v603
      %v605 = vshrl.u32 %v574, 16
      %v607 = vor.u32 %v605, %v603
      %v609 = vshll.u32 %v575, 16
      %v611 = vrot.slane %v609, 1
      %v612 = vsel %vm393, %v607, %v611
      %v613 = vshrl.u32 %v575, 16
      %v615 = vor.u32 %v613, %v611
      %v617 = vshll.u32 %v576, 16
      %v619 = vrot.slane %v617, 1
      %v620 = vsel %vm393, %v615, %v619
      %621 = vrot.lane.b32.xlu0 %v588, 80
      %v622 = vpop.permute.xlu0 %621
      %623 = vrot.lane.b32.xlu0 %v596, 80
      %v624 = vpop.permute.xlu0 %623
      %625 = vrot.lane.b32.xlu0 %v604, 80
      %v626 = vpop.permute.xlu0 %625
      %627 = vrot.lane.b32.xlu0 %v612, 80
      %v628 = vpop.permute.xlu0 %627
      %629 = vrot.lane.b32.xlu0 %v620, 80
      %v630 = vpop.permute.xlu0 %629
      %v641 = vunpack.c.l.b16 %v342
      %v642 = vunpack.c.l.b16 %v343
      %v643 = vunpack.c.l.b16 %v344
      %v644 = vunpack.c.l.b16 %v345
      %v645 = vunpack.c.l.b16 %v346
      %v646 = vunpack.c.l.b16 %v347
      %v647 = vunpack.c.l.b16 %v348
      %v648 = vunpack.c.l.b16 %v349
      %v649 = vunpack.c.l.b16 %v350
      %v650 = vunpack.c.l.b16 %v351
      %v651 = vpack.c.b16 %v642, %v641
      %v652 = vpack.c.b16 %v644, %v643
      %v653 = vpack.c.b16 %v646, %v645
      %v654 = vpack.c.b16 %v648, %v647
      %v655 = vpack.c.b16 %v650, %v649
      %656 = vrot.lane.b32.xlu0 %v651, 96
      %v657 = vpop.permute.xlu0 %656
      %658 = vrot.lane.b32.xlu0 %v652, 96
      %v659 = vpop.permute.xlu0 %658
      %660 = vrot.lane.b32.xlu0 %v653, 96
      %v661 = vpop.permute.xlu0 %660
      %662 = vrot.lane.b32.xlu0 %v654, 96
      %v663 = vpop.permute.xlu0 %662
      %664 = vrot.lane.b32.xlu0 %v655, 96
      %v665 = vpop.permute.xlu0 %664
      %v667 = vunpack.c.l.b16 %v352
      %v668 = vpack.c.b16 %v667, %v667
      %v670 = vshrl.u32 %v651, 16
      %v672 = vshll.u32 %v651, 16
      %v674 = vrot.slane %v672, 1
      %v675 = vor.u32 %v670, %v674
      %v677 = vshll.u32 %v652, 16
      %v679 = vrot.slane %v677, 1
      %v680 = vsel %vm393, %v675, %v679
      %v681 = vshrl.u32 %v652, 16
      %v683 = vor.u32 %v681, %v679
      %v685 = vshll.u32 %v653, 16
      %v687 = vrot.slane %v685, 1
      %v688 = vsel %vm393, %v683, %v687
      %v689 = vshrl.u32 %v653, 16
      %v691 = vor.u32 %v689, %v687
      %v693 = vshll.u32 %v654, 16
      %v695 = vrot.slane %v693, 1
      %v696 = vsel %vm393, %v691, %v695
      %v697 = vshrl.u32 %v654, 16
      %v699 = vor.u32 %v697, %v695
      %v701 = vshll.u32 %v655, 16
      %v703 = vrot.slane %v701, 1
      %v704 = vsel %vm393, %v699, %v703
      %v705 = vshrl.u32 %v655, 16
      %v707 = vor.u32 %v705, %v703
      %v709 = vshll.u32 %v668, 16
      %v711 = vrot.slane %v709, 1
      %v712 = vsel %vm393, %v707, %v711
      %713 = vrot.lane.b32.xlu0 %v680, 112
      %v714 = vpop.permute.xlu0 %713
      %715 = vrot.lane.b32.xlu0 %v688, 112
      %v716 = vpop.permute.xlu0 %715
      %717 = vrot.lane.b32.xlu0 %v696, 112
      %v718 = vpop.permute.xlu0 %717
      %719 = vrot.lane.b32.xlu0 %v704, 112
      %v720 = vpop.permute.xlu0 %719
      %721 = vrot.lane.b32.xlu0 %v712, 112
      %v722 = vpop.permute.xlu0 %721
      %v733 = vunpack.c.l.b16 %v355
      %v734 = vunpack.c.l.b16 %v356
      %v735 = vunpack.c.l.b16 %v357
      %v736 = vunpack.c.l.b16 %v358
      %v737 = vunpack.c.l.b16 %v359
      %v738 = vunpack.c.l.b16 %v360
      %v739 = vunpack.c.l.b16 %v361
      %v740 = vunpack.c.l.b16 %v362
      %v741 = vunpack.c.l.b16 %v363
      %v742 = vunpack.c.l.b16 %v364
      %v743 = vpack.c.b16 %v734, %v733
      %v744 = vpack.c.b16 %v736, %v735
      %v745 = vpack.c.b16 %v738, %v737
      %v746 = vpack.c.b16 %v740, %v739
      %v747 = vpack.c.b16 %v742, %v741
      %vm748 = vcmask 130048
      %v750 = vsel %vm748, %v385, %v439
      %v752 = vsel %vm748, %v386, %v441
      %v754 = vsel %vm748, %v387, %v443
      %v756 = vsel %vm748, %v388, %v445
      %v758 = vsel %vm748, %v389, %v447
      %vm759 = vcmask 261120
      %v761 = vsel %vm759, %v750, %v501
      %v763 = vsel %vm759, %v752, %v503
      %v765 = vsel %vm759, %v754, %v505
      %v767 = vsel %vm759, %v756, %v507
      %v769 = vsel %vm759, %v758, %v509
      %vm770 = vcmask 392192
      %v772 = vsel %vm770, %v761, %v523
      %v774 = vsel %vm770, %v763, %v525
      %v776 = vsel %vm770, %v765, %v527
      %v778 = vsel %vm770, %v767, %v529
      %v780 = vsel %vm770, %v769, %v531
      %vm781 = vcmask 523264
      %v783 = vsel %vm781, %v772, %v558
      %v785 = vsel %vm781, %v774, %v560
      %v787 = vsel %vm781, %v776, %v562
      %v789 = vsel %vm781, %v778, %v564
      %v791 = vsel %vm781, %v780, %v566
      %vm792 = vcmask 654336
      %v794 = vsel %vm792, %v783, %v622
      %v796 = vsel %vm792, %v785, %v624
      %v798 = vsel %vm792, %v787, %v626
      %v800 = vsel %vm792, %v789, %v628
      %v802 = vsel %vm792, %v791, %v630
      %vm803 = vcmask 785408
      %v805 = vsel %vm803, %v794, %v657
      %v807 = vsel %vm803, %v796, %v659
      %v809 = vsel %vm803, %v798, %v661
      %v811 = vsel %vm803, %v800, %v663
      %v813 = vsel %vm803, %v802, %v665
      %vm814 = vcmask 916480
      %v816 = vsel %vm814, %v805, %v714
      %v819 = vsel %vm814, %v807, %v716
      %v822 = vsel %vm814, %v809, %v718
      %v825 = vsel %vm814, %v811, %v720
      %v828 = vsel %vm814, %v813, %v722
      %v830 = vld [vmem:[%s4] sm:$0xf]
      %v831 = vld [vmem:[%s4 + $0x4] sm:$0xf]
      %v832 = vld [vmem:[%s4 + $0x8] sm:$0xf]
      %v833 = vld [vmem:[%s4 + $0xc] sm:$0xf]
      %v834 = vld [vmem:[%s4 + $0x10] sm:$0xf]
      %v835 = vld [vmem:[%s4 + $0x14] sm:$0xf]
      %v836 = vld [vmem:[%s4 + $0x18] sm:$0xf]
      %v837 = vld [vmem:[%s4 + $0x1c] sm:$0xf]
      %v838 = vld [vmem:[%s4 + $0x20] sm:$0xf]
      %v839 = vld [vmem:[%s4 + $0x24] sm:$0xf]
      %v840 = vld [vmem:[%s4 + $0x28] sm:$0xf]
      %v841 = vld [vmem:[%s4 + $0x2c] sm:$0xf]
      %v842 = vld [vmem:[%s4 + $0x30] sm:$0xf]
      %v843 = vld [vmem:[%s4 + $0x34] sm:$0xf]
      %v844 = vld [vmem:[%s4 + $0x38] sm:$0xf]
      %v845 = vld [vmem:[%s4 + $0x3c] sm:$0xf]
      %v846 = vld [vmem:[%s4 + $0x40] sm:$0xf]
      %v847 = vld [vmem:[%s4 + $0x44] sm:$0xf]
      %v866 = vunpack.c.l.b16 %v830
      %v867 = vunpack.c.l.b16 %v831
      %v868 = vunpack.c.l.b16 %v832
      %v869 = vunpack.c.l.b16 %v833
      %v870 = vunpack.c.l.b16 %v834
      %v871 = vunpack.c.l.b16 %v835
      %v872 = vunpack.c.l.b16 %v836
      %v873 = vunpack.c.l.b16 %v837
      %v874 = vunpack.c.l.b16 %v838
      %v875 = vunpack.c.l.b16 %v839
      %v876 = vunpack.c.l.b16 %v840
      %v877 = vunpack.c.l.b16 %v841
      %v878 = vunpack.c.l.b16 %v842
      %v879 = vunpack.c.l.b16 %v843
      %v880 = vunpack.c.l.b16 %v844
      %v881 = vunpack.c.l.b16 %v845
      %v882 = vunpack.c.l.b16 %v846
      %v883 = vunpack.c.l.b16 %v847
      %v884 = vpack.c.b16 %v867, %v866
      %v885 = vpack.c.b16 %v869, %v868
      %v886 = vpack.c.b16 %v871, %v870
      %v887 = vpack.c.b16 %v873, %v872
      %v888 = vpack.c.b16 %v875, %v874
      %v889 = vpack.c.b16 %v877, %v876
      %v890 = vpack.c.b16 %v879, %v878
      %v891 = vpack.c.b16 %v881, %v880
      %v892 = vpack.c.b16 %v883, %v882
      %v903 = vsel %vm748, %v743, 0
      %v906 = vsel %vm748, %v744, 0
      %v909 = vsel %vm748, %v745, 0
      %v912 = vsel %vm748, %v746, 0
      %v915 = vsel %vm748, %v747, 0
      %917 = vmatprep.subr.bf16.mxu0 0
      %918 = vmatpush1.bf16.msra.mxu0 %v884
      %919 = vmatprep.subr.bf16.mxu0 0
      %920 = vmatpush1.bf16.msra.mxu0 %v885
      %921 = vmatprep.subr.bf16.mxu0 0
      %922 = vmatpush1.bf16.msra.mxu0 %v886
      %923 = vmatprep.subr.bf16.mxu0 0
      %924 = vmatpush1.bf16.msra.mxu0 %v887
      %925 = vmatprep.subr.bf16.mxu0 0
      %926 = vmatpush1.bf16.msra.mxu0 %v888
      %927 = vmatprep.subr.bf16.mxu0 0
      %928 = vmatpush1.bf16.msra.mxu0 %v889
      %929 = vmatprep.subr.bf16.mxu0 0
      %930 = vmatpush1.bf16.msra.mxu0 %v890
      %931 = vmatprep.subr.bf16.mxu0 0
      %932 = vmatpush1.bf16.msra.mxu0 %v891
      %933 = vmatprep.subr.bf16.mxu0 0
      %934 = vmatpush1.bf16.msra.mxu0 %v892
      %935 = vmatprep.subr.bf16.mxu0 0
      %936 = vmatpush1.bf16.msra.mxu0 0
      %937 = vmatprep.subr.bf16.mxu0 0
      %938 = vmatpush1.bf16.msra.mxu0 0
      %939 = vmatprep.subr.bf16.mxu0 0
      %940 = vmatpush1.bf16.msra.mxu0 0
      %941 = vmatprep.subr.bf16.mxu0 0
      %942 = vmatpush1.bf16.msra.mxu0 0
      %943 = vmatprep.subr.bf16.mxu0 0
      %944 = vmatpush1.bf16.msra.mxu0 0
      %945 = vmatprep.subr.bf16.mxu0 0
      %946 = vmatpush1.bf16.msra.mxu0 0
      %947 = vmatprep.subr.bf16.mxu0 0
      %948 = vmatpush1.bf16.msra.mxu0 0
      %949 = vmatprep.mubr.bf16.mxu0 %v903
      %950 = vmatmul.mubr.bf16.gmra.mrb[0].mxu0 %v816
      %v951 = vpop.f32.mrb[0].mxu0
      %v952 = vadd.f32 0.0, %v951
      %v953 = vpop.f32.mrb[0].mxu0
      %v954 = vpop.f32.mrb[0].mxu0
      %v955 = vadd.f32 0.0, %v954
      %v956 = vpop.f32.mrb[0].mxu0
      %957 = vmatprep.mubr.bf16.mxu0 %v906
      %958 = vmatmul.mubr.bf16.gmra.mrb[0].mxu0 %v819
      %v959 = vpop.f32.mrb[0].mxu0
      %v960 = vadd.f32 0.0, %v959
      %v961 = vpop.f32.mrb[0].mxu0
      %v962 = vpop.f32.mrb[0].mxu0
      %v963 = vadd.f32 0.0, %v962
      %v964 = vpop.f32.mrb[0].mxu0
      %965 = vmatprep.mubr.bf16.mxu0 %v909
      %966 = vmatmul.mubr.bf16.gmra.mrb[0].mxu0 %v822
      %v967 = vpop.f32.mrb[0].mxu0
      %v968 = vadd.f32 0.0, %v967
      %v969 = vpop.f32.mrb[0].mxu0
      %v970 = vpop.f32.mrb[0].mxu0
      %v971 = vadd.f32 0.0, %v970
      %v972 = vpop.f32.mrb[0].mxu0
      %973 = vmatprep.mubr.bf16.mxu0 %v912
      %974 = vmatmul.mubr.bf16.gmra.mrb[0].mxu0 %v825
      %v975 = vpop.f32.mrb[0].mxu0
      %v976 = vadd.f32 0.0, %v975
      %v977 = vpop.f32.mrb[0].mxu0
      %v978 = vpop.f32.mrb[0].mxu0
      %v979 = vadd.f32 0.0, %v978
      %v980 = vpop.f32.mrb[0].mxu0
      %981 = vmatprep.mubr.bf16.mxu0 %v915
      %982 = vmatmul.mubr.bf16.gmra.mrb[0].mxu0 %v828
      %v983 = vpop.f32.mrb[0].mxu0
      %v984 = vadd.f32 0.0, %v983
      %v985 = vpop.f32.mrb[0].mxu0
      %v986 = vpop.f32.mrb[0].mxu0
      %v987 = vadd.f32 0.0, %v986
      %v988 = vpop.f32.mrb[0].mxu0
      %989 = vdwg.mxu0
      %990 = vst.msk [vmem:[%s306] sm:$0xff] %vm759, %v952
      %991 = vst.msk [vmem:[%s306 + $0x8] sm:$0xff] %vm759, %v955
      %992 = vst.msk [vmem:[%s306 + $0x10] sm:$0xff] %vm759, %v960
      %993 = vst.msk [vmem:[%s306 + $0x18] sm:$0xff] %vm759, %v963
      %994 = vst.msk [vmem:[%s306 + $0x20] sm:$0xff] %vm759, %v968
      %995 = vst.msk [vmem:[%s306 + $0x28] sm:$0xff] %vm759, %v971
      %996 = vst.msk [vmem:[%s306 + $0x30] sm:$0xff] %vm759, %v976
      %997 = vst.msk [vmem:[%s306 + $0x38] sm:$0xff] %vm759, %v979
      %998 = vst.msk [vmem:[%s306 + $0x40] sm:$0xff] %vm759, %v984
      %999 = vst.msk [vmem:[%s306 + $0x48] sm:$0xff] %vm759, %v987
      %s1000 = smul.u32 10, %s21
      %p1001 = scmp.lt.s32.totalorder %s20, 1
      %s1002 = scalar_select %p1001, %s20, 1
      %p1003 = scmp.lt.s32.totalorder %s1000, 9
      %s1004 = scalar_select %p1003, %s1000, 9
      %s1005 = smul.addr %s1002, 10
      %s1006 = sadd.s32 %s1004, %s1005
      %s1007 = smul.addr %s1006, 8
      %s1008 = scalar_lea.vmem %s5, %s1007
      // Predicated region
      $region41: #{conv2x_forward.4} parent=39 // pred_check
        %p1009 = pneg %p173
      $region42: #{conv2x_forward.4} parent=39 // pred_check_branch
        %1011 = sbr.rel (%p1009) target = $region44
      $region43: #{conv2x_forward.4} parent=39 // pred_region
        %s1012 = smul.u32 10, %s21
      $region44: #{conv2x_forward.4} parent=39 // pred_fallthru
        _
    $region40: #{conv2x_forward.4} parent=5 // pred_fallthru
      _
    %p1013 = scmp.le.s32.totalorder 2, %s11
    // Predicated region
    $region45: #{conv2x_forward.4} parent=5 // pred_check
      %p1014 = pneg %p1013
    $region46: #{conv2x_forward.4} parent=5 // pred_check_branch
      %1016 = sbr.rel (%p1014) target = $region48
    $region47: #{conv2x_forward.4} parent=5 // pred_region
      %s1017 = ssub.s32 %s11, 2
      // Predicated region
      $region49: #{conv2x_forward.4} parent=47 // pred_check
        %p1018 = pneg %p179
      $region50: #{conv2x_forward.4} parent=47 // pred_check_branch
        %1020 = sbr.rel (%p1018) target = $region52
      $region51: #{conv2x_forward.4} parent=47 // pred_region
        %s1021 = smul.u32 10, %s23
        %p1022 = scmp.lt.s32.totalorder %s22, 1
        %s1023 = scalar_select %p1022, %s22, 1
        %p1024 = scmp.lt.s32.totalorder %s1021, 9
        %s1025 = scalar_select %p1024, %s1021, 9
        %s1026 = smul.addr %s1023, 10
        %s1027 = sadd.s32 %s1025, %s1026
        %s1028 = smul.addr %s1027, 8
        %s1029 = scalar_lea.vmem %s5, %s1028
      $region52: #{conv2x_forward.4} parent=47 // pred_fallthru
        _
    $region48: #{conv2x_forward.4} parent=5 // pred_fallthru
      _
  $region6: #{conv2x_forward.4} parent=0 // loop_footer
    %s15 = sadd.s32 1, %s11
  $region7: #{conv2x_forward.4} parent=0 // loop_footer_branch
    %10 = sbr.rel target = $region3
  $region8: #{conv2x_forward.4} parent=0 // loop_exit
    _

// kernel: conv2x_forward.7
$region0: #{conv2x_forward.7}
  #allocation0 [shape = 'u32[]', space=smem, size = 0x4, offset = 0x4, fixed_abs, tag = 'smem constant byte address 0x4 - core index']
  #allocation1 [shape = 'u32[144,128]{1,0:T(1,128)}', space=vmem, size = 0x12000, scoped, tag = 'internal scratch']
  %s0 = inlined_call_operand.vmem [shape: f32[2,64,32], index: 0, kind: input, shape index: {}]
  %s1 = inlined_call_operand.vmem [shape: f32[1,32], index: 1, kind: input, shape index: {}]
  %s2 = inlined_call_operand.vmem [shape: f32[1,32], index: 2, kind: input, shape index: {}]
  %s3 = inlined_call_operand.hbm [shape: f32[2,64,32], index: 3, kind: output, shape index: {}]
  %s4 = sld [smem:[#allocation0]]
  $region45: #{conv2x_forward.7} parent=0
    _
  %s6 = ssub.s32 1, %s4
  %s7 = scalar_select 0, %s6, %s4
  $region1: #{conv2x_forward.7} parent=0
    #allocation2 [shape = 'u8[65536]{0}', space=vmem, size = 0x10000, scoped, tag = 'output window, operand 0']
    #allocation3 [shape = 's32[2]{0}', space=sflag, size = 0x8, scoped, tag = 'scoped memory for conv2x_forward.7']
    %8 = vsyncpa [#allocation3], 0
    %s9 = scalar_lea.sflag [#allocation3], 1
    %10 = vsyncpa %s9, 0
    loop: start=0, step=1, limit=4
    $region2: #{conv2x_forward.7} parent=1 // loop_pre_header
      _
    $region3: #{conv2x_forward.7} parent=1 // loop_header
      %s12 = sphi 0, %s16
      %p13 = scmp.ge.s32.totalorder %s12, 4
      %s22 = sphi 0, %s24
      %s25 = sphi 0, %s22
      %s26 = sphi 0, %s25
      %s42 = sphi 0, %s26
      %s46 = sphi 0, %s46
      %s48 = sphi 0, %s46
      %s49 = sphi 0, %s48
      %s63 = sphi 0, %s49
      %s67 = sphi 0, %s67
      %s69 = sphi 0, %s67
      %s70 = sphi 0, %s69
      %s84 = sphi 0, %s70
      %s90 = sphi 0, %s92
      %s93 = sphi 0, %s90
      %s94 = sphi 0, %s93
      %s110 = sphi 0, %s94
    $region4: #{conv2x_forward.7} parent=1 // loop_header_branch
      %15 = sbr.rel (%p13) target = $region8
    $region5: #{conv2x_forward.7} parent=1 // loop_body
      %s17 = ssub.s32 %s12, 1
      %s18 = ssub.s32 %s12, 2
      %s19 = sadd.s32 %s12, 1
      %s20 = ssub.s32 %s12, %s19
      %p21 = scmp.eq.s32.totalorder %s20, 0
      %s23 = sadd.s32 %s22, 1
      %s24 = scalar_select %p21, %s22, %s23
      %p27 = pneg %p21
      %p28 = scmp.eq.s32.totalorder %s12, 1
      %p29 = por %p27, %p28
      %p30 = scmp.ne.s32.totalorder %s22, %s25
      %p31 = scmp.eq.s32.totalorder %s12, 0
      %p32 = por %p30, %p31
      %p33 = scmp.ne.s32.totalorder %s22, %s25
      %p34 = scmp.eq.s32.totalorder %s17, 1
      %p35 = por %p33, %p34
      %p36 = scmp.ne.s32.totalorder %s25, %s26
      %p37 = scmp.eq.s32.totalorder %s17, 0
      %p38 = por %p36, %p37
      %p39 = scmp.ne.s32.totalorder %s25, %s26
      %p40 = scmp.eq.s32.totalorder %s18, 1
      %p41 = por %p39, %p40
      %p43 = scmp.ne.s32.totalorder %s26, %s42
      %p44 = scmp.eq.s32.totalorder %s18, 0
      %p45 = por %p43, %p44
      %s47 = sadd.s32 %s46, 1
      %p50 = scmp.eq.s32.totalorder %s12, 1
      %p51 = scmp.ne.s32.totalorder %s46, %s48
      %p52 = scmp.eq.s32.totalorder %s12, 0
      %p53 = por %p51, %p52
      %p54 = scmp.ne.s32.totalorder %s46, %s48
      %p55 = scmp.eq.s32.totalorder %s17, 1
      %p56 = por %p54, %p55
      %p57 = scmp.ne.s32.totalorder %s48, %s49
      %p58 = scmp.eq.s32.totalorder %s17, 0
      %p59 = por %p57, %p58
      %p60 = scmp.ne.s32.totalorder %s48, %s49
      %p61 = scmp.eq.s32.totalorder %s18, 1
      %p62 = por %p60, %p61
      %p64 = scmp.ne.s32.totalorder %s49, %s63
      %p65 = scmp.eq.s32.totalorder %s18, 0
      %p66 = por %p64, %p65
      %s68 = sadd.s32 %s67, 1
      %p71 = scmp.eq.s32.totalorder %s12, 1
      %p72 = scmp.ne.s32.totalorder %s67, %s69
      %p73 = scmp.eq.s32.totalorder %s12, 0
      %p74 = por %p72, %p73
      %p75 = scmp.ne.s32.totalorder %s67, %s69
      %p76 = scmp.eq.s32.totalorder %s17, 1
      %p77 = por %p75, %p76
      %p78 = scmp.ne.s32.totalorder %s69, %s70
      %p79 = scmp.eq.s32.totalorder %s17, 0
      %p80 = por %p78, %p79
      %p81 = scmp.ne.s32.totalorder %s69, %s70
      %p82 = scmp.eq.s32.totalorder %s18, 1
      %p83 = por %p81, %p82
      %p85 = scmp.ne.s32.totalorder %s70, %s84
      %p86 = scmp.eq.s32.totalorder %s18, 0
      %p87 = por %p85, %p86
      %s88 = ssub.s32 %s12, %s19
      %p89 = scmp.eq.s32.totalorder %s88, 0
      %s91 = sadd.s32 %s90, 1
      %s92 = scalar_select %p89, %s90, %s91
      %p95 = pneg %p89
      %p96 = scmp.eq.s32.totalorder %s12, 1
      %p97 = por %p95, %p96
      %p98 = scmp.ne.s32.totalorder %s90, %s93
      %p99 = scmp.eq.s32.totalorder %s12, 0
      %p100 = por %p98, %p99
      %p101 = scmp.ne.s32.totalorder %s90, %s93
      %p102 = scmp.eq.s32.totalorder %s17, 1
      %p103 = por %p101, %p102
      %p104 = scmp.ne.s32.totalorder %s93, %s94
      %p105 = scmp.eq.s32.totalorder %s17, 0
      %p106 = por %p104, %p105
      %p107 = scmp.ne.s32.totalorder %s93, %s94
      %p108 = scmp.eq.s32.totalorder %s18, 1
      %p109 = por %p107, %p108
      %p111 = scmp.ne.s32.totalorder %s94, %s110
      %p112 = scmp.eq.s32.totalorder %s18, 0
      %p113 = por %p111, %p112
      %p114 = scmp.le.s32.totalorder 1, %s12
      %p115 = scmp.lt.s32.totalorder %s12, 3
      %p116 = pnand %p114, %p115
      %p117 = pneg %p116
      // Predicated region
      $region9: #{conv2x_forward.7} parent=5 // pred_check
        _
      $region10: #{conv2x_forward.7} parent=5 // pred_check_branch
        %119 = sbr.rel (%p116) target = $region12
      $region11: #{conv2x_forward.7} parent=5 // pred_region
        %s120 = ssub.s32 %s12, 1
        // Predicated region
        $region13: #{conv2x_forward.7} parent=11 // pred_check
          %p121 = pneg %p59
        $region14: #{conv2x_forward.7} parent=11 // pred_check_branch
          %123 = sbr.rel (%p121) target = $region16
        $region15: #{conv2x_forward.7} parent=11 // pred_region
          _
        $region16: #{conv2x_forward.7} parent=11 // pred_fallthru
          _
        // Predicated region
        $region17: #{conv2x_forward.7} parent=11 // pred_check
          %p124 = pneg %p80
        $region18: #{conv2x_forward.7} parent=11 // pred_check_branch
          %126 = sbr.rel (%p124) target = $region20
        $region19: #{conv2x_forward.7} parent=11 // pred_region
          _
        $region20: #{conv2x_forward.7} parent=11 // pred_fallthru
          _
      $region12: #{conv2x_forward.7} parent=5 // pred_fallthru
        _
      %p127 = scmp.lt.s32.totalorder %s12, 2
      // Predicated region
      $region21: #{conv2x_forward.7} parent=5 // pred_check
        %p128 = pneg %p127
      $region22: #{conv2x_forward.7} parent=5 // pred_check_branch
        %130 = sbr.rel (%p128) target = $region24
      $region23: #{conv2x_forward.7} parent=5 // pred_region
        // Predicated region
        $region25: #{conv2x_forward.7} parent=23 // pred_check
          %p131 = pneg %p32
        $region26: #{conv2x_forward.7} parent=23 // pred_check_branch
          %133 = sbr.rel (%p131) target = $region28
        $region27: #{conv2x_forward.7} parent=23 // pred_region
          %p134 = scmp.lt.s32.totalorder %s12, 1
          %s135 = scalar_select %p134, %s12, 1
          %s136 = smul.addr %s135, 8
          %s137 = smul.addr %s136, 8
          %s138 = scalar_lea.vmem %s0, %s137
        $region28: #{conv2x_forward.7} parent=23 // pred_fallthru
          _
      $region24: #{conv2x_forward.7} parent=5 // pred_fallthru
        _
      %p139 = scmp.le.s32.totalorder 1, %s12
      %p140 = scmp.lt.s32.totalorder %s12, 3
      %p141 = pnand %p139, %p140
      %p142 = pneg %p141
      // Predicated region
      $region29: #{conv2x_forward.7} parent=5 // pred_check
        _
      $region30: #{conv2x_forward.7} parent=5 // pred_check_branch
        %144 = sbr.rel (%p141) target = $region32
      $region31: #{conv2x_forward.7} parent=5 // pred_region
        %s145 = ssub.s32 %s12, 1
        %p146 = scmp.lt.s32.totalorder %s17, 1
        %s147 = scalar_select %p146, %s17, 1
        %s148 = smul.addr %s147, 8
        %s149 = smul.addr %s148, 8
        %s150 = scalar_lea.vmem %s0, %s149
        %p151 = pneg %p38
        %p152 = pneg %p35
        %p153 = pneg %p59
        %p154 = pneg %p56
        %p155 = pneg %p80
        %p156 = pneg %p77
        %p157 = pneg %p106
        %p158 = pneg %p103
        %s159 = sand.u32 %s93, 1
        %s160 = scalar_lea.sflag [#allocation3], %s159
        %s161 = sand.u32 %s93, 1
        %s162 = smul.addr %s161, 64
        %s163 = scalar_lea.vmem [#allocation2], %s162
        %p164 = scmp.lt.s32.totalorder %s17, 1
        %s165 = scalar_select %p164, %s17, 1
        %s166 = smul.addr %s165, 8
        %s167 = smul.addr %s166, 8
        %s168 = scalar_lea.vmem %s0, %s167
        %v169 = vld [vmem:[%s168] sm:$0xff]
        %v170 = vld [vmem:[%s168 + $0x8] sm:$0xff]
        %v171 = vld [vmem:[%s168 + $0x10] sm:$0xff]
        %v172 = vld [vmem:[%s168 + $0x18] sm:$0xff]
        %v173 = vld [vmem:[%s168 + $0x20] sm:$0xff]
        %v174 = vld [vmem:[%s168 + $0x28] sm:$0xff]
        %v175 = vld [vmem:[%s168 + $0x30] sm:$0xff]
        %v176 = vld [vmem:[%s168 + $0x38] sm:$0xff]
        %v177 = vmul.f32 %v169, %v169
        %v178 = vmul.f32 %v170, %v170
        %v179 = vmul.f32 %v171, %v171
        %v180 = vmul.f32 %v172, %v172
        %v181 = vmul.f32 %v173, %v173
        %v182 = vmul.f32 %v174, %v174
        %v183 = vmul.f32 %v175, %v175
        %v184 = vmul.f32 %v176, %v176
        %vm185 = vcmask 261120
        %v186 = vsel %vm185, %v177, 0.0
        %187 = vadd.xlane.f32.xlu0 %v186
        %v188 = vpop.xlane.xlu0 %187
        %v189 = vsel %vm185, %v178, 0.0
        %190 = vadd.xlane.f32.xlu0 %v189
        %v191 = vpop.xlane.xlu0 %190
        %v192 = vsel %vm185, %v179, 0.0
        %193 = vadd.xlane.f32.xlu0 %v192
        %v194 = vpop.xlane.xlu0 %193
        %v195 = vsel %vm185, %v180, 0.0
        %196 = vadd.xlane.f32.xlu0 %v195
        %v197 = vpop.xlane.xlu0 %196
        %v198 = vsel %vm185, %v181, 0.0
        %199 = vadd.xlane.f32.xlu0 %v198
        %v200 = vpop.xlane.xlu0 %199
        %v201 = vsel %vm185, %v182, 0.0
        %202 = vadd.xlane.f32.xlu0 %v201
        %v203 = vpop.xlane.xlu0 %202
        %v204 = vsel %vm185, %v183, 0.0
        %205 = vadd.xlane.f32.xlu0 %v204
        %v206 = vpop.xlane.xlu0 %205
        %v207 = vsel %vm185, %v184, 0.0
        %208 = vadd.xlane.f32.xlu0 %v207
        %v209 = vpop.xlane.xlu0 %208
        %v210 = vmax.f32 %v188, 1e-24
        %v211 = vmax.f32 %v191, 1e-24
        %v212 = vmax.f32 %v194, 1e-24
        %v213 = vmax.f32 %v197, 1e-24
        %v214 = vmax.f32 %v200, 1e-24
        %v215 = vmax.f32 %v203, 1e-24
        %v216 = vmax.f32 %v206, 1e-24
        %v217 = vmax.f32 %v209, 1e-24
        %v218 = vrsqrt.pop %v210
        %v219 = vrsqrt.pop %v211
        %v220 = vrsqrt.pop %v212
        %v221 = vrsqrt.pop %v213
        %v222 = vrsqrt.pop %v214
        %v223 = vrsqrt.pop %v215
        %v224 = vrsqrt.pop %v216
        %v225 = vrsqrt.pop %v217
        %v226 = vmul.f32 %v169, %v218
        %v227 = vmul.f32 %v170, %v219
        %v228 = vmul.f32 %v171, %v220
        %v229 = vmul.f32 %v172, %v221
        %v230 = vmul.f32 %v173, %v222
        %v231 = vmul.f32 %v174, %v223
        %v232 = vmul.f32 %v175, %v224
        %v233 = vmul.f32 %v176, %v225
        %v234 = vsel %vm185, %v226, 0.0
        %v235 = vsel %vm185, %v227, 0.0
        %v236 = vadd.f32 %v234, %v235
        %v237 = vsel %vm185, %v228, 0.0
        %v238 = vadd.f32 %v236, %v237
        %v239 = vsel %vm185, %v229, 0.0
        %v240 = vadd.f32 %v238, %v239
        %v241 = vsel %vm185, %v230, 0.0
        %v242 = vadd.f32 %v240, %v241
        %v243 = vsel %vm185, %v231, 0.0
        %v244 = vadd.f32 %v242, %v243
        %v245 = vsel %vm185, %v232, 0.0
        %v246 = vadd.f32 %v244, %v245
        %v247 = vsel %vm185, %v233, 0.0
        %v248 = vadd.f32 %v246, %v247
        %v249 = vrot.slane %v248, 4
        %v250 = vadd.f32 %v248, %v249
        %v251 = vrot.slane %v250, 2
        %v252 = vadd.f32 %v250, %v251
        %v253 = vrot.slane %v252, 1
        %v254 = vadd.f32 %v252, %v253
        %v255 = vmul.f32 %v254, 0.015625
        %v256 = vmul.f32 %v226, %v226
        %v257 = vmul.f32 %v227, %v227
        %v258 = vmul.f32 %v228, %v228
        %v259 = vmul.f32 %v229, %v229
        %v260 = vmul.f32 %v230, %v230
        %v261 = vmul.f32 %v231, %v231
        %v262 = vmul.f32 %v232, %v232
        %v263 = vmul.f32 %v233, %v233
        %v264 = vsel %vm185, %v256, 0.0
        %v265 = vsel %vm185, %v257, 0.0
        %v266 = vadd.f32 %v264, %v265
        %v267 = vsel %vm185, %v258, 0.0
        %v268 = vadd.f32 %v266, %v267
        %v269 = vsel %vm185, %v259, 0.0
        %v270 = vadd.f32 %v268, %v269
        %v271 = vsel %vm185, %v260, 0.0
        %v272 = vadd.f32 %v270, %v271
        %v273 = vsel %vm185, %v261, 0.0
        %v274 = vadd.f32 %v272, %v273
        %v275 = vsel %vm185, %v262, 0.0
        %v276 = vadd.f32 %v274, %v275
        %v277 = vsel %vm185, %v263, 0.0
        %v278 = vadd.f32 %v276, %v277
        %v279 = vrot.slane %v278, 4
        %v280 = vadd.f32 %v278, %v279
        %v281 = vrot.slane %v280, 2
        %v282 = vadd.f32 %v280, %v281
        %v283 = vrot.slane %v282, 1
        %v284 = vadd.f32 %v282, %v283
        %v285 = vmul.f32 %v284, 0.015625
        %v286 = vmul.f32 %v255, %v255
        %v287 = vsub.f32 %v285, %v286
        %v288 = vmax.f32 %v287, 0.0
        %v289 = vsub.f32 %v226, %v255
        %v290 = vsub.f32 %v227, %v255
        %v291 = vsub.f32 %v228, %v255
        %v292 = vsub.f32 %v229, %v255
        %v293 = vsub.f32 %v230, %v255
        %v294 = vsub.f32 %v231, %v255
        %v295 = vsub.f32 %v232, %v255
        %v296 = vsub.f32 %v233, %v255
        %v297 = vadd.f32 %v288, 1e-05
        %v298 = vrsqrt.pop %v297
        %v299 = vmul.f32 %v289, %v298
        %v300 = vmul.f32 %v290, %v298
        %v301 = vmul.f32 %v291, %v298
        %v302 = vmul.f32 %v292, %v298
        %v303 = vmul.f32 %v293, %v298
        %v304 = vmul.f32 %v294, %v298
        %v305 = vmul.f32 %v295, %v298
        %v306 = vmul.f32 %v296, %v298
        %v307 = vld [vmem:[%s1] sm:$0x1]
        %v309 = vlaneseq
        %v310 = vshrl.u32 %v309, 7
        %v311 = vsub.s32 0, %v310
        %v312 = vrot.slane %v307, %v311
        %v314 = vmul.f32 %v299, %v312
        %v315 = vmul.f32 %v300, %v312
        %v316 = vmul.f32 %v301, %v312
        %v317 = vmul.f32 %v302, %v312
        %v318 = vmul.f32 %v303, %v312
        %v319 = vmul.f32 %v304, %v312
        %v320 = vmul.f32 %v305, %v312
        %v321 = vmul.f32 %v306, %v312
        %v322 = vld [vmem:[%s2] sm:$0x1]
        %v324 = vlaneseq
        %v325 = vshrl.u32 %v324, 7
        %v326 = vsub.s32 0, %v325
        %v327 = vrot.slane %v322, %v326
        %v329 = vadd.f32 %v314, %v327
        %v330 = vadd.f32 %v315, %v327
        %v331 = vadd.f32 %v316, %v327
        %v332 = vadd.f32 %v317, %v327
        %v333 = vadd.f32 %v318, %v327
        %v334 = vadd.f32 %v319, %v327
        %v335 = vadd.f32 %v320, %v327
        %v336 = vadd.f32 %v321, %v327
        %v337 = vmax.f32 %v329, 0.0
        %v338 = vmax.f32 %v330, 0.0
        %v339 = vmax.f32 %v331, 0.0
        %v340 = vmax.f32 %v332, 0.0
        %v341 = vmax.f32 %v333, 0.0
        %v342 = vmax.f32 %v334, 0.0
        %v343 = vmax.f32 %v335, 0.0
        %v344 = vmax.f32 %v336, 0.0
        %345 = vst.msk [vmem:[%s163] sm:$0xff] %vm185, %v337
        %346 = vst.msk [vmem:[%s163 + $0x8] sm:$0xff] %vm185, %v338
        %347 = vst.msk [vmem:[%s163 + $0x10] sm:$0xff] %vm185, %v339
        %348 = vst.msk [vmem:[%s163 + $0x18] sm:$0xff] %vm185, %v340
        %349 = vst.msk [vmem:[%s163 + $0x20] sm:$0xff] %vm185, %v341
        %350 = vst.msk [vmem:[%s163 + $0x28] sm:$0xff] %vm185, %v342
        %351 = vst.msk [vmem:[%s163 + $0x30] sm:$0xff] %vm185, %v343
        %352 = vst.msk [vmem:[%s163 + $0x38] sm:$0xff] %vm185, %v344
        %s353 = sand.u32 %s93, 1
        %s354 = scalar_lea.sflag [#allocation3], %s353
        %s355 = sand.u32 %s93, 1
        %s356 = smul.addr %s355, 64
        %s357 = scalar_lea.vmem [#allocation2], %s356
        // Predicated region
        $region33: #{conv2x_forward.7} parent=31 // pred_check
          %p358 = pneg %p103
        $region34: #{conv2x_forward.7} parent=31 // pred_check_branch
          %360 = sbr.rel (%p358) target = $region36
        $region35: #{conv2x_forward.7} parent=31 // pred_region
          %s362 = ssub.s32 1024, 1024
          %363 = vsyncadd %s354, %s362
          %s364 = smul.addr %s17, 8
          %s365 = smul.addr %s364, 128
          %s366 = scalar_lea.hbm %s3, %s365
          %s367 = sshll.u32 %s357, 4
          %s368 = int_to_ptr.vmem [resolvable:$true] %s367
          %373 = dma.vmem_to_hbm [thread:$0]  %s368, 1024, %s366, %s354, 128, 128, 8
        $region36: #{conv2x_forward.7} parent=31 // pred_fallthru
          _
      $region32: #{conv2x_forward.7} parent=5 // pred_fallthru
        _
      %p374 = scmp.le.s32.totalorder 2, %s12
      // Predicated region
      $region37: #{conv2x_forward.7} parent=5 // pred_check
        %p375 = pneg %p374
      $region38: #{conv2x_forward.7} parent=5 // pred_check_branch
        %377 = sbr.rel (%p375) target = $region40
      $region39: #{conv2x_forward.7} parent=5 // pred_region
        %s378 = ssub.s32 %s12, 2
        // Predicated region
        $region41: #{conv2x_forward.7} parent=39 // pred_check
          %p379 = pneg %p109
        $region42: #{conv2x_forward.7} parent=39 // pred_check_branch
          %381 = sbr.rel (%p379) target = $region44
        $region43: #{conv2x_forward.7} parent=39 // pred_region
          %s382 = sand.u32 %s94, 1
          %s383 = scalar_lea.sflag [#allocation3], %s382
          %s384 = sand.u32 %s94, 1
          %s385 = smul.addr %s384, 64
          %s386 = scalar_lea.vmem [#allocation2], %s385
          %387 = dma.done %s383, 1024
        $region44: #{conv2x_forward.7} parent=39 // pred_fallthru
          _
      $region40: #{conv2x_forward.7} parent=5 // pred_fallthru
        _
    $region6: #{conv2x_forward.7} parent=1 // loop_footer
      %s16 = sadd.s32 1, %s12
    $region7: #{conv2x_forward.7} parent=1 // loop_footer_branch
      %11 = sbr.rel target = $region3
    $region8: #{conv2x_forward.7} parent=1 // loop_exit
      _
    %388 = vsyncpa [#allocation3], 1
    %s389 = scalar_lea.sflag [#allocation3], 1
    %390 = vsyncpa %s389, 1

// kernel: conv2x_forward.6
$region0: #{conv2x_forward.6}
  #allocation0 [shape = 'u32[]', space=smem, size = 0x4, offset = 0x4, fixed_abs, tag = 'smem constant byte address 0x4 - core index']
  #allocation1 [shape = 'u32[144,128]{1,0:T(1,128)}', space=vmem, size = 0x12000, scoped, tag = 'internal scratch']
  %s0 = inlined_call_operand.vmem [shape: bf16[2,104,32], index: 0, kind: input, shape index: {}]
  %s1 = inlined_call_operand.vmem [shape: bf16[2,104,32], index: 1, kind: input, shape index: {}]
  %s2 = inlined_call_operand.vmem [shape: bf16[576,32], index: 2, kind: input, shape index: {}]
  %s3 = inlined_call_operand.vmem [shape: f32[2,80,32], index: 3, kind: output, shape index: {}]
  %s4 = sld [smem:[#allocation0]]
  $region45: #{conv2x_forward.6} parent=0
    _
  %s6 = ssub.s32 1, %s4
  %s7 = scalar_select 0, %s6, %s4
  loop: start=0, step=1, limit=4
  $region2: #{conv2x_forward.6} parent=0 // loop_pre_header
    _
  $region3: #{conv2x_forward.6} parent=0 // loop_header
    %s9 = sphi 0, %s13
    %p10 = scmp.ge.s32.totalorder %s9, 4
    %s16 = sphi 0, %s28
    %s17 = sphi 0, %s24
    %s18 = sphi 0, %s16
    %s19 = sphi 0, %s17
    %s20 = sphi 0, %s18
    %s21 = sphi 0, %s19
    %s31 = sphi 0, %s33
    %s34 = sphi 0, %s31
    %s35 = sphi 0, %s34
    %s51 = sphi 0, %s35
    %s57 = sphi 0, %s59
    %s60 = sphi 0, %s57
    %s61 = sphi 0, %s60
    %s77 = sphi 0, %s61
    %s81 = sphi 0, %s81
    %s83 = sphi 0, %s81
    %s84 = sphi 0, %s83
    %s98 = sphi 0, %s84
    %s106 = sphi 0, %s108
    %s109 = sphi 0, %s106
    %s110 = sphi 0, %s109
    %s126 = sphi 0, %s110
  $region4: #{conv2x_forward.6} parent=0 // loop_header_branch
    %12 = sbr.rel (%p10) target = $region8
  $region5: #{conv2x_forward.6} parent=0 // loop_body
    %s14 = ssub.s32 %s9, 1
    %s15 = ssub.s32 %s9, 2
    %s22 = sadd.s32 1, %s17
    %p23 = scmp.ge.s32.totalorder %s22, 1
    %s24 = scalar_select %p23, 0, %s22
    %s25 = sadd.s32 1, %s16
    %s26 = scalar_select %p23, %s25, %s16
    %p27 = scmp.ge.s32.totalorder %s26, 2
    %s28 = scalar_select %p27, 0, %s26
    %s29 = ssub.s32 %s16, %s28
    %p30 = scmp.eq.s32.totalorder %s29, 0
    %s32 = sadd.s32 %s31, 1
    %s33 = scalar_select %p30, %s31, %s32
    %p36 = pneg %p30
    %p37 = scmp.eq.s32.totalorder %s9, 1
    %p38 = por %p36, %p37
    %p39 = scmp.ne.s32.totalorder %s31, %s34
    %p40 = scmp.eq.s32.totalorder %s9, 0
    %p41 = por %p39, %p40
    %p42 = scmp.ne.s32.totalorder %s31, %s34
    %p43 = scmp.eq.s32.totalorder %s14, 1
    %p44 = por %p42, %p43
    %p45 = scmp.ne.s32.totalorder %s34, %s35
    %p46 = scmp.eq.s32.totalorder %s14, 0
    %p47 = por %p45, %p46
    %p48 = scmp.ne.s32.totalorder %s34, %s35
    %p49 = scmp.eq.s32.totalorder %s15, 1
    %p50 = por %p48, %p49
    %p52 = scmp.ne.s32.totalorder %s35, %s51
    %p53 = scmp.eq.s32.totalorder %s15, 0
    %p54 = por %p52, %p53
    %s55 = ssub.s32 %s16, %s28
    %p56 = scmp.eq.s32.totalorder %s55, 0
    %s58 = sadd.s32 %s57, 1
    %s59 = scalar_select %p56, %s57, %s58
    %p62 = pneg %p56
    %p63 = scmp.eq.s32.totalorder %s9, 1
    %p64 = por %p62, %p63
    %p65 = scmp.ne.s32.totalorder %s57, %s60
    %p66 = scmp.eq.s32.totalorder %s9, 0
    %p67 = por %p65, %p66
    %p68 = scmp.ne.s32.totalorder %s57, %s60
    %p69 = scmp.eq.s32.totalorder %s14, 1
    %p70 = por %p68, %p69
    %p71 = scmp.ne.s32.totalorder %s60, %s61
    %p72 = scmp.eq.s32.totalorder %s14, 0
    %p73 = por %p71, %p72
    %p74 = scmp.ne.s32.totalorder %s60, %s61
    %p75 = scmp.eq.s32.totalorder %s15, 1
    %p76 = por %p74, %p75
    %p78 = scmp.ne.s32.totalorder %s61, %s77
    %p79 = scmp.eq.s32.totalorder %s15, 0
    %p80 = por %p78, %p79
    %s82 = sadd.s32 %s81, 1
    %p85 = scmp.eq.s32.totalorder %s9, 1
    %p86 = scmp.ne.s32.totalorder %s81, %s83
    %p87 = scmp.eq.s32.totalorder %s9, 0
    %p88 = por %p86, %p87
    %p89 = scmp.ne.s32.totalorder %s81, %s83
    %p90 = scmp.eq.s32.totalorder %s14, 1
    %p91 = por %p89, %p90
    %p92 = scmp.ne.s32.totalorder %s83, %s84
    %p93 = scmp.eq.s32.totalorder %s14, 0
    %p94 = por %p92, %p93
    %p95 = scmp.ne.s32.totalorder %s83, %s84
    %p96 = scmp.eq.s32.totalorder %s15, 1
    %p97 = por %p95, %p96
    %p99 = scmp.ne.s32.totalorder %s84, %s98
    %p100 = scmp.eq.s32.totalorder %s15, 0
    %p101 = por %p99, %p100
    %s102 = ssub.s32 %s16, %s28
    %s103 = ssub.s32 %s17, %s24
    %s104 = sor.u32 %s102, %s103
    %p105 = scmp.eq.s32.totalorder %s104, 0
    %s107 = sadd.s32 %s106, 1
    %s108 = scalar_select %p105, %s106, %s107
    %p111 = pneg %p105
    %p112 = scmp.eq.s32.totalorder %s9, 1
    %p113 = por %p111, %p112
    %p114 = scmp.ne.s32.totalorder %s106, %s109
    %p115 = scmp.eq.s32.totalorder %s9, 0
    %p116 = por %p114, %p115
    %p117 = scmp.ne.s32.totalorder %s106, %s109
    %p118 = scmp.eq.s32.totalorder %s14, 1
    %p119 = por %p117, %p118
    %p120 = scmp.ne.s32.totalorder %s109, %s110
    %p121 = scmp.eq.s32.totalorder %s14, 0
    %p122 = por %p120, %p121
    %p123 = scmp.ne.s32.totalorder %s109, %s110
    %p124 = scmp.eq.s32.totalorder %s15, 1
    %p125 = por %p123, %p124
    %p127 = scmp.ne.s32.totalorder %s110, %s126
    %p128 = scmp.eq.s32.totalorder %s15, 0
    %p129 = por %p127, %p128
    %p130 = scmp.le.s32.totalorder 1, %s9
    %p131 = scmp.lt.s32.totalorder %s9, 3
    %p132 = pnand %p130, %p131
    %p133 = pneg %p132
    // Predicated region
    $region9: #{conv2x_forward.6} parent=5 // pred_check
      _
    $region10: #{conv2x_forward.6} parent=5 // pred_check_branch
      %135 = sbr.rel (%p132) target = $region12
    $region11: #{conv2x_forward.6} parent=5 // pred_region
      %s136 = ssub.s32 %s9, 1
      // Predicated region
      $region13: #{conv2x_forward.6} parent=11 // pred_check
        %p137 = pneg %p94
      $region14: #{conv2x_forward.6} parent=11 // pred_check_branch
        %139 = sbr.rel (%p137) target = $region16
      $region15: #{conv2x_forward.6} parent=11 // pred_region
        _
      $region16: #{conv2x_forward.6} parent=11 // pred_fallthru
        _
    $region12: #{conv2x_forward.6} parent=5 // pred_fallthru
      _
    %p140 = scmp.lt.s32.totalorder %s9, 2
    // Predicated region
    $region17: #{conv2x_forward.6} parent=5 // pred_check
      %p141 = pneg %p140
    $region18: #{conv2x_forward.6} parent=5 // pred_check_branch
      %143 = sbr.rel (%p141) target = $region20
    $region19: #{conv2x_forward.6} parent=5 // pred_region
      // Predicated region
      $region21: #{conv2x_forward.6} parent=19 // pred_check
        %p144 = pneg %p41
      $region22: #{conv2x_forward.6} parent=19 // pred_check_branch
        %146 = sbr.rel (%p144) target = $region24
      $region23: #{conv2x_forward.6} parent=19 // pred_region
        %p147 = scmp.lt.s32.totalorder %s16, 1
        %s148 = scalar_select %p147, %s16, 1
        %s149 = smul.addr %s148, 13
        %s150 = smul.addr %s149, 4
        %s151 = scalar_lea.vmem %s0, %s150
      $region24: #{conv2x_forward.6} parent=19 // pred_fallthru
        _
      // Predicated region
      $region25: #{conv2x_forward.6} parent=19 // pred_check
        %p152 = pneg %p67
      $region26: #{conv2x_forward.6} parent=19 // pred_check_branch
        %154 = sbr.rel (%p152) target = $region28
      $region27: #{conv2x_forward.6} parent=19 // pred_region
        %p155 = scmp.lt.s32.totalorder %s16, 1
        %s156 = scalar_select %p155, %s16, 1
        %s157 = smul.addr %s156, 13
        %s158 = smul.addr %s157, 4
        %s159 = scalar_lea.vmem %s1, %s158
      $region28: #{conv2x_forward.6} parent=19 // pred_fallthru
        _
    $region20: #{conv2x_forward.6} parent=5 // pred_fallthru
      _
    %p160 = scmp.le.s32.totalorder 1, %s9
    %p161 = scmp.lt.s32.totalorder %s9, 3
    %p162 = pnand %p160, %p161
    %p163 = pneg %p162
    // Predicated region
    $region29: #{conv2x_forward.6} parent=5 // pred_check
      _
    $region30: #{conv2x_forward.6} parent=5 // pred_check_branch
      %165 = sbr.rel (%p162) target = $region32
    $region31: #{conv2x_forward.6} parent=5 // pred_region
      %s166 = ssub.s32 %s9, 1
      %p167 = scmp.lt.s32.totalorder %s18, 1
      %s168 = scalar_select %p167, %s18, 1
      %s169 = smul.addr %s168, 13
      %s170 = smul.addr %s169, 4
      %s171 = scalar_lea.vmem %s0, %s170
      %p172 = pneg %p47
      %p173 = pneg %p44
      %p174 = scmp.lt.s32.totalorder %s18, 1
      %s175 = scalar_select %p174, %s18, 1
      %s176 = smul.addr %s175, 13
      %s177 = smul.addr %s176, 4
      %s178 = scalar_lea.vmem %s1, %s177
      %p179 = pneg %p73
      %p180 = pneg %p70
      %p181 = pneg %p94
      %p182 = pneg %p91
      %p183 = pneg %p122
      %p184 = pneg %p119
      %s185 = smul.u32 10, %s19
      %p186 = scmp.lt.s32.totalorder %s18, 1
      %s187 = scalar_select %p186, %s18, 1
      %p188 = scmp.lt.s32.totalorder %s185, 9
      %s189 = scalar_select %p188, %s185, 9
      %s190 = smul.addr %s187, 10
      %s191 = sadd.s32 %s189, %s190
      %s192 = smul.addr %s191, 8
      %s193 = scalar_lea.vmem %s3, %s192
      %p194 = scmp.lt.s32.totalorder %s18, 1
      %s195 = scalar_select %p194, %s18, 1
      %s196 = smul.addr %s195, 13
      %s197 = smul.addr %s196, 4
      %s198 = scalar_lea.vmem %s0, %s197
      %p199 = scmp.lt.s32.totalorder %s18, 1
      %s200 = scalar_select %p199, %s18, 1
      %s201 = smul.addr %s200, 13
      %s202 = smul.addr %s201, 4
      %s203 = scalar_lea.vmem %s1, %s202
      %s204 = smul.u32 10, %s19
      %p205 = scmp.lt.s32.totalorder %s18, 1
      %s206 = scalar_select %p205, %s18, 1
      %p207 = scmp.lt.s32.totalorder %s204, 9
      %s208 = scalar_select %p207, %s204, 9
      %s209 = smul.addr %s206, 10
      %s210 = sadd.s32 %s208, %s209
      %s211 = smul.addr %s210, 8
      %s212 = scalar_lea.vmem %s3, %s211
      %s213 = smul.u32 10, %s19
      %s215 = smul.u32 %s19, 80
      %s216 = sshra.s32 %s215, 3
      %s217 = sand.u32 %s215, 7
      %s218 = smul.addr %s216, 4
      %s219 = scalar_lea.vmem %s198, %s218
      %v220 = vld [vmem:[%s219] sm:$0xf]
      %v221 = vld [vmem:[%s219 + $0x4] sm:$0xf]
      %v222 = vld [vmem:[%s219 + $0x8] sm:$0xf]
      %v223 = vld [vmem:[%s219 + $0xc] sm:$0xf]
      %v224 = vld [vmem:[%s219 + $0x10] sm:$0xf]
      %v225 = vld [vmem:[%s219 + $0x14] sm:$0xf]
      %v226 = vld [vmem:[%s219 + $0x18] sm:$0xf]
      %v227 = vld [vmem:[%s219 + $0x1c] sm:$0xf]
      %v228 = vld [vmem:[%s219 + $0x20] sm:$0xf]
      %v229 = vld [vmem:[%s219 + $0x24] sm:$0xf]
      %v230 = vld [vmem:[%s219 + $0x28] sm:$0xf]
      %v231 = vld [vmem:[%s219 + $0x2c] sm:$0xf]
      %v232 = vld [vmem:[%s219 + $0x30] sm:$0xf]
      %s233 = smul.addr %s216, 4
      %s234 = scalar_lea.vmem %s203, %s233
      %v235 = vld [vmem:[%s234] sm:$0xf]
      %v236 = vld [vmem:[%s234 + $0x4] sm:$0xf]
      %v237 = vld [vmem:[%s234 + $0x8] sm:$0xf]
      %v238 = vld [vmem:[%s234 + $0xc] sm:$0xf]
      %v239 = vld [vmem:[%s234 + $0x10] sm:$0xf]
      %v240 = vld [vmem:[%s234 + $0x14] sm:$0xf]
      %v241 = vld [vmem:[%s234 + $0x18] sm:$0xf]
      %v242 = vld [vmem:[%s234 + $0x1c] sm:$0xf]
      %v243 = vld [vmem:[%s234 + $0x20] sm:$0xf]
      %v244 = vld [vmem:[%s234 + $0x24] sm:$0xf]
      %v245 = vld [vmem:[%s234 + $0x28] sm:$0xf]
      %v246 = vld [vmem:[%s234 + $0x2c] sm:$0xf]
      %v247 = vld [vmem:[%s234 + $0x30] sm:$0xf]
      %v258 = vunpack.c.l.b16 %v220
      %v259 = vunpack.c.l.b16 %v221
      %v260 = vunpack.c.l.b16 %v222
      %v261 = vunpack.c.l.b16 %v223
      %v262 = vunpack.c.l.b16 %v224
      %v263 = vunpack.c.l.b16 %v225
      %v264 = vunpack.c.l.b16 %v226
      %v265 = vunpack.c.l.b16 %v227
      %v266 = vunpack.c.l.b16 %v228
      %v267 = vunpack.c.l.b16 %v229
      %v268 = vpack.c.b16 %v259, %v258
      %v269 = vpack.c.b16 %v261, %v260
      %v270 = vpack.c.b16 %v263, %v262
      %v271 = vpack.c.b16 %v265, %v264
      %v272 = vpack.c.b16 %v267, %v266
      %v274 = vunpack.c.l.b16 %v230
      %v275 = vpack.c.b16 %v274, %v274
      %vm276 = vsmask.f32 7424
      %v278 = vshrl.u32 %v268, 16
      %v280 = vshll.u32 %v268, 16
      %v282 = vrot.slane %v280, 1
      %v283 = vor.u32 %v278, %v282
      %v285 = vshll.u32 %v269, 16
      %v287 = vrot.slane %v285, 1
      %v288 = vsel %vm276, %v283, %v287
      %v289 = vshrl.u32 %v269, 16
      %v291 = vor.u32 %v289, %v287
      %v293 = vshll.u32 %v270, 16
      %v295 = vrot.slane %v293, 1
      %v296 = vsel %vm276, %v291, %v295
      %v297 = vshrl.u32 %v270, 16
      %v299 = vor.u32 %v297, %v295
      %v301 = vshll.u32 %v271, 16
      %v303 = vrot.slane %v301, 1
      %v304 = vsel %vm276, %v299, %v303
      %v305 = vshrl.u32 %v271, 16
      %v307 = vor.u32 %v305, %v303
      %v309 = vshll.u32 %v272, 16
      %v311 = vrot.slane %v309, 1
      %v312 = vsel %vm276, %v307, %v311
      %v313 = vshrl.u32 %v272, 16
      %v315 = vor.u32 %v313, %v311
      %v317 = vshll.u32 %v275, 16
      %v319 = vrot.slane %v317, 1
      %v320 = vsel %vm276, %v315, %v319
      %321 = vrot.lane.b32.xlu0 %v288, 32
      %v322 = vpop.permute.xlu0 %321
      %323 = vrot.lane.b32.xlu0 %v296, 32
      %v324 = vpop.permute.xlu0 %323
      %325 = vrot.lane.b32.xlu0 %v304, 32
      %v326 = vpop.permute.xlu0 %325
      %327 = vrot.lane.b32.xlu0 %v312, 32
      %v328 = vpop.permute.xlu0 %327
      %329 = vrot.lane.b32.xlu0 %v320, 32
      %v330 = vpop.permute.xlu0 %329
      %vm331 = vcmask 1046528
      %v332 = vrot.slane %v268, 1
      %v333 = vrot.slane %v269, 1
      %v334 = vsel %vm331, %v332, %v333
      %v335 = vrot.slane %v270, 1
      %v336 = vsel %vm331, %v333, %v335
      %v337 = vrot.slane %v271, 1
      %v338 = vsel %vm331, %v335, %v337
      %v339 = vrot.slane %v272, 1
      %v340 = vsel %vm331, %v337, %v339
      %v341 = vrot.slane %v275, 1
      %v342 = vsel %vm331, %v339, %v341
      %343 = vrot.lane.b32.xlu0 %v334, 64
      %v344 = vpop.permute.xlu0 %343
      %345 = vrot.lane.b32.xlu0 %v336, 64
      %v346 = vpop.permute.xlu0 %345
      %347 = vrot.lane.b32.xlu0 %v338, 64
      %v348 = vpop.permute.xlu0 %347
      %349 = vrot.lane.b32.xlu0 %v340, 64
      %v350 = vpop.permute.xlu0 %349
      %351 = vrot.lane.b32.xlu0 %v342, 64
      %v352 = vpop.permute.xlu0 %351
      %v354 = vunpack.c.l.b16 %v231
      %v355 = vpack.c.b16 %v260, %v259
      %v356 = vpack.c.b16 %v262, %v261
      %v357 = vpack.c.b16 %v264, %v263
      %v358 = vpack.c.b16 %v266, %v265
      %v359 = vpack.c.b16 %v274, %v267
      %v360 = vpack.c.b16 %v354, %v354
      %v361 = vrot.slane %v355, 1
      %v362 = vrot.slane %v356, 1
      %v363 = vsel %vm331, %v361, %v362
      %v364 = vrot.slane %v357, 1
      %v365 = vsel %vm331, %v362, %v364
      %v366 = vrot.slane %v358, 1
      %v367 = vsel %vm331, %v364, %v366
      %v368 = vrot.slane %v359, 1
      %v369 = vsel %vm331, %v366, %v368
      %v370 = vrot.slane %v360, 1
      %v371 = vsel %vm331, %v368, %v370
      %372 = vrot.lane.b32.xlu0 %v363, 96
      %v373 = vpop.permute.xlu0 %372
      %374 = vrot.lane.b32.xlu0 %v365, 96
      %v375 = vpop.permute.xlu0 %374
      %376 = vrot.lane.b32.xlu0 %v367, 96
      %v377 = vpop.permute.xlu0 %376
      %378 = vrot.lane.b32.xlu0 %v369, 96
      %v379 = vpop.permute.xlu0 %378
      %380 = vrot.lane.b32.xlu0 %v371, 96
      %v381 = vpop.permute.xlu0 %380
      %vm382 = vsmask.f32 6400
      %v384 = vshrl.u32 %v355, 16
      %v386 = vrot.slane %v384, 1
      %v387 = vshll.u32 %v355, 16
      %v389 = vrot.slane %v387, 2
      %v390 = vor.u32 %v386, %v389
      %v392 = vshrl.u32 %v356, 16
      %v394 = vrot.slane %v392, 1
      %v395 = vshll.u32 %v356, 16
      %v397 = vrot.slane %v395, 2
      %v398 = vor.u32 %v394, %v397
      %v399 = vsel %vm382, %v390, %v398
      %v401 = vshrl.u32 %v357, 16
      %v403 = vrot.slane %v401, 1
      %v404 = vshll.u32 %v357, 16
      %v406 = vrot.slane %v404, 2
      %v407 = vor.u32 %v403, %v406
      %v408 = vsel %vm382, %v398, %v407
      %v410 = vshrl.u32 %v358, 16
      %v412 = vrot.slane %v410, 1
      %v413 = vshll.u32 %v358, 16
      %v415 = vrot.slane %v413, 2
      %v416 = vor.u32 %v412, %v415
      %v417 = vsel %vm382, %v407, %v416
      %v419 = vshrl.u32 %v359, 16
      %v421 = vrot.slane %v419, 1
      %v422 = vshll.u32 %v359, 16
      %v424 = vrot.slane %v422, 2
      %v425 = vor.u32 %v421, %v424
      %v426 = vsel %vm382, %v416, %v425
      %v428 = vshrl.u32 %v360, 16
      %v430 = vrot.slane %v428, 1
      %v431 = vshll.u32 %v360, 16
      %v433 = vrot.slane %v431, 2
      %v434 = vor.u32 %v430, %v433
      %v435 = vsel %vm382, %v425, %v434
      %vm436 = vcmask 1045504
      %v437 = vrot.slane %v355, 2
      %v438 = vrot.slane %v356, 2
      %v439 = vsel %vm436, %v437, %v438
      %v440 = vrot.slane %v357, 2
      %v441 = vsel %vm436, %v438, %v440
      %v442 = vrot.slane %v358, 2
      %v443 = vsel %vm436, %v440, %v442
      %v444 = vrot.slane %v359, 2
      %v445 = vsel %vm436, %v442, %v444
      %v446 = vrot.slane %v360, 2
      %v447 = vsel %vm436, %v444, %v446
      %448 = vrot.lane.b32.xlu0 %v439, 32
      %v449 = vpop.permute.xlu0 %448
      %450 = vrot.lane.b32.xlu0 %v441, 32
      %v451 = vpop.permute.xlu0 %450
      %452 = vrot.lane.b32.xlu0 %v443, 32
      %v453 = vpop.permute.xlu0 %452
      %454 = vrot.lane.b32.xlu0 %v445, 32
      %v455 = vpop.permute.xlu0 %454
      %456 = vrot.lane.b32.xlu0 %v447, 32
      %v457 = vpop.permute.xlu0 %456
      %v459 = vunpack.c.l.b16 %v232
      %v460 = vpack.c.b16 %v354, %v274
      %v461 = vpack.c.b16 %v459, %v459
      %v462 = vrot.slane %v269, 2
      %v463 = vrot.slane %v270, 2
      %v464 = vsel %vm436, %v462, %v463
      %v465 = vrot.slane %v271, 2
      %v466 = vsel %vm436, %v463, %v465
      %v467 = vrot.slane %v272, 2
      %v468 = vsel %vm436, %v465, %v467
      %v469 = vrot.slane %v460, 2
      %v470 = vsel %vm436, %v467, %v469
      %v471 = vrot.slane %v461, 2
      %v472 = vsel %vm436, %v469, %v471
      %473 = vrot.lane.b32.xlu0 %v464, 64
      %v474 = vpop.permute.xlu0 %473
      %475 = vrot.lane.b32.xlu0 %v466, 64
      %v476 = vpop.permute.xlu0 %475
      %477 = vrot.lane.b32.xlu0 %v468, 64
      %v478 = vpop.permute.xlu0 %477
      %479 = vrot.lane.b32.xlu0 %v470, 64
      %v480 = vpop.permute.xlu0 %479
      %481 = vrot.lane.b32.xlu0 %v472, 64
      %v482 = vpop.permute.xlu0 %481
      %vm483 = vsmask.f32 5376
      %v484 = vrot.slane %v289, 2
      %v485 = vrot.slane %v285, 3
      %v486 = vor.u32 %v484, %v485
      %v487 = vrot.slane %v297, 2
      %v488 = vrot.slane %v293, 3
      %v489 = vor.u32 %v487, %v488
      %v490 = vsel %vm483, %v486, %v489
      %v491 = vrot.slane %v305, 2
      %v492 = vrot.slane %v301, 3
      %v493 = vor.u32 %v491, %v492
      %v494 = vsel %vm483, %v489, %v493
      %v495 = vrot.slane %v313, 2
      %v496 = vrot.slane %v309, 3
      %v497 = vor.u32 %v495, %v496
      %v498 = vsel %vm483, %v493, %v497
      %v500 = vshrl.u32 %v460, 16
      %v502 = vrot.slane %v500, 2
      %v503 = vshll.u32 %v460, 16
      %v505 = vrot.slane %v503, 3
      %v506 = vor.u32 %v502, %v505
      %v507 = vsel %vm483, %v497, %v506
      %v509 = vshrl.u32 %v461, 16
      %v511 = vrot.slane %v509, 2
      %v512 = vshll.u32 %v461, 16
      %v514 = vrot.slane %v512, 3
      %v515 = vor.u32 %v511, %v514
      %v516 = vsel %vm483, %v506, %v515
      %517 = vrot.lane.b32.xlu0 %v490, 96
      %v518 = vpop.permute.xlu0 %517
      %519 = vrot.lane.b32.xlu0 %v494, 96
      %v520 = vpop.permute.xlu0 %519
      %521 = vrot.lane.b32.xlu0 %v498, 96
      %v522 = vpop.permute.xlu0 %521
      %523 = vrot.lane.b32.xlu0 %v507, 96
      %v524 = vpop.permute.xlu0 %523
      %525 = vrot.lane.b32.xlu0 %v516, 96
      %v526 = vpop.permute.xlu0 %525
      %vm527 = vcmask 1044480
      %v528 = vrot.slane %v269, 3
      %v529 = vrot.slane %v270, 3
      %v530 = vsel %vm527, %v528, %v529
      %v531 = vrot.slane %v271, 3
      %v532 = vsel %vm527, %v529, %v531
      %v533 = vrot.slane %v272, 3
      %v534 = vsel %vm527, %v531, %v533
      %v535 = vrot.slane %v460, 3
      %v536 = vsel %vm527, %v533, %v535
      %v537 = vrot.slane %v461, 3
      %v538 = vsel %vm527, %v535, %v537
      %v549 = vunpack.c.l.b16 %v235
      %v550 = vunpack.c.l.b16 %v236
      %v551 = vunpack.c.l.b16 %v237
      %v552 = vunpack.c.l.b16 %v238
      %v553 = vunpack.c.l.b16 %v239
      %v554 = vunpack.c.l.b16 %v240
      %v555 = vunpack.c.l.b16 %v241
      %v556 = vunpack.c.l.b16 %v242
      %v557 = vunpack.c.l.b16 %v243
      %v558 = vunpack.c.l.b16 %v244
      %v559 = vpack.c.b16 %v550, %v549
      %v560 = vpack.c.b16 %v552, %v551
      %v561 = vpack.c.b16 %v554, %v553
      %v562 = vpack.c.b16 %v556, %v555
      %v563 = vpack.c.b16 %v558, %v557
      %564 = vrot.lane.b32.xlu0 %v559, 32
      %v565 = vpop.permute.xlu0 %564
      %566 = vrot.lane.b32.xlu0 %v560, 32
      %v567 = vpop.permute.xlu0 %566
      %568 = vrot.lane.b32.xlu0 %v561, 32
      %v569 = vpop.permute.xlu0 %568
      %570 = vrot.lane.b32.xlu0 %v562, 32
      %v571 = vpop.permute.xlu0 %570
      %572 = vrot.lane.b32.xlu0 %v563, 32
      %v573 = vpop.permute.xlu0 %572
      %v575 = vunpack.c.l.b16 %v245
      %v576 = vpack.c.b16 %v575, %v575
      %v578 = vshrl.u32 %v559, 16
      %v580 = vshll.u32 %v559, 16
      %v582 = vrot.slane %v580, 1
      %v583 = vor.u32 %v578, %v582
      %v585 = vshll.u32 %v560, 16
      %v587 = vrot.slane %v585, 1
      %v588 = vsel %vm276, %v583, %v587
      %v589 = vshrl.u32 %v560, 16
      %v591 = vor.u32 %v589, %v587
      %v593 = vshll.u32 %v561, 16
      %v595 = vrot.slane %v593, 1
      %v596 = vsel %vm276, %v591, %v595
      %v597 = vshrl.u32 %v561, 16
      %v599 = vor.u32 %v597, %v595
      %v601 = vshll.u32 %v562, 16
      %v603 = vrot.slane %v601, 1
      %v604 = vsel %vm276, %v599, %v603
      %v605 = vshrl.u32 %v562, 16
      %v607 = vor.u32 %v605, %v603
      %v609 = vshll.u32 %v563, 16
      %v611 = vrot.slane %v609, 1
      %v612 = vsel %vm276, %v607, %v611
      %v613 = vshrl.u32 %v563, 16
      %v615 = vor.u32 %v613, %v611
      %v617 = vshll.u32 %v576, 16
      %v619 = vrot.slane %v617, 1
      %v620 = vsel %vm276, %v615, %v619
      %621 = vrot.lane.b32.xlu0 %v588, 64
      %v622 = vpop.permute.xlu0 %621
      %623 = vrot.lane.b32.xlu0 %v596, 64
      %v624 = vpop.permute.xlu0 %623
      %625 = vrot.lane.b32.xlu0 %v604, 64
      %v626 = vpop.permute.xlu0 %625
      %627 = vrot.lane.b32.xlu0 %v612, 64
      %v628 = vpop.permute.xlu0 %627
      %629 = vrot.lane.b32.xlu0 %v620, 64
      %v630 = vpop.permute.xlu0 %629
      %v631 = vrot.slane %v559, 1
      %v632 = vrot.slane %v560, 1
      %v633 = vsel %vm331, %v631, %v632
      %v634 = vrot.slane %v561, 1
      %v635 = vsel %vm331, %v632, %v634
      %v636 = vrot.slane %v562, 1
      %v637 = vsel %vm331, %v634, %v636
      %v638 = vrot.slane %v563, 1
      %v639 = vsel %vm331, %v636, %v638
      %v640 = vrot.slane %v576, 1
      %v641 = vsel %vm331, %v638, %v640
      %642 = vrot.lane.b32.xlu0 %v633, 96
      %v643 = vpop.permute.xlu0 %642
      %644 = vrot.lane.b32.xlu0 %v635, 96
      %v645 = vpop.permute.xlu0 %644
      %646 = vrot.lane.b32.xlu0 %v637, 96
      %v647 = vpop.permute.xlu0 %646
      %648 = vrot.lane.b32.xlu0 %v639, 96
      %v649 = vpop.permute.xlu0 %648
      %650 = vrot.lane.b32.xlu0 %v641, 96
      %v651 = vpop.permute.xlu0 %650
      %v653 = vunpack.c.l.b16 %v246
      %v654 = vpack.c.b16 %v551, %v550
      %v655 = vpack.c.b16 %v553, %v552
      %v656 = vpack.c.b16 %v555, %v554
      %v657 = vpack.c.b16 %v557, %v556
      %v658 = vpack.c.b16 %v575, %v558
      %v659 = vpack.c.b16 %v653, %v653
      %v660 = vrot.slane %v654, 1
      %v661 = vrot.slane %v655, 1
      %v662 = vsel %vm331, %v660, %v661
      %v663 = vrot.slane %v656, 1
      %v664 = vsel %vm331, %v661, %v663
      %v665 = vrot.slane %v657, 1
      %v666 = vsel %vm331, %v663, %v665
      %v667 = vrot.slane %v658, 1
      %v668 = vsel %vm331, %v665, %v667
      %v669 = vrot.slane %v659, 1
      %v670 = vsel %vm331, %v667, %v669
      %v672 = vshrl.u32 %v654, 16
      %v674 = vrot.slane %v672, 1
      %v675 = vshll.u32 %v654, 16
      %v677 = vrot.slane %v675, 2
      %v678 = vor.u32 %v674, %v677
      %v680 = vshrl.u32 %v655, 16
      %v682 = vrot.slane %v680, 1
      %v683 = vshll.u32 %v655, 16
      %v685 = vrot.slane %v683, 2
      %v686 = vor.u32 %v682, %v685
      %v687 = vsel %vm382, %v678, %v686
      %v689 = vshrl.u32 %v656, 16
      %v691 = vrot.slane %v689, 1
      %v692 = vshll.u32 %v656, 16
      %v694 = vrot.slane %v692, 2
      %v695 = vor.u32 %v691, %v694
      %v696 = vsel %vm382, %v686, %v695
      %v698 = vshrl.u32 %v657, 16
      %v700 = vrot.slane %v698, 1
      %v701 = vshll.u32 %v657, 16
      %v703 = vrot.slane %v701, 2
      %v704 = vor.u32 %v700, %v703
      %v705 = vsel %vm382, %v695, %v704
      %v707 = vshrl.u32 %v658, 16
      %v709 = vrot.slane %v707, 1
      %v710 = vshll.u32 %v658, 16
      %v712 = vrot.slane %v710, 2
      %v713 = vor.u32 %v709, %v712
      %v714 = vsel %vm382, %v704, %v713
      %v716 = vshrl.u32 %v659, 16
      %v718 = vrot.slane %v716, 1
      %v719 = vshll.u32 %v659, 16
      %v721 = vrot.slane %v719, 2
      %v722 = vor.u32 %v718, %v721
      %v723 = vsel %vm382, %v713, %v722
      %724 = vrot.lane.b32.xlu0 %v687, 32
      %v725 = vpop.permute.xlu0 %724
      %726 = vrot.lane.b32.xlu0 %v696, 32
      %v727 = vpop.permute.xlu0 %726
      %728 = vrot.lane.b32.xlu0 %v705, 32
      %v729 = vpop.permute.xlu0 %728
      %730 = vrot.lane.b32.xlu0 %v714, 32
      %v731 = vpop.permute.xlu0 %730
      %732 = vrot.lane.b32.xlu0 %v723, 32
      %v733 = vpop.permute.xlu0 %732
      %v734 = vrot.slane %v654, 2
      %v735 = vrot.slane %v655, 2
      %v736 = vsel %vm436, %v734, %v735
      %v737 = vrot.slane %v656, 2
      %v738 = vsel %vm436, %v735, %v737
      %v739 = vrot.slane %v657, 2
      %v740 = vsel %vm436, %v737, %v739
      %v741 = vrot.slane %v658, 2
      %v742 = vsel %vm436, %v739, %v741
      %v743 = vrot.slane %v659, 2
      %v744 = vsel %vm436, %v741, %v743
      %745 = vrot.lane.b32.xlu0 %v736, 64
      %v746 = vpop.permute.xlu0 %745
      %747 = vrot.lane.b32.xlu0 %v738, 64
      %v748 = vpop.permute.xlu0 %747
      %749 = vrot.lane.b32.xlu0 %v740, 64
      %v750 = vpop.permute.xlu0 %749
      %751 = vrot.lane.b32.xlu0 %v742, 64
      %v752 = vpop.permute.xlu0 %751
      %753 = vrot.lane.b32.xlu0 %v744, 64
      %v754 = vpop.permute.xlu0 %753
      %v756 = vunpack.c.l.b16 %v247
      %v757 = vpack.c.b16 %v653, %v575
      %v758 = vpack.c.b16 %v756, %v756
      %v759 = vrot.slane %v560, 2
      %v760 = vrot.slane %v561, 2
      %v761 = vsel %vm436, %v759, %v760
      %v762 = vrot.slane %v562, 2
      %v763 = vsel %vm436, %v760, %v762
      %v764 = vrot.slane %v563, 2
      %v765 = vsel %vm436, %v762, %v764
      %v766 = vrot.slane %v757, 2
      %v767 = vsel %vm436, %v764, %v766
      %v768 = vrot.slane %v758, 2
      %v769 = vsel %vm436, %v766, %v768
      %770 = vrot.lane.b32.xlu0 %v761, 96
      %v771 = vpop.permute.xlu0 %770
      %772 = vrot.lane.b32.xlu0 %v763, 96
      %v773 = vpop.permute.xlu0 %772
      %774 = vrot.lane.b32.xlu0 %v765, 96
      %v775 = vpop.permute.xlu0 %774
      %776 = vrot.lane.b32.xlu0 %v767, 96
      %v777 = vpop.permute.xlu0 %776
      %778 = vrot.lane.b32.xlu0 %v769, 96
      %v779 = vpop.permute.xlu0 %778
      %vm780 = vcmask 261120
      %v782 = vsel %vm780, %v268, %v322
      %v784 = vsel %vm780, %v269, %v324
      %v786 = vsel %vm780, %v270, %v326
      %v788 = vsel %vm780, %v271, %v328
      %v790 = vsel %vm780, %v272, %v330
      %vm791 = vcmask 523264
      %v793 = vsel %vm791, %v782, %v344
      %v795 = vsel %vm791, %v784, %v346
      %v797 = vsel %vm791, %v786, %v348
      %v799 = vsel %vm791, %v788, %v350
      %v801 = vsel %vm791, %v790, %v352
      %vm802 = vcmask 785408
      %v804 = vsel %vm802, %v793, %v373
      %v807 = vsel %vm802, %v795, %v375
      %v810 = vsel %vm802, %v797, %v377
      %v813 = vsel %vm802, %v799, %v379
      %v816 = vsel %vm802, %v801, %v381
      %v820 = vsel %vm780, %v399, %v449
      %v823 = vsel %vm780, %v408, %v451
      %v826 = vsel %vm780, %v417, %v453
      %v829 = vsel %vm780, %v426, %v455
      %v832 = vsel %vm780, %v435, %v457
      %v834 = vsel %vm791, %v820, %v474
      %v836 = vsel %vm791, %v823, %v476
      %v838 = vsel %vm791, %v826, %v478
      %v840 = vsel %vm791, %v829, %v480
      %v842 = vsel %vm791, %v832, %v482
      %v844 = vsel %vm802, %v834, %v518
      %v847 = vsel %vm802, %v836, %v520
      %v850 = vsel %vm802, %v838, %v522
      %v853 = vsel %vm802, %v840, %v524
      %v856 = vsel %vm802, %v842, %v526
      %v860 = vsel %vm780, %v530, %v565
      %v863 = vsel %vm780, %v532, %v567
      %v866 = vsel %vm780, %v534, %v569
      %v869 = vsel %vm780, %v536, %v571
      %v872 = vsel %vm780, %v538, %v573
      %v874 = vsel %vm791, %v860, %v622
      %v876 = vsel %vm791, %v863, %v624
      %v878 = vsel %vm791, %v866, %v626
      %v880 = vsel %vm791, %v869, %v628
      %v882 = vsel %vm791, %v872, %v630
      %v884 = vsel %vm802, %v874, %v643
      %v887 = vsel %vm802, %v876, %v645
      %v890 = vsel %vm802, %v878, %v647
      %v893 = vsel %vm802, %v880, %v649
      %v896 = vsel %vm802, %v882, %v651
      %v900 = vsel %vm780, %v662, %v725
      %v903 = vsel %vm780, %v664, %v727
      %v906 = vsel %vm780, %v666, %v729
      %v909 = vsel %vm780, %v668, %v731
      %v912 = vsel %vm780, %v670, %v733
      %v914 = vsel %vm791, %v900, %v746
      %v916 = vsel %vm791, %v903, %v748
      %v918 = vsel %vm791, %v906, %v750
      %v920 = vsel %vm791, %v909, %v752
      %v922 = vsel %vm791, %v912, %v754
      %v924 = vsel %vm802, %v914, %v771
      %v927 = vsel %vm802, %v916, %v773
      %v930 = vsel %vm802, %v918, %v775
      %v933 = vsel %vm802, %v920, %v777
      %v936 = vsel %vm802, %v922, %v779
      %v939 = vshll.u32 %v757, 16
      %v941 = vrot.slane %v939, 1
      %v942 = vsel %vm276, %v615, %v941
      %v943 = vshrl.u32 %v757, 16
      %v945 = vor.u32 %v943, %v941
      %v947 = vshll.u32 %v758, 16
      %v949 = vrot.slane %v947, 1
      %v950 = vsel %vm276, %v945, %v949
      %v951 = vshrl.u32 %v758, 16
      %v953 = vor.u32 %v951, %v949
      %954 = vrot.lane.b32.xlu0 %v596, 32
      %v955 = vpop.permute.xlu0 %954
      %956 = vrot.lane.b32.xlu0 %v604, 32
      %v957 = vpop.permute.xlu0 %956
      %958 = vrot.lane.b32.xlu0 %v612, 32
      %v959 = vpop.permute.xlu0 %958
      %960 = vrot.lane.b32.xlu0 %v942, 32
      %v961 = vpop.permute.xlu0 %960
      %962 = vrot.lane.b32.xlu0 %v950, 32
      %v963 = vpop.permute.xlu0 %962
      %964 = vrot.lane.b32.xlu0 %v953, 32
      %v965 = vpop.permute.xlu0 %964
      %v967 = vsel %vm780, %v560, %v955
      %v969 = vsel %vm780, %v561, %v957
      %v971 = vsel %vm780, %v562, %v959
      %v973 = vsel %vm780, %v563, %v961
      %v975 = vsel %vm780, %v757, %v963
      %v977 = vsel %vm780, %v758, %v965
      %v978 = vshrl.u32 %v967, 16
      %v980 = vrot.slane %v978, 2
      %v981 = vshll.u32 %v967, 16
      %v983 = vrot.slane %v981, 3
      %v984 = vor.u32 %v980, %v983
      %v985 = vshrl.u32 %v969, 16
      %v987 = vrot.slane %v985, 2
      %v988 = vshll.u32 %v969, 16
      %v990 = vrot.slane %v988, 3
      %v991 = vor.u32 %v987, %v990
      %v992 = vsel %vm483, %v984, %v991
      %v993 = vshrl.u32 %v971, 16
      %v995 = vrot.slane %v993, 2
      %v996 = vshll.u32 %v971, 16
      %v998 = vrot.slane %v996, 3
      %v999 = vor.u32 %v995, %v998
      %v1000 = vsel %vm483, %v991, %v999
      %v1001 = vshrl.u32 %v973, 16
      %v1003 = vrot.slane %v1001, 2
      %v1004 = vshll.u32 %v973, 16
      %v1006 = vrot.slane %v1004, 3
      %v1007 = vor.u32 %v1003, %v1006
      %v1008 = vsel %vm483, %v999, %v1007
      %v1009 = vshrl.u32 %v975, 16
      %v1011 = vrot.slane %v1009, 2
      %v1012 = vshll.u32 %v975, 16
      %v1014 = vrot.slane %v1012, 3
      %v1015 = vor.u32 %v1011, %v1014
      %v1016 = vsel %vm483, %v1007, %v1015
      %v1017 = vshrl.u32 %v977, 16
      %v1019 = vrot.slane %v1017, 2
      %v1020 = vshll.u32 %v977, 16
      %v1022 = vrot.slane %v1020, 3
      %v1023 = vor.u32 %v1019, %v1022
      %v1024 = vsel %vm483, %v1015, %v1023
      %v1025 = vld [vmem:[%s2] sm:$0xf]
      %v1026 = vld [vmem:[%s2 + $0x4] sm:$0xf]
      %v1027 = vld [vmem:[%s2 + $0x8] sm:$0xf]
      %v1028 = vld [vmem:[%s2 + $0xc] sm:$0xf]
      %v1029 = vld [vmem:[%s2 + $0x10] sm:$0xf]
      %v1030 = vld [vmem:[%s2 + $0x14] sm:$0xf]
      %v1031 = vld [vmem:[%s2 + $0x18] sm:$0xf]
      %v1032 = vld [vmem:[%s2 + $0x1c] sm:$0xf]
      %v1033 = vld [vmem:[%s2 + $0x20] sm:$0xf]
      %v1034 = vld [vmem:[%s2 + $0x24] sm:$0xf]
      %v1035 = vld [vmem:[%s2 + $0x28] sm:$0xf]
      %v1036 = vld [vmem:[%s2 + $0x2c] sm:$0xf]
      %v1037 = vld [vmem:[%s2 + $0x30] sm:$0xf]
      %v1038 = vld [vmem:[%s2 + $0x34] sm:$0xf]
      %v1039 = vld [vmem:[%s2 + $0x38] sm:$0xf]
      %v1040 = vld [vmem:[%s2 + $0x3c] sm:$0xf]
      %v1041 = vld [vmem:[%s2 + $0x40] sm:$0xf]
      %v1042 = vld [vmem:[%s2 + $0x44] sm:$0xf]
      %v1043 = vld [vmem:[%s2 + $0x48] sm:$0xf]
      %v1044 = vld [vmem:[%s2 + $0x4c] sm:$0xf]
      %v1045 = vld [vmem:[%s2 + $0x50] sm:$0xf]
      %v1046 = vld [vmem:[%s2 + $0x54] sm:$0xf]
      %v1047 = vld [vmem:[%s2 + $0x58] sm:$0xf]
      %v1048 = vld [vmem:[%s2 + $0x5c] sm:$0xf]
      %v1049 = vld [vmem:[%s2 + $0x60] sm:$0xf]
      %v1050 = vld [vmem:[%s2 + $0x64] sm:$0xf]
      %v1051 = vld [vmem:[%s2 + $0x68] sm:$0xf]
      %v1052 = vld [vmem:[%s2 + $0x6c] sm:$0xf]
      %v1053 = vld [vmem:[%s2 + $0x70] sm:$0xf]
      %v1054 = vld [vmem:[%s2 + $0x74] sm:$0xf]
      %v1055 = vld [vmem:[%s2 + $0x78] sm:$0xf]
      %v1056 = vld [vmem:[%s2 + $0x7c] sm:$0xf]
      %v1057 = vld [vmem:[%s2 + $0x80] sm:$0xf]
      %v1058 = vld [vmem:[%s2 + $0x84] sm:$0xf]
      %v1059 = vld [vmem:[%s2 + $0x88] sm:$0xf]
      %v1060 = vld [vmem:[%s2 + $0x8c] sm:$0xf]
      %v1061 = vld [vmem:[%s2 + $0x90] sm:$0xf]
      %v1062 = vld [vmem:[%s2 + $0x94] sm:$0xf]
      %v1063 = vld [vmem:[%s2 + $0x98] sm:$0xf]
      %v1064 = vld [vmem:[%s2 + $0x9c] sm:$0xf]
      %v1065 = vld [vmem:[%s2 + $0xa0] sm:$0xf]
      %v1066 = vld [vmem:[%s2 + $0xa4] sm:$0xf]
      %v1067 = vld [vmem:[%s2 + $0xa8] sm:$0xf]
      %v1068 = vld [vmem:[%s2 + $0xac] sm:$0xf]
      %v1069 = vld [vmem:[%s2 + $0xb0] sm:$0xf]
      %v1070 = vld [vmem:[%s2 + $0xb4] sm:$0xf]
      %v1071 = vld [vmem:[%s2 + $0xb8] sm:$0xf]
      %v1072 = vld [vmem:[%s2 + $0xbc] sm:$0xf]
      %v1073 = vld [vmem:[%s2 + $0xc0] sm:$0xf]
      %v1074 = vld [vmem:[%s2 + $0xc4] sm:$0xf]
      %v1075 = vld [vmem:[%s2 + $0xc8] sm:$0xf]
      %v1076 = vld [vmem:[%s2 + $0xcc] sm:$0xf]
      %v1077 = vld [vmem:[%s2 + $0xd0] sm:$0xf]
      %v1078 = vld [vmem:[%s2 + $0xd4] sm:$0xf]
      %v1079 = vld [vmem:[%s2 + $0xd8] sm:$0xf]
      %v1080 = vld [vmem:[%s2 + $0xdc] sm:$0xf]
      %v1081 = vld [vmem:[%s2 + $0xe0] sm:$0xf]
      %v1082 = vld [vmem:[%s2 + $0xe4] sm:$0xf]
      %v1083 = vld [vmem:[%s2 + $0xe8] sm:$0xf]
      %v1084 = vld [vmem:[%s2 + $0xec] sm:$0xf]
      %v1085 = vld [vmem:[%s2 + $0xf0] sm:$0xf]
      %v1086 = vld [vmem:[%s2 + $0xf4] sm:$0xf]
      %v1087 = vld [vmem:[%s2 + $0xf8] sm:$0xf]
      %v1088 = vld [vmem:[%s2 + $0xfc] sm:$0xf]
      %v1089 = vld [vmem:[%s2 + $0x100] sm:$0xf]
      %v1090 = vld [vmem:[%s2 + $0x104] sm:$0xf]
      %v1091 = vld [vmem:[%s2 + $0x108] sm:$0xf]
      %v1092 = vld [vmem:[%s2 + $0x10c] sm:$0xf]
      %v1093 = vld [vmem:[%s2 + $0x110] sm:$0xf]
      %v1094 = vld [vmem:[%s2 + $0x114] sm:$0xf]
      %v1095 = vld [vmem:[%s2 + $0x118] sm:$0xf]
      %v1096 = vld [vmem:[%s2 + $0x11c] sm:$0xf]
      %v1169 = vunpack.c.l.b16 %v1025
      %v1170 = vunpack.c.l.b16 %v1026
      %v1171 = vunpack.c.l.b16 %v1027
      %v1172 = vunpack.c.l.b16 %v1028
      %v1173 = vunpack.c.l.b16 %v1029
      %v1174 = vunpack.c.l.b16 %v1030
      %v1175 = vunpack.c.l.b16 %v1031
      %v1176 = vunpack.c.l.b16 %v1032
      %v1177 = vunpack.c.l.b16 %v1033
      %v1178 = vunpack.c.l.b16 %v1034
      %v1179 = vunpack.c.l.b16 %v1035
      %v1180 = vunpack.c.l.b16 %v1036
      %v1181 = vunpack.c.l.b16 %v1037
      %v1182 = vunpack.c.l.b16 %v1038
      %v1183 = vunpack.c.l.b16 %v1039
      %v1184 = vunpack.c.l.b16 %v1040
      %v1185 = vunpack.c.l.b16 %v1041
      %v1186 = vunpack.c.l.b16 %v1042
      %v1187 = vunpack.c.l.b16 %v1043
      %v1188 = vunpack.c.l.b16 %v1044
      %v1189 = vunpack.c.l.b16 %v1045
      %v1190 = vunpack.c.l.b16 %v1046
      %v1191 = vunpack.c.l.b16 %v1047
      %v1192 = vunpack.c.l.b16 %v1048
      %v1193 = vunpack.c.l.b16 %v1049
      %v1194 = vunpack.c.l.b16 %v1050
      %v1195 = vunpack.c.l.b16 %v1051
      %v1196 = vunpack.c.l.b16 %v1052
      %v1197 = vunpack.c.l.b16 %v1053
      %v1198 = vunpack.c.l.b16 %v1054
      %v1199 = vunpack.c.l.b16 %v1055
      %v1200 = vunpack.c.l.b16 %v1056
      %v1201 = vunpack.c.l.b16 %v1057
      %v1202 = vunpack.c.l.b16 %v1058
      %v1203 = vunpack.c.l.b16 %v1059
      %v1204 = vunpack.c.l.b16 %v1060
      %v1205 = vunpack.c.l.b16 %v1061
      %v1206 = vunpack.c.l.b16 %v1062
      %v1207 = vunpack.c.l.b16 %v1063
      %v1208 = vunpack.c.l.b16 %v1064
      %v1209 = vunpack.c.l.b16 %v1065
      %v1210 = vunpack.c.l.b16 %v1066
      %v1211 = vunpack.c.l.b16 %v1067
      %v1212 = vunpack.c.l.b16 %v1068
      %v1213 = vunpack.c.l.b16 %v1069
      %v1214 = vunpack.c.l.b16 %v1070
      %v1215 = vunpack.c.l.b16 %v1071
      %v1216 = vunpack.c.l.b16 %v1072
      %v1217 = vunpack.c.l.b16 %v1073
      %v1218 = vunpack.c.l.b16 %v1074
      %v1219 = vunpack.c.l.b16 %v1075
      %v1220 = vunpack.c.l.b16 %v1076
      %v1221 = vunpack.c.l.b16 %v1077
      %v1222 = vunpack.c.l.b16 %v1078
      %v1223 = vunpack.c.l.b16 %v1079
      %v1224 = vunpack.c.l.b16 %v1080
      %v1225 = vunpack.c.l.b16 %v1081
      %v1226 = vunpack.c.l.b16 %v1082
      %v1227 = vunpack.c.l.b16 %v1083
      %v1228 = vunpack.c.l.b16 %v1084
      %v1229 = vunpack.c.l.b16 %v1085
      %v1230 = vunpack.c.l.b16 %v1086
      %v1231 = vunpack.c.l.b16 %v1087
      %v1232 = vunpack.c.l.b16 %v1088
      %v1233 = vunpack.c.l.b16 %v1089
      %v1234 = vunpack.c.l.b16 %v1090
      %v1235 = vunpack.c.l.b16 %v1091
      %v1236 = vunpack.c.l.b16 %v1092
      %v1237 = vunpack.c.l.b16 %v1093
      %v1238 = vunpack.c.l.b16 %v1094
      %v1239 = vunpack.c.l.b16 %v1095
      %v1240 = vunpack.c.l.b16 %v1096
      %v1241 = vpack.c.b16 %v1170, %v1169
      %v1242 = vpack.c.b16 %v1172, %v1171
      %v1243 = vpack.c.b16 %v1174, %v1173
      %v1244 = vpack.c.b16 %v1176, %v1175
      %v1245 = vpack.c.b16 %v1178, %v1177
      %v1246 = vpack.c.b16 %v1180, %v1179
      %v1247 = vpack.c.b16 %v1182, %v1181
      %v1248 = vpack.c.b16 %v1184, %v1183
      %v1249 = vpack.c.b16 %v1186, %v1185
      %v1250 = vpack.c.b16 %v1188, %v1187
      %v1251 = vpack.c.b16 %v1190, %v1189
      %v1252 = vpack.c.b16 %v1192, %v1191
      %v1253 = vpack.c.b16 %v1194, %v1193
      %v1254 = vpack.c.b16 %v1196, %v1195
      %v1255 = vpack.c.b16 %v1198, %v1197
      %v1256 = vpack.c.b16 %v1200, %v1199
      %v1257 = vpack.c.b16 %v1202, %v1201
      %v1258 = vpack.c.b16 %v1204, %v1203
      %v1259 = vpack.c.b16 %v1206, %v1205
      %v1260 = vpack.c.b16 %v1208, %v1207
      %v1261 = vpack.c.b16 %v1210, %v1209
      %v1262 = vpack.c.b16 %v1212, %v1211
      %v1263 = vpack.c.b16 %v1214, %v1213
      %v1264 = vpack.c.b16 %v1216, %v1215
      %v1265 = vpack.c.b16 %v1218, %v1217
      %v1266 = vpack.c.b16 %v1220, %v1219
      %v1267 = vpack.c.b16 %v1222, %v1221
      %v1268 = vpack.c.b16 %v1224, %v1223
      %v1269 = vpack.c.b16 %v1226, %v1225
      %v1270 = vpack.c.b16 %v1228, %v1227
      %v1271 = vpack.c.b16 %v1230, %v1229
      %v1272 = vpack.c.b16 %v1232, %v1231
      %v1273 = vpack.c.b16 %v1234, %v1233
      %v1274 = vpack.c.b16 %v1236, %v1235
      %v1275 = vpack.c.b16 %v1238, %v1237
      %v1276 = vpack.c.b16 %v1240, %v1239
      %v1314 = vsel %vm791, %v992, 0
      %v1317 = vsel %vm791, %v1000, 0
      %v1320 = vsel %vm791, %v1008, 0
      %v1323 = vsel %vm791, %v1016, 0
      %v1326 = vsel %vm791, %v1024, 0
      %1328 = vmatprep.subr.bf16.mxu0 0
      %1329 = vmatpush1.bf16.msra.mxu0 %v1241
      %1330 = vmatprep.subr.bf16.mxu0 0
      %1331 = vmatpush1.bf16.msra.mxu0 %v1242
      %1332 = vmatprep.subr.bf16.mxu0 0
      %1333 = vmatpush1.bf16.msra.mxu0 %v1243
      %1334 = vmatprep.subr.bf16.mxu0 0
      %1335 = vmatpush1.bf16.msra.mxu0 %v1244
      %1336 = vmatprep.subr.bf16.mxu0 0
      %1337 = vmatpush1.bf16.msra.mxu0 %v1245
      %1338 = vmatprep.subr.bf16.mxu0 0
      %1339 = vmatpush1.bf16.msra.mxu0 %v1246
      %1340 = vmatprep.subr.bf16.mxu0 0
      %1341 = vmatpush1.bf16.msra.mxu0 %v1247
      %1342 = vmatprep.subr.bf16.mxu0 0
      %1343 = vmatpush1.bf16.msra.mxu0 %v1248
      %1344 = vmatprep.subr.bf16.mxu0 0
      %1345 = vmatpush1.bf16.msra.mxu0 %v1249
      %1346 = vmatprep.subr.bf16.mxu0 0
      %1347 = vmatpush1.bf16.msra.mxu0 %v1250
      %1348 = vmatprep.subr.bf16.mxu0 0
      %1349 = vmatpush1.bf16.msra.mxu0 %v1251
      %1350 = vmatprep.subr.bf16.mxu0 0
      %1351 = vmatpush1.bf16.msra.mxu0 %v1252
      %1352 = vmatprep.subr.bf16.mxu0 0
      %1353 = vmatpush1.bf16.msra.mxu0 %v1253
      %1354 = vmatprep.subr.bf16.mxu0 0
      %1355 = vmatpush1.bf16.msra.mxu0 %v1254
      %1356 = vmatprep.subr.bf16.mxu0 0
      %1357 = vmatpush1.bf16.msra.mxu0 %v1255
      %1358 = vmatprep.subr.bf16.mxu0 0
      %1359 = vmatpush1.bf16.msra.mxu0 %v1256
      %1360 = vmatprep.mubr.bf16.mxu0 %v844
      %1361 = vmatmul.mubr.bf16.gmra.mrb[0].mxu0 %v804
      %v1362 = vpop.f32.mrb[0].mxu0
      %v1363 = vadd.f32 0.0, %v1362
      %v1364 = vpop.f32.mrb[0].mxu0
      %v1365 = vpop.f32.mrb[0].mxu0
      %v1366 = vadd.f32 0.0, %v1365
      %v1367 = vpop.f32.mrb[0].mxu0
      %1368 = vmatprep.mubr.bf16.mxu0 %v847
      %1369 = vmatmul.mubr.bf16.gmra.mrb[0].mxu0 %v807
      %v1370 = vpop.f32.mrb[0].mxu0
      %v1371 = vadd.f32 0.0, %v1370
      %v1372 = vpop.f32.mrb[0].mxu0
      %v1373 = vpop.f32.mrb[0].mxu0
      %v1374 = vadd.f32 0.0, %v1373
      %v1375 = vpop.f32.mrb[0].mxu0
      %1376 = vmatprep.mubr.bf16.mxu0 %v850
      %1377 = vmatmul.mubr.bf16.gmra.mrb[0].mxu0 %v810
      %v1378 = vpop.f32.mrb[0].mxu0
      %v1379 = vadd.f32 0.0, %v1378
      %v1380 = vpop.f32.mrb[0].mxu0
      %v1381 = vpop.f32.mrb[0].mxu0
      %v1382 = vadd.f32 0.0, %v1381
      %v1383 = vpop.f32.mrb[0].mxu0
      %1384 = vmatprep.mubr.bf16.mxu0 %v853
      %1385 = vmatmul.mubr.bf16.gmra.mrb[0].mxu0 %v813
      %v1386 = vpop.f32.mrb[0].mxu0
      %v1387 = vadd.f32 0.0, %v1386
      %v1388 = vpop.f32.mrb[0].mxu0
      %v1389 = vpop.f32.mrb[0].mxu0
      %v1390 = vadd.f32 0.0, %v1389
      %v1391 = vpop.f32.mrb[0].mxu0
      %1392 = vmatprep.mubr.bf16.mxu0 %v856
      %1393 = vmatmul.mubr.bf16.gmra.mrb[0].mxu0 %v816
      %v1394 = vpop.f32.mrb[0].mxu0
      %v1395 = vadd.f32 0.0, %v1394
      %v1396 = vpop.f32.mrb[0].mxu0
      %v1397 = vpop.f32.mrb[0].mxu0
      %v1398 = vadd.f32 0.0, %v1397
      %v1399 = vpop.f32.mrb[0].mxu0
      %1400 = vdwg.mxu0
      %1401 = vmatprep.subr.bf16.mxu0 0
      %1402 = vmatpush1.bf16.msra.mxu0 %v1257
      %1403 = vmatprep.subr.bf16.mxu0 0
      %1404 = vmatpush1.bf16.msra.mxu0 %v1258
      %1405 = vmatprep.subr.bf16.mxu0 0
      %1406 = vmatpush1.bf16.msra.mxu0 %v1259
      %1407 = vmatprep.subr.bf16.mxu0 0
      %1408 = vmatpush1.bf16.msra.mxu0 %v1260
      %1409 = vmatprep.subr.bf16.mxu0 0
      %1410 = vmatpush1.bf16.msra.mxu0 %v1261
      %1411 = vmatprep.subr.bf16.mxu0 0
      %1412 = vmatpush1.bf16.msra.mxu0 %v1262
      %1413 = vmatprep.subr.bf16.mxu0 0
      %1414 = vmatpush1.bf16.msra.mxu0 %v1263
      %1415 = vmatprep.subr.bf16.mxu0 0
      %1416 = vmatpush1.bf16.msra.mxu0 %v1264
      %1417 = vmatprep.subr.bf16.mxu0 0
      %1418 = vmatpush1.bf16.msra.mxu0 %v1265
      %1419 = vmatprep.subr.bf16.mxu0 0
      %1420 = vmatpush1.bf16.msra.mxu0 %v1266
      %1421 = vmatprep.subr.bf16.mxu0 0
      %1422 = vmatpush1.bf16.msra.mxu0 %v1267
      %1423 = vmatprep.subr.bf16.mxu0 0
      %1424 = vmatpush1.bf16.msra.mxu0 %v1268
      %1425 = vmatprep.subr.bf16.mxu0 0
      %1426 = vmatpush1.bf16.msra.mxu0 %v1269
      %1427 = vmatprep.subr.bf16.mxu0 0
      %1428 = vmatpush1.bf16.msra.mxu0 %v1270
      %1429 = vmatprep.subr.bf16.mxu0 0
      %1430 = vmatpush1.bf16.msra.mxu0 %v1271
      %1431 = vmatprep.subr.bf16.mxu0 0
      %1432 = vmatpush1.bf16.msra.mxu0 %v1272
      %1433 = vmatprep.mubr.bf16.mxu0 %v924
      %1434 = vmatmul.mubr.bf16.gmra.mrb[0].mxu0 %v884
      %v1435 = vpop.f32.mrb[0].mxu0
      %v1436 = vadd.f32 %v1363, %v1435
      %v1437 = vpop.f32.mrb[0].mxu0
      %v1438 = vpop.f32.mrb[0].mxu0
      %v1439 = vadd.f32 %v1366, %v1438
      %v1440 = vpop.f32.mrb[0].mxu0
      %1441 = vmatprep.mubr.bf16.mxu0 %v927
      %1442 = vmatmul.mubr.bf16.gmra.mrb[0].mxu0 %v887
      %v1443 = vpop.f32.mrb[0].mxu0
      %v1444 = vadd.f32 %v1371, %v1443
      %v1445 = vpop.f32.mrb[0].mxu0
      %v1446 = vpop.f32.mrb[0].mxu0
      %v1447 = vadd.f32 %v1374, %v1446
      %v1448 = vpop.f32.mrb[0].mxu0
      %1449 = vmatprep.mubr.bf16.mxu0 %v930
      %1450 = vmatmul.mubr.bf16.gmra.mrb[0].mxu0 %v890
      %v1451 = vpop.f32.mrb[0].mxu0
      %v1452 = vadd.f32 %v1379, %v1451
      %v1453 = vpop.f32.mrb[0].mxu0
      %v1454 = vpop.f32.mrb[0].mxu0
      %v1455 = vadd.f32 %v1382, %v1454
      %v1456 = vpop.f32.mrb[0].mxu0
      %1457 = vmatprep.mubr.bf16.mxu0 %v933
      %1458 = vmatmul.mubr.bf16.gmra.mrb[0].mxu0 %v893
      %v1459 = vpop.f32.mrb[0].mxu0
      %v1460 = vadd.f32 %v1387, %v1459
      %v1461 = vpop.f32.mrb[0].mxu0
      %v1462 = vpop.f32.mrb[0].mxu0
      %v1463 = vadd.f32 %v1390, %v1462
      %v1464 = vpop.f32.mrb[0].mxu0
      %1465 = vmatprep.mubr.bf16.mxu0 %v936
      %1466 = vmatmul.mubr.bf16.gmra.mrb[0].mxu0 %v896
      %v1467 = vpop.f32.mrb[0].mxu0
      %v1468 = vadd.f32 %v1395, %v1467
      %v1469 = vpop.f32.mrb[0].mxu0
      %v1470 = vpop.f32.mrb[0].mxu0
      %v1471 = vadd.f32 %v1398, %v1470
      %v1472 = vpop.f32.mrb[0].mxu0
      %1473 = vdwg.mxu0
      %1474 = vmatprep.subr.bf16.mxu0 0
      %1475 = vmatpush1.bf16.msra.mxu0 %v1273
      %1476 = vmatprep.subr.bf16.mxu0 0
      %1477 = vmatpush1.bf16.msra.mxu0 %v1274
      %1478 = vmatprep.subr.bf16.mxu0 0
      %1479 = vmatpush1.bf16.msra.mxu0 %v1275
      %1480 = vmatprep.subr.bf16.mxu0 0
      %1481 = vmatpush1.bf16.msra.mxu0 %v1276
      %1482 = vmatprep.subr.bf16.mxu0 0
      %1483 = vmatpush1.bf16.msra.mxu0 0
      %1484 = vmatprep.subr.bf16.mxu0 0
      %1485 = vmatpush1.bf16.msra.mxu0 0
      %1486 = vmatprep.subr.bf16.mxu0 0
      %1487 = vmatpush1.bf16.msra.mxu0 0
      %1488 = vmatprep.subr.bf16.mxu0 0
      %1489 = vmatpush1.bf16.msra.mxu0 0
      %1490 = vmatprep.subr.bf16.mxu0 0
      %1491 = vmatpush1.bf16.msra.mxu0 0
      %1492 = vmatprep.subr.bf16.mxu0 0
      %1493 = vmatpush1.bf16.msra.mxu0 0
      %1494 = vmatprep.subr.bf16.mxu0 0
      %1495 = vmatpush1.bf16.msra.mxu0 0
      %1496 = vmatprep.subr.bf16.mxu0 0
      %1497 = vmatpush1.bf16.msra.mxu0 0
      %1498 = vmatprep.subr.bf16.mxu0 0
      %1499 = vmatpush1.bf16.msra.mxu0 0
      %1500 = vmatprep.subr.bf16.mxu0 0
      %1501 = vmatpush1.bf16.msra.mxu0 0
      %1502 = vmatprep.subr.bf16.mxu0 0
      %1503 = vmatpush1.bf16.msra.mxu0 0
      %1504 = vmatprep.subr.bf16.mxu0 0
      %1505 = vmatpush1.bf16.msra.mxu0 0
      %1506 = vmatprep.mubr.bf16.mxu0 0
      %1507 = vmatmul.mubr.bf16.gmra.mrb[0].mxu0 %v1314
      %v1508 = vpop.f32.mrb[0].mxu0
      %v1509 = vadd.f32 %v1436, %v1508
      %v1510 = vpop.f32.mrb[0].mxu0
      %v1511 = vpop.f32.mrb[0].mxu0
      %v1512 = vadd.f32 %v1439, %v1511
      %v1513 = vpop.f32.mrb[0].mxu0
      %1514 = vmatprep.mubr.bf16.mxu0 0
      %1515 = vmatmul.mubr.bf16.gmra.mrb[0].mxu0 %v1317
      %v1516 = vpop.f32.mrb[0].mxu0
      %v1517 = vadd.f32 %v1444, %v1516
      %v1518 = vpop.f32.mrb[0].mxu0
      %v1519 = vpop.f32.mrb[0].mxu0
      %v1520 = vadd.f32 %v1447, %v1519
      %v1521 = vpop.f32.mrb[0].mxu0
      %1522 = vmatprep.mubr.bf16.mxu0 0
      %1523 = vmatmul.mubr.bf16.gmra.mrb[0].mxu0 %v1320
      %v1524 = vpop.f32.mrb[0].mxu0
      %v1525 = vadd.f32 %v1452, %v1524
      %v1526 = vpop.f32.mrb[0].mxu0
      %v1527 = vpop.f32.mrb[0].mxu0
      %v1528 = vadd.f32 %v1455, %v1527
      %v1529 = vpop.f32.mrb[0].mxu0
      %1530 = vmatprep.mubr.bf16.mxu0 0
      %1531 = vmatmul.mubr.bf16.gmra.mrb[0].mxu0 %v1323
      %v1532 = vpop.f32.mrb[0].mxu0
      %v1533 = vadd.f32 %v1460, %v1532
      %v1534 = vpop.f32.mrb[0].mxu0
      %v1535 = vpop.f32.mrb[0].mxu0
      %v1536 = vadd.f32 %v1463, %v1535
      %v1537 = vpop.f32.mrb[0].mxu0
      %1538 = vmatprep.mubr.bf16.mxu0 0
      %1539 = vmatmul.mubr.bf16.gmra.mrb[0].mxu0 %v1326
      %v1540 = vpop.f32.mrb[0].mxu0
      %v1541 = vadd.f32 %v1468, %v1540
      %v1542 = vpop.f32.mrb[0].mxu0
      %v1543 = vpop.f32.mrb[0].mxu0
      %v1544 = vadd.f32 %v1471, %v1543
      %v1545 = vpop.f32.mrb[0].mxu0
      %1546 = vdwg.mxu0
      %1547 = vst.msk [vmem:[%s212] sm:$0xff] %vm780, %v1509
      %1548 = vst.msk [vmem:[%s212 + $0x8] sm:$0xff] %vm780, %v1512
      %1549 = vst.msk [vmem:[%s212 + $0x10] sm:$0xff] %vm780, %v1517
      %1550 = vst.msk [vmem:[%s212 + $0x18] sm:$0xff] %vm780, %v1520
      %1551 = vst.msk [vmem:[%s212 + $0x20] sm:$0xff] %vm780, %v1525
      %1552 = vst.msk [vmem:[%s212 + $0x28] sm:$0xff] %vm780, %v1528
      %1553 = vst.msk [vmem:[%s212 + $0x30] sm:$0xff] %vm780, %v1533
      %1554 = vst.msk [vmem:[%s212 + $0x38] sm:$0xff] %vm780, %v1536
      %1555 = vst.msk [vmem:[%s212 + $0x40] sm:$0xff] %vm780, %v1541
      %1556 = vst.msk [vmem:[%s212 + $0x48] sm:$0xff] %vm780, %v1544
      %s1557 = smul.u32 10, %s19
      %p1558 = scmp.lt.s32.totalorder %s18, 1
      %s1559 = scalar_select %p1558, %s18, 1
      %p1560 = scmp.lt.s32.totalorder %s1557, 9
      %s1561 = scalar_select %p1560, %s1557, 9
      %s1562 = smul.addr %s1559, 10
      %s1563 = sadd.s32 %s1561, %s1562
      %s1564 = smul.addr %s1563, 8
      %s1565 = scalar_lea.vmem %s3, %s1564
      // Predicated region
      $region33: #{conv2x_forward.6} parent=31 // pred_check
        %p1566 = pneg %p119
      $region34: #{conv2x_forward.6} parent=31 // pred_check_branch
        %1568 = sbr.rel (%p1566) target = $region36
      $region35: #{conv2x_forward.6} parent=31 // pred_region
        %s1569 = smul.u32 10, %s19
      $region36: #{conv2x_forward.6} parent=31 // pred_fallthru
        _
    $region32: #{conv2x_forward.6} parent=5 // pred_fallthru
      _
    %p1570 = scmp.le.s32.totalorder 2, %s9
    // Predicated region
    $region37: #{conv2x_forward.6} parent=5 // pred_check
      %p1571 = pneg %p1570
    $region38: #{conv2x_forward.6} parent=5 // pred_check_branch
      %1573 = sbr.rel (%p1571) target = $region40
    $region39: #{conv2x_forward.6} parent=5 // pred_region
      %s1574 = ssub.s32 %s9, 2
      // Predicated region
      $region41: #{conv2x_forward.6} parent=39 // pred_check
        %p1575 = pneg %p125
      $region42: #{conv2x_forward.6} parent=39 // pred_check_branch
        %1577 = sbr.rel (%p1575) target = $region44
      $region43: #{conv2x_forward.6} parent=39 // pred_region
        %s1578 = smul.u32 10, %s21
        %p1579 = scmp.lt.s32.totalorder %s20, 1
        %s1580 = scalar_select %p1579, %s20, 1
        %p1581 = scmp.lt.s32.totalorder %s1578, 9
        %s1582 = scalar_select %p1581, %s1578, 9
        %s1583 = smul.addr %s1580, 10
        %s1584 = sadd.s32 %s1582, %s1583
        %s1585 = smul.addr %s1584, 8
        %s1586 = scalar_lea.vmem %s3, %s1585
      $region44: #{conv2x_forward.6} parent=39 // pred_fallthru
        _
    $region40: #{conv2x_forward.6} parent=5 // pred_fallthru
      _
  $region6: #{conv2x_forward.6} parent=0 // loop_footer
    %s13 = sadd.s32 1, %s9
  $region7: #{conv2x_forward.6} parent=0 // loop_footer_branch
    %8 = sbr.rel target = $region3
  $region8: #{conv2x_forward.6} parent=0 // loop_exit
    _

</llo_original>
